<compile_context>
chip_gen: v5e
topology: v5e:2x2
jax: 0.10.0
libtpu: 0.0.40
codegen_flags: <defaults>
</compile_context>

<pallas_src>
import functools

import jax
import jax.numpy as jnp
from jax.experimental import pallas as pl
from jax.experimental.pallas import tpu as pltpu


# ----------------------------------------------------------------------------
# Fused ResBlock kernel (one grid step = `bs` batch samples).
# ----------------------------------------------------------------------------
def _resblock_kernel(*refs, wo, npix, eps, slope, has_proj, bs, base):
    if has_proj:
        (p1_ref, xs_ref, w1_ref, w2_ref, ws_ref, aff_ref, proj_ref,
         out_ref, hpad_ref) = refs
    else:
        (p1_ref, xs_ref, w1_ref, w2_ref, aff_ref, proj_ref,
         out_ref, hpad_ref) = refs
        ws_ref = None

    proj = proj_ref[...]                       # (C, C) group-averaging matrix
    pad_p, c = hpad_ref.shape

    # Re-zero only the constant zero borders of the conv2 scratch each grid
    # step (safe under megacore grid splitting); the interior rows
    # [base, base + npix) are fully overwritten for every sample below.
    hpad_ref[0:base, :] = jnp.zeros((base, c), jnp.float32)
    hpad_ref[base + npix:pad_p, :] = jnp.zeros((pad_p - base - npix, c),
                                               jnp.float32)

    def group_norm_biased(z, b, gamma, beta):
        # GroupNorm(z + b): the per-channel conv bias `b` is folded into the
        # single-pass statistics and into the affine shift, so the epilogue is
        # a single FMA per element and no (P, C) bias add is materialized.
        s1 = jnp.sum(z, axis=0, keepdims=True)                     # (1, C)
        s2 = jnp.sum(z * z, axis=0, keepdims=True)                 # (1, C)
        s1b = s1 + npix * b
        s2b = s2 + 2.0 * b * s1 + npix * b * b
        mean = jnp.dot(s1b, proj, preferred_element_type=jnp.float32)
        ex2 = jnp.dot(s2b, proj, preferred_element_type=jnp.float32)
        inv = jax.lax.rsqrt(ex2 - mean * mean + eps)
        scale = gamma * inv
        shift = beta + (b - mean) * scale
        return z * scale + shift

    def lrelu(v):
        return jnp.where(v >= 0, v, slope * v)

    # Column wrap-around masks for the in-kernel 3x3 conv (shared by samples).
    ow = jax.lax.broadcasted_iota(jnp.int32, (npix, 1), 0) % wo
    mask_l = ow >= 1            # source column ow-1 is valid
    mask_r = ow <= wo - 2       # source column ow+1 is valid

    for s in range(bs):
        # ---- conv1 (im2col matmul, bf16 x bf16 -> f32) + GN1 + leaky_relu --
        z1 = jnp.dot(p1_ref[s], w1_ref[...],
                     preferred_element_type=jnp.float32)
        h1 = lrelu(group_norm_biased(z1, aff_ref[0:1, :], aff_ref[1:2, :],
                                     aff_ref[2:3, :]))

        # ---- conv2 (3x3, stride 1): 9 shifted matmuls over padded scratch --
        # h1 (flattened spatial) sits at sublane-aligned row offset `base`;
        # tap (di, dj) is the static slice starting at base+(di-1)*wo+(dj-1).
        # Row out-of-range reads land in the zero border; column wrap-around
        # is removed with the two (P, 1) masks above.
        hpad_ref[base:base + npix, :] = h1

        acc2 = None
        for di in range(3):
            for dj in range(3):
                start = base + (di - 1) * wo + (dj - 1)
                tap = hpad_ref[start:start + npix, :]          # (P, C) f32
                if dj == 0:
                    tap = jnp.where(mask_l, tap, 0.0)
                elif dj == 2:
                    tap = jnp.where(mask_r, tap, 0.0)
                contrib = jnp.dot(tap.astype(jnp.bfloat16),
                                  w2_ref[di * 3 + dj],
                                  preferred_element_type=jnp.float32)
                acc2 = contrib if acc2 is None else acc2 + contrib

        y2 = group_norm_biased(acc2, aff_ref[3:4, :], aff_ref[4:5, :],
                               aff_ref[5:6, :])

        # ---- shortcut -------------------------------------------------------
        if has_proj:
            zs = jnp.dot(xs_ref[s], ws_ref[...],
                         preferred_element_type=jnp.float32)
            sc = group_norm_biased(zs, aff_ref[6:7, :], aff_ref[7:8, :],
                                   aff_ref[8:9, :])
        else:
            sc = xs_ref[s]                                  # identity, exact f32

        out_ref[s] = lrelu(y2 + sc).astype(out_ref.dtype)


# ----------------------------------------------------------------------------
# Glue: im2col patch extraction for conv1 (plain JAX, bf16 downstream).
# ----------------------------------------------------------------------------
def extract_patches(x_nhwc, k, stride, pad):
    n, h, w, _ = x_nhwc.shape
    xp = jnp.pad(x_nhwc, ((0, 0), (pad, pad), (pad, pad), (0, 0)))
    ho = (h + 2 * pad - k) // stride + 1
    wo = (w + 2 * pad - k) // stride + 1
    pieces = [xp[:, i:i + stride * ho:stride, j:j + stride * wo:stride, :]
              for i in range(k) for j in range(k)]
    return jnp.concatenate(pieces, axis=-1), ho, wo


# ----------------------------------------------------------------------------
# ResBlock forward (NCHW in / NCHW out, like PyTorch).
# ----------------------------------------------------------------------------
def res_block_forward(x_nchw, params, stride, *, groups=8, eps=1e-5, slope=0.2):
    n, cin, h, w = x_nchw.shape
    cout = params["w1"].shape[0]
    assert cout % groups == 0, "GroupNorm requires out_channels % groups == 0"
    has_proj = (stride != 1) or (cin != cout)

    x = jnp.transpose(x_nchw, (0, 2, 3, 1))                 # NHWC

    # conv1 patches (bf16) -- wrapper-side im2col.
    p1, ho, wo = extract_patches(x, 3, stride, 1)
    npix = ho * wo
    k1 = 9 * cin
    p1 = p1.reshape(n, npix, k1).astype(jnp.bfloat16)

    # Shortcut input (1x1 receptive field, strided).  bf16 when projected
    # (cast for the MXU anyway, halves its DMA); f32 for the exact identity.
    xs_dtype = jnp.bfloat16 if has_proj else jnp.float32
    xs = x[:, ::stride, ::stride, :].reshape(n, npix, cin).astype(xs_dtype)

    # Weights repacked for (pixels, K) x (K, C) matmuls, stored in bf16.
    w1 = jnp.transpose(params["w1"], (2, 3, 1, 0)).reshape(k1, cout)
    w1 = w1.astype(jnp.bfloat16)
    w2 = jnp.transpose(params["w2"], (2, 3, 1, 0)).reshape(9, cout, cout)
    w2 = w2.astype(jnp.bfloat16)

    # Per-channel bias/affine params stacked into one (rows, C) f32 array.
    rows = [params["b1"], params["g1"], params["bt1"],
            params["b2"], params["g2"], params["bt2"]]
    if has_proj:
        rows += [params["bs"], params["gs"], params["bts"]]
    aff = jnp.stack(rows).astype(jnp.float32)

    # Precomputed group-averaging matrix: (channel_sums @ proj) = group means.
    cpg = cout // groups
    same_group = (jnp.arange(cout)[:, None] // cpg) == \
                 (jnp.arange(cout)[None, :] // cpg)
    proj = same_group.astype(jnp.float32) / float(cpg * npix)     # (C, C)

    # Samples per grid step: largest divisor of N up to 8 (keeps per-step
    # VMEM and the static in-kernel unroll modest).
    bs = 1
    for cand in (8, 4, 2, 1):
        if n % cand == 0:
            bs = cand
            break

    inputs = [p1, xs, w1, w2]
    in_specs = [
        pl.BlockSpec((bs, npix, k1), lambda i: (i, 0, 0)),
        pl.BlockSpec((bs, npix, cin), lambda i: (i, 0, 0)),
        pl.BlockSpec((k1, cout), lambda i: (0, 0)),
        pl.BlockSpec((9, cout, cout), lambda i: (0, 0, 0)),
    ]
    if has_proj:
        ws = jnp.transpose(params["ws"].reshape(cout, cin)).astype(jnp.bfloat16)
        inputs.append(ws)
        in_specs.append(pl.BlockSpec((cin, cout), lambda i: (0, 0)))
    inputs += [aff, proj]
    in_specs += [
        pl.BlockSpec((aff.shape[0], cout), lambda i: (0, 0)),
        pl.BlockSpec((cout, cout), lambda i: (0, 0)),
    ]

    # Zero-padded conv2 scratch: h1 lives at a sublane-aligned offset `base`,
    # with at least wo+1 zero rows on each side, rounded up to sublanes.
    base = -(-(wo + 1) // 8) * 8
    pad_p = -(-(base + npix + wo + 1) // 8) * 8

    kernel = functools.partial(_resblock_kernel, wo=wo, npix=npix, eps=eps,
                               slope=slope, has_proj=has_proj, bs=bs,
                               base=base)

    flops = 2 * n * npix * (k1 * cout + 9 * cout * cout
                            + (cin * cout if has_proj else 0))
    bytes_accessed = sum(int(a.size) * a.dtype.itemsize for a in inputs) \
        + n * npix * cout * 4
    cost = pl.CostEstimate(flops=flops, transcendentals=3 * n * cout,
                           bytes_accessed=bytes_accessed)

    out = pl.pallas_call(
        kernel,
        out_shape=jax.ShapeDtypeStruct((n, npix, cout), jnp.float32),
        grid_spec=pltpu.PrefetchScalarGridSpec(
            num_scalar_prefetch=0,
            grid=(n // bs,),
            in_specs=in_specs,
            out_specs=pl.BlockSpec((bs, npix, cout), lambda i: (i, 0, 0)),
            scratch_shapes=[pltpu.VMEM((pad_p, cout), jnp.float32)],
        ),
        compiler_params=pltpu.CompilerParams(
            dimension_semantics=("parallel",),      # megacore sharding on v7x
            # Explicit limit; valid on v5e/v6e (128 MiB) and v7x (64 MiB).
            vmem_limit_bytes=48 * 1024 * 1024,
        ),
        cost_estimate=cost,
    )(*inputs)

    out = out.reshape(n, ho, wo, cout)
    return jnp.transpose(out, (0, 3, 1, 2))                  # back to NCHW


# ----------------------------------------------------------------------------
# Pure-JAX reference (f32) for a correctness check.
# ----------------------------------------------------------------------------
def _ref_conv(x, w, b, stride, pad):
    y = jax.lax.conv_general_dilated(
        x, w, window_strides=(stride, stride),
        padding=[(pad, pad), (pad, pad)],
        dimension_numbers=("NCHW", "OIHW", "NCHW"),
        precision=jax.lax.Precision.HIGHEST)
    return y + b[None, :, None, None]


def _ref_group_norm(x, gamma, beta, groups, eps):
    n, c, h, w = x.shape
    xg = x.reshape(n, groups, c // groups, h, w)
    mean = xg.mean(axis=(2, 3, 4), keepdims=True)
    var = xg.var(axis=(2, 3, 4), keepdims=True)
    xg = (xg - mean) * jax.lax.rsqrt(var + eps)
    x = xg.reshape(n, c, h, w)
    return x * gamma[None, :, None, None] + beta[None, :, None, None]


def ref_forward(x, params, stride, groups=8, eps=1e-5, slope=0.2):
    lrelu = lambda v: jnp.where(v >= 0, v, slope * v)
    out = lrelu(_ref_group_norm(
        _ref_conv(x, params["w1"], params["b1"], stride, 1),
        params["g1"], params["bt1"], groups, eps))
    out = _ref_group_norm(_ref_conv(out, params["w2"], params["b2"], 1, 1),
                          params["g2"], params["bt2"], groups, eps)
    if "ws" in params:
        sc = _ref_group_norm(_ref_conv(x, params["ws"], params["bs"], stride, 0),
                             params["gs"], params["bts"], groups, eps)
    else:
        sc = x
    return lrelu(out + sc)


# ----------------------------------------------------------------------------
# Deterministic parameter init (matches the torch module's shapes).
# ----------------------------------------------------------------------------
def init_params(key, in_ch, out_ch, stride):
    ks = jax.random.split(key, 10)
    params = {
        "w1": 0.05 * jax.random.normal(ks[0], (out_ch, in_ch, 3, 3), jnp.float32),
        "b1": 0.01 * jax.random.normal(ks[1], (out_ch,), jnp.float32),
        "g1": 1.0 + 0.1 * jax.random.normal(ks[2], (out_ch,), jnp.float32),
        "bt1": 0.05 * jax.random.normal(ks[3], (out_ch,), jnp.float32),
        "w2": 0.05 * jax.random.normal(ks[4], (out_ch, out_ch, 3, 3), jnp.float32),
        "b2": 0.01 * jax.random.normal(ks[5], (out_ch,), jnp.float32),
        "g2": 1.0 + 0.1 * jax.random.normal(ks[6], (out_ch,), jnp.float32),
        "bt2": 0.05 * jax.random.normal(ks[7], (out_ch,), jnp.float32),
    }
    if stride != 1 or in_ch != out_ch:
        params.update({
            "ws": 0.05 * jax.random.normal(ks[8], (out_ch, in_ch, 1, 1), jnp.float32),
            "bs": 0.01 * jax.random.normal(ks[9], (out_ch,), jnp.float32),
            "gs": jnp.ones((out_ch,), jnp.float32),
            "bts": jnp.zeros((out_ch,), jnp.float32),
        })
    return params


if __name__ == "__main__":
    key = jax.random.PRNGKey(0)

    # (batch, in_ch, out_ch, spatial, stride) -- projection path + identity path.
    configs = [(2, 8, 16, 16, 2),
               (2, 16, 16, 16, 1)]

    for batch, in_ch, out_ch, spatial, stride in configs:
        k_x, k_p, key = jax.random.split(key, 3)
        x = jax.random.normal(k_x, (batch, in_ch, spatial, spatial), jnp.float32)
        params = init_params(k_p, in_ch, out_ch, stride)

        fwd = jax.jit(functools.partial(res_block_forward, stride=stride))
        y = fwd(x, params)
        jax.block_until_ready(y)

        expected_shape = (batch, out_ch, spatial // stride, spatial // stride)
        assert y.shape == expected_shape, (y.shape, expected_shape)
        assert bool(jnp.all(jnp.isfinite(y)))

        # Correctness vs. f32 reference (tolerance covers the bf16 MXU matmuls).
        y_ref = ref_forward(x, params, stride)
        err = float(jnp.max(jnp.abs(y - y_ref)))
        assert err < 0.15, f"max abs error vs reference: {err}"

    print("KERNEL_OK")
</pallas_src>

<mosaic_0001>
module attributes {stable_mosaic.version = 11 : i64} {
  func.func @_resblock_kernel(%arg0: i32, %arg1: memref<2x64x72xbf16, #tpu.memory_space<vmem>>, %arg2: memref<2x64x8xbf16, #tpu.memory_space<vmem>>, %arg3: memref<72x16xbf16, #tpu.memory_space<vmem>>, %arg4: memref<9x16x16xbf16, #tpu.memory_space<vmem>>, %arg5: memref<8x16xbf16, #tpu.memory_space<vmem>>, %arg6: memref<9x16xf32, #tpu.memory_space<vmem>>, %arg7: memref<16x16xf32, #tpu.memory_space<vmem>>, %arg8: memref<2x64x16xf32, #tpu.memory_space<vmem>>, %arg9: memref<96x16xf32, #tpu.memory_space<vmem>>) attributes {dimension_semantics = [#tpu.dimension_semantics<parallel>], iteration_bounds = array<i64: 1>, scalar_prefetch = 0 : i64, scratch_operands = 1 : i64, tpu.core_type = #tpu.core_type<tc>, window_params = [{transform_indices = @transform_0, window_bounds = array<i64: 2, 64, 72>}, {transform_indices = @transform_1, window_bounds = array<i64: 2, 64, 8>}, {pipeline_mode = #tpu.pipeline_mode<synchronous>, transform_indices = @transform_2, window_bounds = array<i64: 72, 16>}, {pipeline_mode = #tpu.pipeline_mode<synchronous>, transform_indices = @transform_3, window_bounds = array<i64: 9, 16, 16>}, {pipeline_mode = #tpu.pipeline_mode<synchronous>, transform_indices = @transform_4, window_bounds = array<i64: 8, 16>}, {pipeline_mode = #tpu.pipeline_mode<synchronous>, transform_indices = @transform_5, window_bounds = array<i64: 9, 16>}, {pipeline_mode = #tpu.pipeline_mode<synchronous>, transform_indices = @transform_6, window_bounds = array<i64: 16, 16>}, {transform_indices = @transform_7, window_bounds = array<i64: 2, 64, 16>}]} {
    %c0 = arith.constant 0 : index
    %c0_0 = arith.constant 0 : index
    %0 = vector.load %arg7[%c0, %c0_0] : memref<16x16xf32, #tpu.memory_space<vmem>>, vector<16x16xf32>
    %cst = arith.constant 0.000000e+00 : f32
    %1 = vector.broadcast %cst : f32 to vector<16x16xf32>
    %c0_1 = arith.constant 0 : index
    %c0_2 = arith.constant 0 : index
    %2 = vector.load %arg9[%c0_1, %c0_2] : memref<96x16xf32, #tpu.memory_space<vmem>>, vector<16x16xf32>
    tpu.vector_store %arg9[%c0_1, %c0_2], %1 {strides = array<i32>} : memref<96x16xf32, #tpu.memory_space<vmem>>, vector<16x16xf32>,
    %cst_3 = arith.constant 0.000000e+00 : f32
    %3 = vector.broadcast %cst_3 : f32 to vector<16x16xf32>
    %c80 = arith.constant 80 : index
    %c0_4 = arith.constant 0 : index
    %4 = vector.load %arg9[%c80, %c0_4] : memref<96x16xf32, #tpu.memory_space<vmem>>, vector<16x16xf32>
    tpu.vector_store %arg9[%c80, %c0_4], %3 {strides = array<i32>} : memref<96x16xf32, #tpu.memory_space<vmem>>, vector<16x16xf32>,
    %5 = tpu.iota {dimensions = array<i32: 0>} : vector<64x1xi32>
    %c8_i32 = arith.constant 8 : i32
    %c0_i32 = arith.constant 0 : i32
    %6 = arith.cmpi eq, %c8_i32, %c0_i32 : i32
    %c1_i32 = arith.constant 1 : i32
    %7 = arith.select %6, %c1_i32, %c8_i32 : i32
    %8 = vector.broadcast %7 : i32 to vector<64x1xi32>
    %9 = arith.remsi %5, %8 : vector<64x1xi32>
    %c0_i32_5 = arith.constant 0 : i32
    %10 = vector.broadcast %c0_i32_5 : i32 to vector<64x1xi32>
    %11 = arith.cmpi ne, %9, %10 : vector<64x1xi32>
    %c0_i32_6 = arith.constant 0 : i32
    %12 = vector.broadcast %c0_i32_6 : i32 to vector<64x1xi32>
    %13 = arith.cmpi slt, %9, %12 : vector<64x1xi32>
    %c0_i32_7 = arith.constant 0 : i32
    %14 = arith.cmpi slt, %7, %c0_i32_7 : i32
    %15 = vector.broadcast %14 : i1 to vector<64x1xi1>
    %16 = vector.broadcast %15 : vector<64x1xi1> to vector<64x1xi1>
    %17 = arith.xori %13, %16 : vector<64x1xi1>
    %18 = arith.andi %17, %11 : vector<64x1xi1>
    %19 = vector.broadcast %7 : i32 to vector<64x1xi32>
    %20 = arith.addi %9, %19 : vector<64x1xi32>
    %21 = arith.select %18, %20, %9 : vector<64x1xi1>, vector<64x1xi32>
    %c1_i32_8 = arith.constant 1 : i32
    %22 = vector.broadcast %c1_i32_8 : i32 to vector<64x1xi32>
    %23 = arith.cmpi sge, %21, %22 : vector<64x1xi32>
    %c6_i32 = arith.constant 6 : i32
    %24 = vector.broadcast %c6_i32 : i32 to vector<64x1xi32>
    %25 = arith.cmpi sle, %21, %24 : vector<64x1xi32>
    %c0_9 = arith.constant 0 : index
    %c0_10 = arith.constant 0 : index
    %c0_11 = arith.constant 0 : index
    %26 = vector.load %arg1[%c0_9, %c0_10, %c0_11] : memref<2x64x72xbf16, #tpu.memory_space<vmem>>, vector<1x64x72xbf16>
    %27 = vector.shape_cast %26 : vector<1x64x72xbf16> to vector<64x72xbf16>
    %c0_12 = arith.constant 0 : index
    %c0_13 = arith.constant 0 : index
    %28 = vector.load %arg3[%c0_12, %c0_13] : memref<72x16xbf16, #tpu.memory_space<vmem>>, vector<72x16xbf16>
    %cst_14 = arith.constant dense<0.000000e+00> : vector<64x16xf32>
    %29 = tpu.matmul %27, %28, %cst_14 {dimension_numbers = #tpu.dot_dimension_numbers<[1], [0], [0], [1], [0, 0, 1, 1], [], []>} : vector<64x72xbf16>, vector<72x16xbf16>, vector<64x16xf32> -> vector<64x16xf32>
    %c0_15 = arith.constant 0 : index
    %c0_16 = arith.constant 0 : index
    %30 = vector.load %arg6[%c0_15, %c0_16] : memref<9x16xf32, #tpu.memory_space<vmem>>, vector<1x16xf32>
    %c1 = arith.constant 1 : index
    %c0_17 = arith.constant 0 : index
    %31 = vector.load %arg6[%c1, %c0_17] : memref<9x16xf32, #tpu.memory_space<vmem>>, vector<1x16xf32>
    %c2 = arith.constant 2 : index
    %c0_18 = arith.constant 0 : index
    %32 = vector.load %arg6[%c2, %c0_18] : memref<9x16xf32, #tpu.memory_space<vmem>>, vector<1x16xf32>
    %cst_19 = arith.constant dense<0.000000e+00> : vector<16xf32>
    %33 = vector.multi_reduction <add>, %29, %cst_19 [0] : vector<64x16xf32> to vector<16xf32>
    %34 = vector.shape_cast %33 : vector<16xf32> to vector<1x16xf32>
    %35 = arith.mulf %29, %29 : vector<64x16xf32>
    %cst_20 = arith.constant dense<0.000000e+00> : vector<16xf32>
    %36 = vector.multi_reduction <add>, %35, %cst_20 [0] : vector<64x16xf32> to vector<16xf32>
    %37 = vector.shape_cast %36 : vector<16xf32> to vector<1x16xf32>
    %cst_21 = arith.constant 6.400000e+01 : f32
    %38 = vector.broadcast %cst_21 : f32 to vector<1x16xf32>
    %39 = arith.mulf %38, %30 : vector<1x16xf32>
    %40 = arith.addf %34, %39 : vector<1x16xf32>
    %cst_22 = arith.constant 2.000000e+00 : f32
    %41 = vector.broadcast %cst_22 : f32 to vector<1x16xf32>
    %42 = arith.mulf %41, %30 : vector<1x16xf32>
    %43 = arith.mulf %42, %34 : vector<1x16xf32>
    %44 = arith.addf %37, %43 : vector<1x16xf32>
    %cst_23 = arith.constant 6.400000e+01 : f32
    %45 = vector.broadcast %cst_23 : f32 to vector<1x16xf32>
    %46 = arith.mulf %45, %30 : vector<1x16xf32>
    %47 = arith.mulf %46, %30 : vector<1x16xf32>
    %48 = arith.addf %44, %47 : vector<1x16xf32>
    %cst_24 = arith.constant dense<0.000000e+00> : vector<1x16xf32>
    %49 = tpu.matmul %40, %0, %cst_24 {dimension_numbers = #tpu.dot_dimension_numbers<[1], [0], [0], [1], [0, 0, 1, 1], [], []>} : vector<1x16xf32>, vector<16x16xf32>, vector<1x16xf32> -> vector<1x16xf32>
    %cst_25 = arith.constant dense<0.000000e+00> : vector<1x16xf32>
    %50 = tpu.matmul %48, %0, %cst_25 {dimension_numbers = #tpu.dot_dimension_numbers<[1], [0], [0], [1], [0, 0, 1, 1], [], []>} : vector<1x16xf32>, vector<16x16xf32>, vector<1x16xf32> -> vector<1x16xf32>
    %51 = arith.mulf %49, %49 : vector<1x16xf32>
    %52 = arith.subf %50, %51 : vector<1x16xf32>
    %cst_26 = arith.constant 9.99999974E-6 : f32
    %53 = vector.broadcast %cst_26 : f32 to vector<1x16xf32>
    %54 = arith.addf %52, %53 : vector<1x16xf32>
    %55 = math.rsqrt %54 : vector<1x16xf32>
    %56 = arith.mulf %31, %55 : vector<1x16xf32>
    %57 = arith.subf %30, %49 : vector<1x16xf32>
    %58 = arith.mulf %57, %56 : vector<1x16xf32>
    %59 = arith.addf %32, %58 : vector<1x16xf32>
    %60 = vector.broadcast %56 : vector<1x16xf32> to vector<64x16xf32>
    %61 = arith.mulf %29, %60 : vector<64x16xf32>
    %62 = vector.broadcast %59 : vector<1x16xf32> to vector<64x16xf32>
    %63 = arith.addf %61, %62 : vector<64x16xf32>
    %cst_27 = arith.constant 0.000000e+00 : f32
    %64 = vector.broadcast %cst_27 : f32 to vector<64x16xf32>
    %65 = arith.cmpf oge, %63, %64 : vector<64x16xf32>
    %cst_28 = arith.constant 2.000000e-01 : f32
    %66 = vector.broadcast %cst_28 : f32 to vector<64x16xf32>
    %67 = arith.mulf %66, %63 : vector<64x16xf32>
    %68 = arith.select %65, %63, %67 : vector<64x16xi1>, vector<64x16xf32>
    %c16 = arith.constant 16 : index
    %c0_29 = arith.constant 0 : index
    %69 = vector.load %arg9[%c16, %c0_29] : memref<96x16xf32, #tpu.memory_space<vmem>>, vector<64x16xf32>
    tpu.vector_store %arg9[%c16, %c0_29], %68 {strides = array<i32>} : memref<96x16xf32, #tpu.memory_space<vmem>>, vector<64x16xf32>,
    %c7 = arith.constant 7 : index
    %c0_30 = arith.constant 0 : index
    %70 = vector.load %arg9[%c7, %c0_30] : memref<96x16xf32, #tpu.memory_space<vmem>>, vector<64x16xf32>
    %cst_31 = arith.constant 0.000000e+00 : f32
    %71 = vector.shape_cast %23 : vector<64x1xi1> to vector<64x1xi1>
    %72 = vector.broadcast %71 : vector<64x1xi1> to vector<64x16xi1>
    %73 = vector.broadcast %cst_31 : f32 to vector<64x16xf32>
    %74 = arith.select %72, %70, %73 : vector<64x16xi1>, vector<64x16xf32>
    %75 = arith.truncf %74 : vector<64x16xf32> to vector<64x16xbf16>
    %c0_32 = arith.constant 0 : index
    %c0_33 = arith.constant 0 : index
    %c0_34 = arith.constant 0 : index
    %76 = vector.load %arg4[%c0_32, %c0_33, %c0_34] : memref<9x16x16xbf16, #tpu.memory_space<vmem>>, vector<1x16x16xbf16>
    %77 = vector.shape_cast %76 : vector<1x16x16xbf16> to vector<16x16xbf16>
    %cst_35 = arith.constant dense<0.000000e+00> : vector<64x16xf32>
    %78 = tpu.matmul %75, %77, %cst_35 {dimension_numbers = #tpu.dot_dimension_numbers<[1], [0], [0], [1], [0, 0, 1, 1], [], []>} : vector<64x16xbf16>, vector<16x16xbf16>, vector<64x16xf32> -> vector<64x16xf32>
    %c8 = arith.constant 8 : index
    %c0_36 = arith.constant 0 : index
    %79 = vector.load %arg9[%c8, %c0_36] : memref<96x16xf32, #tpu.memory_space<vmem>>, vector<64x16xf32>
    %80 = arith.truncf %79 : vector<64x16xf32> to vector<64x16xbf16>
    %c1_37 = arith.constant 1 : index
    %c0_38 = arith.constant 0 : index
    %c0_39 = arith.constant 0 : index
    %81 = vector.load %arg4[%c1_37, %c0_38, %c0_39] : memref<9x16x16xbf16, #tpu.memory_space<vmem>>, vector<1x16x16xbf16>
    %82 = vector.shape_cast %81 : vector<1x16x16xbf16> to vector<16x16xbf16>
    %cst_40 = arith.constant dense<0.000000e+00> : vector<64x16xf32>
    %83 = tpu.matmul %80, %82, %cst_40 {dimension_numbers = #tpu.dot_dimension_numbers<[1], [0], [0], [1], [0, 0, 1, 1], [], []>} : vector<64x16xbf16>, vector<16x16xbf16>, vector<64x16xf32> -> vector<64x16xf32>
    %84 = arith.addf %78, %83 : vector<64x16xf32>
    %c9 = arith.constant 9 : index
    %c0_41 = arith.constant 0 : index
    %85 = vector.load %arg9[%c9, %c0_41] : memref<96x16xf32, #tpu.memory_space<vmem>>, vector<64x16xf32>
    %cst_42 = arith.constant 0.000000e+00 : f32
    %86 = vector.shape_cast %25 : vector<64x1xi1> to vector<64x1xi1>
    %87 = vector.broadcast %86 : vector<64x1xi1> to vector<64x16xi1>
    %88 = vector.broadcast %cst_42 : f32 to vector<64x16xf32>
    %89 = arith.select %87, %85, %88 : vector<64x16xi1>, vector<64x16xf32>
    %90 = arith.truncf %89 : vector<64x16xf32> to vector<64x16xbf16>
    %c2_43 = arith.constant 2 : index
    %c0_44 = arith.constant 0 : index
    %c0_45 = arith.constant 0 : index
    %91 = vector.load %arg4[%c2_43, %c0_44, %c0_45] : memref<9x16x16xbf16, #tpu.memory_space<vmem>>, vector<1x16x16xbf16>
    %92 = vector.shape_cast %91 : vector<1x16x16xbf16> to vector<16x16xbf16>
    %cst_46 = arith.constant dense<0.000000e+00> : vector<64x16xf32>
    %93 = tpu.matmul %90, %92, %cst_46 {dimension_numbers = #tpu.dot_dimension_numbers<[1], [0], [0], [1], [0, 0, 1, 1], [], []>} : vector<64x16xbf16>, vector<16x16xbf16>, vector<64x16xf32> -> vector<64x16xf32>
    %94 = arith.addf %84, %93 : vector<64x16xf32>
    %c15 = arith.constant 15 : index
    %c0_47 = arith.constant 0 : index
    %95 = vector.load %arg9[%c15, %c0_47] : memref<96x16xf32, #tpu.memory_space<vmem>>, vector<64x16xf32>
    %cst_48 = arith.constant 0.000000e+00 : f32
    %96 = vector.shape_cast %23 : vector<64x1xi1> to vector<64x1xi1>
    %97 = vector.broadcast %96 : vector<64x1xi1> to vector<64x16xi1>
    %98 = vector.broadcast %cst_48 : f32 to vector<64x16xf32>
    %99 = arith.select %97, %95, %98 : vector<64x16xi1>, vector<64x16xf32>
    %100 = arith.truncf %99 : vector<64x16xf32> to vector<64x16xbf16>
    %c3 = arith.constant 3 : index
    %c0_49 = arith.constant 0 : index
    %c0_50 = arith.constant 0 : index
    %101 = vector.load %arg4[%c3, %c0_49, %c0_50] : memref<9x16x16xbf16, #tpu.memory_space<vmem>>, vector<1x16x16xbf16>
    %102 = vector.shape_cast %101 : vector<1x16x16xbf16> to vector<16x16xbf16>
    %cst_51 = arith.constant dense<0.000000e+00> : vector<64x16xf32>
    %103 = tpu.matmul %100, %102, %cst_51 {dimension_numbers = #tpu.dot_dimension_numbers<[1], [0], [0], [1], [0, 0, 1, 1], [], []>} : vector<64x16xbf16>, vector<16x16xbf16>, vector<64x16xf32> -> vector<64x16xf32>
    %104 = arith.addf %94, %103 : vector<64x16xf32>
    %c16_52 = arith.constant 16 : index
    %c0_53 = arith.constant 0 : index
    %105 = vector.load %arg9[%c16_52, %c0_53] : memref<96x16xf32, #tpu.memory_space<vmem>>, vector<64x16xf32>
    %106 = arith.truncf %105 : vector<64x16xf32> to vector<64x16xbf16>
    %c4 = arith.constant 4 : index
    %c0_54 = arith.constant 0 : index
    %c0_55 = arith.constant 0 : index
    %107 = vector.load %arg4[%c4, %c0_54, %c0_55] : memref<9x16x16xbf16, #tpu.memory_space<vmem>>, vector<1x16x16xbf16>
    %108 = vector.shape_cast %107 : vector<1x16x16xbf16> to vector<16x16xbf16>
    %cst_56 = arith.constant dense<0.000000e+00> : vector<64x16xf32>
    %109 = tpu.matmul %106, %108, %cst_56 {dimension_numbers = #tpu.dot_dimension_numbers<[1], [0], [0], [1], [0, 0, 1, 1], [], []>} : vector<64x16xbf16>, vector<16x16xbf16>, vector<64x16xf32> -> vector<64x16xf32>
    %110 = arith.addf %104, %109 : vector<64x16xf32>
    %c17 = arith.constant 17 : index
    %c0_57 = arith.constant 0 : index
    %111 = vector.load %arg9[%c17, %c0_57] : memref<96x16xf32, #tpu.memory_space<vmem>>, vector<64x16xf32>
    %cst_58 = arith.constant 0.000000e+00 : f32
    %112 = vector.shape_cast %25 : vector<64x1xi1> to vector<64x1xi1>
    %113 = vector.broadcast %112 : vector<64x1xi1> to vector<64x16xi1>
    %114 = vector.broadcast %cst_58 : f32 to vector<64x16xf32>
    %115 = arith.select %113, %111, %114 : vector<64x16xi1>, vector<64x16xf32>
    %116 = arith.truncf %115 : vector<64x16xf32> to vector<64x16xbf16>
    %c5 = arith.constant 5 : index
    %c0_59 = arith.constant 0 : index
    %c0_60 = arith.constant 0 : index
    %117 = vector.load %arg4[%c5, %c0_59, %c0_60] : memref<9x16x16xbf16, #tpu.memory_space<vmem>>, vector<1x16x16xbf16>
    %118 = vector.shape_cast %117 : vector<1x16x16xbf16> to vector<16x16xbf16>
    %cst_61 = arith.constant dense<0.000000e+00> : vector<64x16xf32>
    %119 = tpu.matmul %116, %118, %cst_61 {dimension_numbers = #tpu.dot_dimension_numbers<[1], [0], [0], [1], [0, 0, 1, 1], [], []>} : vector<64x16xbf16>, vector<16x16xbf16>, vector<64x16xf32> -> vector<64x16xf32>
    %120 = arith.addf %110, %119 : vector<64x16xf32>
    %c23 = arith.constant 23 : index
    %c0_62 = arith.constant 0 : index
    %121 = vector.load %arg9[%c23, %c0_62] : memref<96x16xf32, #tpu.memory_space<vmem>>, vector<64x16xf32>
    %cst_63 = arith.constant 0.000000e+00 : f32
    %122 = vector.shape_cast %23 : vector<64x1xi1> to vector<64x1xi1>
    %123 = vector.broadcast %122 : vector<64x1xi1> to vector<64x16xi1>
    %124 = vector.broadcast %cst_63 : f32 to vector<64x16xf32>
    %125 = arith.select %123, %121, %124 : vector<64x16xi1>, vector<64x16xf32>
    %126 = arith.truncf %125 : vector<64x16xf32> to vector<64x16xbf16>
    %c6 = arith.constant 6 : index
    %c0_64 = arith.constant 0 : index
    %c0_65 = arith.constant 0 : index
    %127 = vector.load %arg4[%c6, %c0_64, %c0_65] : memref<9x16x16xbf16, #tpu.memory_space<vmem>>, vector<1x16x16xbf16>
    %128 = vector.shape_cast %127 : vector<1x16x16xbf16> to vector<16x16xbf16>
    %cst_66 = arith.constant dense<0.000000e+00> : vector<64x16xf32>
    %129 = tpu.matmul %126, %128, %cst_66 {dimension_numbers = #tpu.dot_dimension_numbers<[1], [0], [0], [1], [0, 0, 1, 1], [], []>} : vector<64x16xbf16>, vector<16x16xbf16>, vector<64x16xf32> -> vector<64x16xf32>
    %130 = arith.addf %120, %129 : vector<64x16xf32>
    %c24 = arith.constant 24 : index
    %c0_67 = arith.constant 0 : index
    %131 = vector.load %arg9[%c24, %c0_67] : memref<96x16xf32, #tpu.memory_space<vmem>>, vector<64x16xf32>
    %132 = arith.truncf %131 : vector<64x16xf32> to vector<64x16xbf16>
    %c7_68 = arith.constant 7 : index
    %c0_69 = arith.constant 0 : index
    %c0_70 = arith.constant 0 : index
    %133 = vector.load %arg4[%c7_68, %c0_69, %c0_70] : memref<9x16x16xbf16, #tpu.memory_space<vmem>>, vector<1x16x16xbf16>
    %134 = vector.shape_cast %133 : vector<1x16x16xbf16> to vector<16x16xbf16>
    %cst_71 = arith.constant dense<0.000000e+00> : vector<64x16xf32>
    %135 = tpu.matmul %132, %134, %cst_71 {dimension_numbers = #tpu.dot_dimension_numbers<[1], [0], [0], [1], [0, 0, 1, 1], [], []>} : vector<64x16xbf16>, vector<16x16xbf16>, vector<64x16xf32> -> vector<64x16xf32>
    %136 = arith.addf %130, %135 : vector<64x16xf32>
    %c25 = arith.constant 25 : index
    %c0_72 = arith.constant 0 : index
    %137 = vector.load %arg9[%c25, %c0_72] : memref<96x16xf32, #tpu.memory_space<vmem>>, vector<64x16xf32>
    %cst_73 = arith.constant 0.000000e+00 : f32
    %138 = vector.shape_cast %25 : vector<64x1xi1> to vector<64x1xi1>
    %139 = vector.broadcast %138 : vector<64x1xi1> to vector<64x16xi1>
    %140 = vector.broadcast %cst_73 : f32 to vector<64x16xf32>
    %141 = arith.select %139, %137, %140 : vector<64x16xi1>, vector<64x16xf32>
    %142 = arith.truncf %141 : vector<64x16xf32> to vector<64x16xbf16>
    %c8_74 = arith.constant 8 : index
    %c0_75 = arith.constant 0 : index
    %c0_76 = arith.constant 0 : index
    %143 = vector.load %arg4[%c8_74, %c0_75, %c0_76] : memref<9x16x16xbf16, #tpu.memory_space<vmem>>, vector<1x16x16xbf16>
    %144 = vector.shape_cast %143 : vector<1x16x16xbf16> to vector<16x16xbf16>
    %cst_77 = arith.constant dense<0.000000e+00> : vector<64x16xf32>
    %145 = tpu.matmul %142, %144, %cst_77 {dimension_numbers = #tpu.dot_dimension_numbers<[1], [0], [0], [1], [0, 0, 1, 1], [], []>} : vector<64x16xbf16>, vector<16x16xbf16>, vector<64x16xf32> -> vector<64x16xf32>
    %146 = arith.addf %136, %145 : vector<64x16xf32>
    %c3_78 = arith.constant 3 : index
    %c0_79 = arith.constant 0 : index
    %147 = vector.load %arg6[%c3_78, %c0_79] : memref<9x16xf32, #tpu.memory_space<vmem>>, vector<1x16xf32>
    %c4_80 = arith.constant 4 : index
    %c0_81 = arith.constant 0 : index
    %148 = vector.load %arg6[%c4_80, %c0_81] : memref<9x16xf32, #tpu.memory_space<vmem>>, vector<1x16xf32>
    %c5_82 = arith.constant 5 : index
    %c0_83 = arith.constant 0 : index
    %149 = vector.load %arg6[%c5_82, %c0_83] : memref<9x16xf32, #tpu.memory_space<vmem>>, vector<1x16xf32>
    %cst_84 = arith.constant dense<0.000000e+00> : vector<16xf32>
    %150 = vector.multi_reduction <add>, %146, %cst_84 [0] : vector<64x16xf32> to vector<16xf32>
    %151 = vector.shape_cast %150 : vector<16xf32> to vector<1x16xf32>
    %152 = arith.mulf %146, %146 : vector<64x16xf32>
    %cst_85 = arith.constant dense<0.000000e+00> : vector<16xf32>
    %153 = vector.multi_reduction <add>, %152, %cst_85 [0] : vector<64x16xf32> to vector<16xf32>
    %154 = vector.shape_cast %153 : vector<16xf32> to vector<1x16xf32>
    %cst_86 = arith.constant 6.400000e+01 : f32
    %155 = vector.broadcast %cst_86 : f32 to vector<1x16xf32>
    %156 = arith.mulf %155, %147 : vector<1x16xf32>
    %157 = arith.addf %151, %156 : vector<1x16xf32>
    %cst_87 = arith.constant 2.000000e+00 : f32
    %158 = vector.broadcast %cst_87 : f32 to vector<1x16xf32>
    %159 = arith.mulf %158, %147 : vector<1x16xf32>
    %160 = arith.mulf %159, %151 : vector<1x16xf32>
    %161 = arith.addf %154, %160 : vector<1x16xf32>
    %cst_88 = arith.constant 6.400000e+01 : f32
    %162 = vector.broadcast %cst_88 : f32 to vector<1x16xf32>
    %163 = arith.mulf %162, %147 : vector<1x16xf32>
    %164 = arith.mulf %163, %147 : vector<1x16xf32>
    %165 = arith.addf %161, %164 : vector<1x16xf32>
    %cst_89 = arith.constant dense<0.000000e+00> : vector<1x16xf32>
    %166 = tpu.matmul %157, %0, %cst_89 {dimension_numbers = #tpu.dot_dimension_numbers<[1], [0], [0], [1], [0, 0, 1, 1], [], []>} : vector<1x16xf32>, vector<16x16xf32>, vector<1x16xf32> -> vector<1x16xf32>
    %cst_90 = arith.constant dense<0.000000e+00> : vector<1x16xf32>
    %167 = tpu.matmul %165, %0, %cst_90 {dimension_numbers = #tpu.dot_dimension_numbers<[1], [0], [0], [1], [0, 0, 1, 1], [], []>} : vector<1x16xf32>, vector<16x16xf32>, vector<1x16xf32> -> vector<1x16xf32>
    %168 = arith.mulf %166, %166 : vector<1x16xf32>
    %169 = arith.subf %167, %168 : vector<1x16xf32>
    %cst_91 = arith.constant 9.99999974E-6 : f32
    %170 = vector.broadcast %cst_91 : f32 to vector<1x16xf32>
    %171 = arith.addf %169, %170 : vector<1x16xf32>
    %172 = math.rsqrt %171 : vector<1x16xf32>
    %173 = arith.mulf %148, %172 : vector<1x16xf32>
    %174 = arith.subf %147, %166 : vector<1x16xf32>
    %175 = arith.mulf %174, %173 : vector<1x16xf32>
    %176 = arith.addf %149, %175 : vector<1x16xf32>
    %177 = vector.broadcast %173 : vector<1x16xf32> to vector<64x16xf32>
    %178 = arith.mulf %146, %177 : vector<64x16xf32>
    %179 = vector.broadcast %176 : vector<1x16xf32> to vector<64x16xf32>
    %180 = arith.addf %178, %179 : vector<64x16xf32>
    %c0_92 = arith.constant 0 : index
    %c0_93 = arith.constant 0 : index
    %c0_94 = arith.constant 0 : index
    %181 = vector.load %arg2[%c0_92, %c0_93, %c0_94] : memref<2x64x8xbf16, #tpu.memory_space<vmem>>, vector<1x64x8xbf16>
    %182 = vector.shape_cast %181 : vector<1x64x8xbf16> to vector<64x8xbf16>
    %c0_95 = arith.constant 0 : index
    %c0_96 = arith.constant 0 : index
    %183 = vector.load %arg5[%c0_95, %c0_96] : memref<8x16xbf16, #tpu.memory_space<vmem>>, vector<8x16xbf16>
    %cst_97 = arith.constant dense<0.000000e+00> : vector<64x16xf32>
    %184 = tpu.matmul %182, %183, %cst_97 {dimension_numbers = #tpu.dot_dimension_numbers<[1], [0], [0], [1], [0, 0, 1, 1], [], []>} : vector<64x8xbf16>, vector<8x16xbf16>, vector<64x16xf32> -> vector<64x16xf32>
    %c6_98 = arith.constant 6 : index
    %c0_99 = arith.constant 0 : index
    %185 = vector.load %arg6[%c6_98, %c0_99] : memref<9x16xf32, #tpu.memory_space<vmem>>, vector<1x16xf32>
    %c7_100 = arith.constant 7 : index
    %c0_101 = arith.constant 0 : index
    %186 = vector.load %arg6[%c7_100, %c0_101] : memref<9x16xf32, #tpu.memory_space<vmem>>, vector<1x16xf32>
    %c8_102 = arith.constant 8 : index
    %c0_103 = arith.constant 0 : index
    %187 = vector.load %arg6[%c8_102, %c0_103] : memref<9x16xf32, #tpu.memory_space<vmem>>, vector<1x16xf32>
    %cst_104 = arith.constant dense<0.000000e+00> : vector<16xf32>
    %188 = vector.multi_reduction <add>, %184, %cst_104 [0] : vector<64x16xf32> to vector<16xf32>
    %189 = vector.shape_cast %188 : vector<16xf32> to vector<1x16xf32>
    %190 = arith.mulf %184, %184 : vector<64x16xf32>
    %cst_105 = arith.constant dense<0.000000e+00> : vector<16xf32>
    %191 = vector.multi_reduction <add>, %190, %cst_105 [0] : vector<64x16xf32> to vector<16xf32>
    %192 = vector.shape_cast %191 : vector<16xf32> to vector<1x16xf32>
    %cst_106 = arith.constant 6.400000e+01 : f32
    %193 = vector.broadcast %cst_106 : f32 to vector<1x16xf32>
    %194 = arith.mulf %193, %185 : vector<1x16xf32>
    %195 = arith.addf %189, %194 : vector<1x16xf32>
    %cst_107 = arith.constant 2.000000e+00 : f32
    %196 = vector.broadcast %cst_107 : f32 to vector<1x16xf32>
    %197 = arith.mulf %196, %185 : vector<1x16xf32>
    %198 = arith.mulf %197, %189 : vector<1x16xf32>
    %199 = arith.addf %192, %198 : vector<1x16xf32>
    %cst_108 = arith.constant 6.400000e+01 : f32
    %200 = vector.broadcast %cst_108 : f32 to vector<1x16xf32>
    %201 = arith.mulf %200, %185 : vector<1x16xf32>
    %202 = arith.mulf %201, %185 : vector<1x16xf32>
    %203 = arith.addf %199, %202 : vector<1x16xf32>
    %cst_109 = arith.constant dense<0.000000e+00> : vector<1x16xf32>
    %204 = tpu.matmul %195, %0, %cst_109 {dimension_numbers = #tpu.dot_dimension_numbers<[1], [0], [0], [1], [0, 0, 1, 1], [], []>} : vector<1x16xf32>, vector<16x16xf32>, vector<1x16xf32> -> vector<1x16xf32>
    %cst_110 = arith.constant dense<0.000000e+00> : vector<1x16xf32>
    %205 = tpu.matmul %203, %0, %cst_110 {dimension_numbers = #tpu.dot_dimension_numbers<[1], [0], [0], [1], [0, 0, 1, 1], [], []>} : vector<1x16xf32>, vector<16x16xf32>, vector<1x16xf32> -> vector<1x16xf32>
    %206 = arith.mulf %204, %204 : vector<1x16xf32>
    %207 = arith.subf %205, %206 : vector<1x16xf32>
    %cst_111 = arith.constant 9.99999974E-6 : f32
    %208 = vector.broadcast %cst_111 : f32 to vector<1x16xf32>
    %209 = arith.addf %207, %208 : vector<1x16xf32>
    %210 = math.rsqrt %209 : vector<1x16xf32>
    %211 = arith.mulf %186, %210 : vector<1x16xf32>
    %212 = arith.subf %185, %204 : vector<1x16xf32>
    %213 = arith.mulf %212, %211 : vector<1x16xf32>
    %214 = arith.addf %187, %213 : vector<1x16xf32>
    %215 = vector.broadcast %211 : vector<1x16xf32> to vector<64x16xf32>
    %216 = arith.mulf %184, %215 : vector<64x16xf32>
    %217 = vector.broadcast %214 : vector<1x16xf32> to vector<64x16xf32>
    %218 = arith.addf %216, %217 : vector<64x16xf32>
    %219 = arith.addf %180, %218 : vector<64x16xf32>
    %cst_112 = arith.constant 0.000000e+00 : f32
    %220 = vector.broadcast %cst_112 : f32 to vector<64x16xf32>
    %221 = arith.cmpf oge, %219, %220 : vector<64x16xf32>
    %cst_113 = arith.constant 2.000000e-01 : f32
    %222 = vector.broadcast %cst_113 : f32 to vector<64x16xf32>
    %223 = arith.mulf %222, %219 : vector<64x16xf32>
    %224 = arith.select %221, %219, %223 : vector<64x16xi1>, vector<64x16xf32>
    %c0_114 = arith.constant 0 : index
    %c0_115 = arith.constant 0 : index
    %c0_116 = arith.constant 0 : index
    %225 = vector.load %arg8[%c0_114, %c0_115, %c0_116] : memref<2x64x16xf32, #tpu.memory_space<vmem>>, vector<1x64x16xf32>
    %226 = vector.shape_cast %225 : vector<1x64x16xf32> to vector<64x16xf32>
    %227 = vector.shape_cast %224 : vector<64x16xf32> to vector<1x64x16xf32>
    tpu.vector_store %arg8[%c0_114, %c0_115, %c0_116], %227 {strides = array<i32>} : memref<2x64x16xf32, #tpu.memory_space<vmem>>, vector<1x64x16xf32>,
    %c1_117 = arith.constant 1 : index
    %c0_118 = arith.constant 0 : index
    %c0_119 = arith.constant 0 : index
    %228 = vector.load %arg1[%c1_117, %c0_118, %c0_119] : memref<2x64x72xbf16, #tpu.memory_space<vmem>>, vector<1x64x72xbf16>
    %229 = vector.shape_cast %228 : vector<1x64x72xbf16> to vector<64x72xbf16>
    %c0_120 = arith.constant 0 : index
    %c0_121 = arith.constant 0 : index
    %230 = vector.load %arg3[%c0_120, %c0_121] : memref<72x16xbf16, #tpu.memory_space<vmem>>, vector<72x16xbf16>
    %cst_122 = arith.constant dense<0.000000e+00> : vector<64x16xf32>
    %231 = tpu.matmul %229, %230, %cst_122 {dimension_numbers = #tpu.dot_dimension_numbers<[1], [0], [0], [1], [0, 0, 1, 1], [], []>} : vector<64x72xbf16>, vector<72x16xbf16>, vector<64x16xf32> -> vector<64x16xf32>
    %c0_123 = arith.constant 0 : index
    %c0_124 = arith.constant 0 : index
    %232 = vector.load %arg6[%c0_123, %c0_124] : memref<9x16xf32, #tpu.memory_space<vmem>>, vector<1x16xf32>
    %c1_125 = arith.constant 1 : index
    %c0_126 = arith.constant 0 : index
    %233 = vector.load %arg6[%c1_125, %c0_126] : memref<9x16xf32, #tpu.memory_space<vmem>>, vector<1x16xf32>
    %c2_127 = arith.constant 2 : index
    %c0_128 = arith.constant 0 : index
    %234 = vector.load %arg6[%c2_127, %c0_128] : memref<9x16xf32, #tpu.memory_space<vmem>>, vector<1x16xf32>
    %cst_129 = arith.constant dense<0.000000e+00> : vector<16xf32>
    %235 = vector.multi_reduction <add>, %231, %cst_129 [0] : vector<64x16xf32> to vector<16xf32>
    %236 = vector.shape_cast %235 : vector<16xf32> to vector<1x16xf32>
    %237 = arith.mulf %231, %231 : vector<64x16xf32>
    %cst_130 = arith.constant dense<0.000000e+00> : vector<16xf32>
    %238 = vector.multi_reduction <add>, %237, %cst_130 [0] : vector<64x16xf32> to vector<16xf32>
    %239 = vector.shape_cast %238 : vector<16xf32> to vector<1x16xf32>
    %cst_131 = arith.constant 6.400000e+01 : f32
    %240 = vector.broadcast %cst_131 : f32 to vector<1x16xf32>
    %241 = arith.mulf %240, %232 : vector<1x16xf32>
    %242 = arith.addf %236, %241 : vector<1x16xf32>
    %cst_132 = arith.constant 2.000000e+00 : f32
    %243 = vector.broadcast %cst_132 : f32 to vector<1x16xf32>
    %244 = arith.mulf %243, %232 : vector<1x16xf32>
    %245 = arith.mulf %244, %236 : vector<1x16xf32>
    %246 = arith.addf %239, %245 : vector<1x16xf32>
    %cst_133 = arith.constant 6.400000e+01 : f32
    %247 = vector.broadcast %cst_133 : f32 to vector<1x16xf32>
    %248 = arith.mulf %247, %232 : vector<1x16xf32>
    %249 = arith.mulf %248, %232 : vector<1x16xf32>
    %250 = arith.addf %246, %249 : vector<1x16xf32>
    %cst_134 = arith.constant dense<0.000000e+00> : vector<1x16xf32>
    %251 = tpu.matmul %242, %0, %cst_134 {dimension_numbers = #tpu.dot_dimension_numbers<[1], [0], [0], [1], [0, 0, 1, 1], [], []>} : vector<1x16xf32>, vector<16x16xf32>, vector<1x16xf32> -> vector<1x16xf32>
    %cst_135 = arith.constant dense<0.000000e+00> : vector<1x16xf32>
    %252 = tpu.matmul %250, %0, %cst_135 {dimension_numbers = #tpu.dot_dimension_numbers<[1], [0], [0], [1], [0, 0, 1, 1], [], []>} : vector<1x16xf32>, vector<16x16xf32>, vector<1x16xf32> -> vector<1x16xf32>
    %253 = arith.mulf %251, %251 : vector<1x16xf32>
    %254 = arith.subf %252, %253 : vector<1x16xf32>
    %cst_136 = arith.constant 9.99999974E-6 : f32
    %255 = vector.broadcast %cst_136 : f32 to vector<1x16xf32>
    %256 = arith.addf %254, %255 : vector<1x16xf32>
    %257 = math.rsqrt %256 : vector<1x16xf32>
    %258 = arith.mulf %233, %257 : vector<1x16xf32>
    %259 = arith.subf %232, %251 : vector<1x16xf32>
    %260 = arith.mulf %259, %258 : vector<1x16xf32>
    %261 = arith.addf %234, %260 : vector<1x16xf32>
    %262 = vector.broadcast %258 : vector<1x16xf32> to vector<64x16xf32>
    %263 = arith.mulf %231, %262 : vector<64x16xf32>
    %264 = vector.broadcast %261 : vector<1x16xf32> to vector<64x16xf32>
    %265 = arith.addf %263, %264 : vector<64x16xf32>
    %cst_137 = arith.constant 0.000000e+00 : f32
    %266 = vector.broadcast %cst_137 : f32 to vector<64x16xf32>
    %267 = arith.cmpf oge, %265, %266 : vector<64x16xf32>
    %cst_138 = arith.constant 2.000000e-01 : f32
    %268 = vector.broadcast %cst_138 : f32 to vector<64x16xf32>
    %269 = arith.mulf %268, %265 : vector<64x16xf32>
    %270 = arith.select %267, %265, %269 : vector<64x16xi1>, vector<64x16xf32>
    %c16_139 = arith.constant 16 : index
    %c0_140 = arith.constant 0 : index
    %271 = vector.load %arg9[%c16_139, %c0_140] : memref<96x16xf32, #tpu.memory_space<vmem>>, vector<64x16xf32>
    tpu.vector_store %arg9[%c16_139, %c0_140], %270 {strides = array<i32>} : memref<96x16xf32, #tpu.memory_space<vmem>>, vector<64x16xf32>,
    %c7_141 = arith.constant 7 : index
    %c0_142 = arith.constant 0 : index
    %272 = vector.load %arg9[%c7_141, %c0_142] : memref<96x16xf32, #tpu.memory_space<vmem>>, vector<64x16xf32>
    %cst_143 = arith.constant 0.000000e+00 : f32
    %273 = vector.shape_cast %23 : vector<64x1xi1> to vector<64x1xi1>
    %274 = vector.broadcast %273 : vector<64x1xi1> to vector<64x16xi1>
    %275 = vector.broadcast %cst_143 : f32 to vector<64x16xf32>
    %276 = arith.select %274, %272, %275 : vector<64x16xi1>, vector<64x16xf32>
    %277 = arith.truncf %276 : vector<64x16xf32> to vector<64x16xbf16>
    %c0_144 = arith.constant 0 : index
    %c0_145 = arith.constant 0 : index
    %c0_146 = arith.constant 0 : index
    %278 = vector.load %arg4[%c0_144, %c0_145, %c0_146] : memref<9x16x16xbf16, #tpu.memory_space<vmem>>, vector<1x16x16xbf16>
    %279 = vector.shape_cast %278 : vector<1x16x16xbf16> to vector<16x16xbf16>
    %cst_147 = arith.constant dense<0.000000e+00> : vector<64x16xf32>
    %280 = tpu.matmul %277, %279, %cst_147 {dimension_numbers = #tpu.dot_dimension_numbers<[1], [0], [0], [1], [0, 0, 1, 1], [], []>} : vector<64x16xbf16>, vector<16x16xbf16>, vector<64x16xf32> -> vector<64x16xf32>
    %c8_148 = arith.constant 8 : index
    %c0_149 = arith.constant 0 : index
    %281 = vector.load %arg9[%c8_148, %c0_149] : memref<96x16xf32, #tpu.memory_space<vmem>>, vector<64x16xf32>
    %282 = arith.truncf %281 : vector<64x16xf32> to vector<64x16xbf16>
    %c1_150 = arith.constant 1 : index
    %c0_151 = arith.constant 0 : index
    %c0_152 = arith.constant 0 : index
    %283 = vector.load %arg4[%c1_150, %c0_151, %c0_152] : memref<9x16x16xbf16, #tpu.memory_space<vmem>>, vector<1x16x16xbf16>
    %284 = vector.shape_cast %283 : vector<1x16x16xbf16> to vector<16x16xbf16>
    %cst_153 = arith.constant dense<0.000000e+00> : vector<64x16xf32>
    %285 = tpu.matmul %282, %284, %cst_153 {dimension_numbers = #tpu.dot_dimension_numbers<[1], [0], [0], [1], [0, 0, 1, 1], [], []>} : vector<64x16xbf16>, vector<16x16xbf16>, vector<64x16xf32> -> vector<64x16xf32>
    %286 = arith.addf %280, %285 : vector<64x16xf32>
    %c9_154 = arith.constant 9 : index
    %c0_155 = arith.constant 0 : index
    %287 = vector.load %arg9[%c9_154, %c0_155] : memref<96x16xf32, #tpu.memory_space<vmem>>, vector<64x16xf32>
    %cst_156 = arith.constant 0.000000e+00 : f32
    %288 = vector.shape_cast %25 : vector<64x1xi1> to vector<64x1xi1>
    %289 = vector.broadcast %288 : vector<64x1xi1> to vector<64x16xi1>
    %290 = vector.broadcast %cst_156 : f32 to vector<64x16xf32>
    %291 = arith.select %289, %287, %290 : vector<64x16xi1>, vector<64x16xf32>
    %292 = arith.truncf %291 : vector<64x16xf32> to vector<64x16xbf16>
    %c2_157 = arith.constant 2 : index
    %c0_158 = arith.constant 0 : index
    %c0_159 = arith.constant 0 : index
    %293 = vector.load %arg4[%c2_157, %c0_158, %c0_159] : memref<9x16x16xbf16, #tpu.memory_space<vmem>>, vector<1x16x16xbf16>
    %294 = vector.shape_cast %293 : vector<1x16x16xbf16> to vector<16x16xbf16>
    %cst_160 = arith.constant dense<0.000000e+00> : vector<64x16xf32>
    %295 = tpu.matmul %292, %294, %cst_160 {dimension_numbers = #tpu.dot_dimension_numbers<[1], [0], [0], [1], [0, 0, 1, 1], [], []>} : vector<64x16xbf16>, vector<16x16xbf16>, vector<64x16xf32> -> vector<64x16xf32>
    %296 = arith.addf %286, %295 : vector<64x16xf32>
    %c15_161 = arith.constant 15 : index
    %c0_162 = arith.constant 0 : index
    %297 = vector.load %arg9[%c15_161, %c0_162] : memref<96x16xf32, #tpu.memory_space<vmem>>, vector<64x16xf32>
    %cst_163 = arith.constant 0.000000e+00 : f32
    %298 = vector.shape_cast %23 : vector<64x1xi1> to vector<64x1xi1>
    %299 = vector.broadcast %298 : vector<64x1xi1> to vector<64x16xi1>
    %300 = vector.broadcast %cst_163 : f32 to vector<64x16xf32>
    %301 = arith.select %299, %297, %300 : vector<64x16xi1>, vector<64x16xf32>
    %302 = arith.truncf %301 : vector<64x16xf32> to vector<64x16xbf16>
    %c3_164 = arith.constant 3 : index
    %c0_165 = arith.constant 0 : index
    %c0_166 = arith.constant 0 : index
    %303 = vector.load %arg4[%c3_164, %c0_165, %c0_166] : memref<9x16x16xbf16, #tpu.memory_space<vmem>>, vector<1x16x16xbf16>
    %304 = vector.shape_cast %303 : vector<1x16x16xbf16> to vector<16x16xbf16>
    %cst_167 = arith.constant dense<0.000000e+00> : vector<64x16xf32>
    %305 = tpu.matmul %302, %304, %cst_167 {dimension_numbers = #tpu.dot_dimension_numbers<[1], [0], [0], [1], [0, 0, 1, 1], [], []>} : vector<64x16xbf16>, vector<16x16xbf16>, vector<64x16xf32> -> vector<64x16xf32>
    %306 = arith.addf %296, %305 : vector<64x16xf32>
    %c16_168 = arith.constant 16 : index
    %c0_169 = arith.constant 0 : index
    %307 = vector.load %arg9[%c16_168, %c0_169] : memref<96x16xf32, #tpu.memory_space<vmem>>, vector<64x16xf32>
    %308 = arith.truncf %307 : vector<64x16xf32> to vector<64x16xbf16>
    %c4_170 = arith.constant 4 : index
    %c0_171 = arith.constant 0 : index
    %c0_172 = arith.constant 0 : index
    %309 = vector.load %arg4[%c4_170, %c0_171, %c0_172] : memref<9x16x16xbf16, #tpu.memory_space<vmem>>, vector<1x16x16xbf16>
    %310 = vector.shape_cast %309 : vector<1x16x16xbf16> to vector<16x16xbf16>
    %cst_173 = arith.constant dense<0.000000e+00> : vector<64x16xf32>
    %311 = tpu.matmul %308, %310, %cst_173 {dimension_numbers = #tpu.dot_dimension_numbers<[1], [0], [0], [1], [0, 0, 1, 1], [], []>} : vector<64x16xbf16>, vector<16x16xbf16>, vector<64x16xf32> -> vector<64x16xf32>
    %312 = arith.addf %306, %311 : vector<64x16xf32>
    %c17_174 = arith.constant 17 : index
    %c0_175 = arith.constant 0 : index
    %313 = vector.load %arg9[%c17_174, %c0_175] : memref<96x16xf32, #tpu.memory_space<vmem>>, vector<64x16xf32>
    %cst_176 = arith.constant 0.000000e+00 : f32
    %314 = vector.shape_cast %25 : vector<64x1xi1> to vector<64x1xi1>
    %315 = vector.broadcast %314 : vector<64x1xi1> to vector<64x16xi1>
    %316 = vector.broadcast %cst_176 : f32 to vector<64x16xf32>
    %317 = arith.select %315, %313, %316 : vector<64x16xi1>, vector<64x16xf32>
    %318 = arith.truncf %317 : vector<64x16xf32> to vector<64x16xbf16>
    %c5_177 = arith.constant 5 : index
    %c0_178 = arith.constant 0 : index
    %c0_179 = arith.constant 0 : index
    %319 = vector.load %arg4[%c5_177, %c0_178, %c0_179] : memref<9x16x16xbf16, #tpu.memory_space<vmem>>, vector<1x16x16xbf16>
    %320 = vector.shape_cast %319 : vector<1x16x16xbf16> to vector<16x16xbf16>
    %cst_180 = arith.constant dense<0.000000e+00> : vector<64x16xf32>
    %321 = tpu.matmul %318, %320, %cst_180 {dimension_numbers = #tpu.dot_dimension_numbers<[1], [0], [0], [1], [0, 0, 1, 1], [], []>} : vector<64x16xbf16>, vector<16x16xbf16>, vector<64x16xf32> -> vector<64x16xf32>
    %322 = arith.addf %312, %321 : vector<64x16xf32>
    %c23_181 = arith.constant 23 : index
    %c0_182 = arith.constant 0 : index
    %323 = vector.load %arg9[%c23_181, %c0_182] : memref<96x16xf32, #tpu.memory_space<vmem>>, vector<64x16xf32>
    %cst_183 = arith.constant 0.000000e+00 : f32
    %324 = vector.shape_cast %23 : vector<64x1xi1> to vector<64x1xi1>
    %325 = vector.broadcast %324 : vector<64x1xi1> to vector<64x16xi1>
    %326 = vector.broadcast %cst_183 : f32 to vector<64x16xf32>
    %327 = arith.select %325, %323, %326 : vector<64x16xi1>, vector<64x16xf32>
    %328 = arith.truncf %327 : vector<64x16xf32> to vector<64x16xbf16>
    %c6_184 = arith.constant 6 : index
    %c0_185 = arith.constant 0 : index
    %c0_186 = arith.constant 0 : index
    %329 = vector.load %arg4[%c6_184, %c0_185, %c0_186] : memref<9x16x16xbf16, #tpu.memory_space<vmem>>, vector<1x16x16xbf16>
    %330 = vector.shape_cast %329 : vector<1x16x16xbf16> to vector<16x16xbf16>
    %cst_187 = arith.constant dense<0.000000e+00> : vector<64x16xf32>
    %331 = tpu.matmul %328, %330, %cst_187 {dimension_numbers = #tpu.dot_dimension_numbers<[1], [0], [0], [1], [0, 0, 1, 1], [], []>} : vector<64x16xbf16>, vector<16x16xbf16>, vector<64x16xf32> -> vector<64x16xf32>
    %332 = arith.addf %322, %331 : vector<64x16xf32>
    %c24_188 = arith.constant 24 : index
    %c0_189 = arith.constant 0 : index
    %333 = vector.load %arg9[%c24_188, %c0_189] : memref<96x16xf32, #tpu.memory_space<vmem>>, vector<64x16xf32>
    %334 = arith.truncf %333 : vector<64x16xf32> to vector<64x16xbf16>
    %c7_190 = arith.constant 7 : index
    %c0_191 = arith.constant 0 : index
    %c0_192 = arith.constant 0 : index
    %335 = vector.load %arg4[%c7_190, %c0_191, %c0_192] : memref<9x16x16xbf16, #tpu.memory_space<vmem>>, vector<1x16x16xbf16>
    %336 = vector.shape_cast %335 : vector<1x16x16xbf16> to vector<16x16xbf16>
    %cst_193 = arith.constant dense<0.000000e+00> : vector<64x16xf32>
    %337 = tpu.matmul %334, %336, %cst_193 {dimension_numbers = #tpu.dot_dimension_numbers<[1], [0], [0], [1], [0, 0, 1, 1], [], []>} : vector<64x16xbf16>, vector<16x16xbf16>, vector<64x16xf32> -> vector<64x16xf32>
    %338 = arith.addf %332, %337 : vector<64x16xf32>
    %c25_194 = arith.constant 25 : index
    %c0_195 = arith.constant 0 : index
    %339 = vector.load %arg9[%c25_194, %c0_195] : memref<96x16xf32, #tpu.memory_space<vmem>>, vector<64x16xf32>
    %cst_196 = arith.constant 0.000000e+00 : f32
    %340 = vector.shape_cast %25 : vector<64x1xi1> to vector<64x1xi1>
    %341 = vector.broadcast %340 : vector<64x1xi1> to vector<64x16xi1>
    %342 = vector.broadcast %cst_196 : f32 to vector<64x16xf32>
    %343 = arith.select %341, %339, %342 : vector<64x16xi1>, vector<64x16xf32>
    %344 = arith.truncf %343 : vector<64x16xf32> to vector<64x16xbf16>
    %c8_197 = arith.constant 8 : index
    %c0_198 = arith.constant 0 : index
    %c0_199 = arith.constant 0 : index
    %345 = vector.load %arg4[%c8_197, %c0_198, %c0_199] : memref<9x16x16xbf16, #tpu.memory_space<vmem>>, vector<1x16x16xbf16>
    %346 = vector.shape_cast %345 : vector<1x16x16xbf16> to vector<16x16xbf16>
    %cst_200 = arith.constant dense<0.000000e+00> : vector<64x16xf32>
    %347 = tpu.matmul %344, %346, %cst_200 {dimension_numbers = #tpu.dot_dimension_numbers<[1], [0], [0], [1], [0, 0, 1, 1], [], []>} : vector<64x16xbf16>, vector<16x16xbf16>, vector<64x16xf32> -> vector<64x16xf32>
    %348 = arith.addf %338, %347 : vector<64x16xf32>
    %c3_201 = arith.constant 3 : index
    %c0_202 = arith.constant 0 : index
    %349 = vector.load %arg6[%c3_201, %c0_202] : memref<9x16xf32, #tpu.memory_space<vmem>>, vector<1x16xf32>
    %c4_203 = arith.constant 4 : index
    %c0_204 = arith.constant 0 : index
    %350 = vector.load %arg6[%c4_203, %c0_204] : memref<9x16xf32, #tpu.memory_space<vmem>>, vector<1x16xf32>
    %c5_205 = arith.constant 5 : index
    %c0_206 = arith.constant 0 : index
    %351 = vector.load %arg6[%c5_205, %c0_206] : memref<9x16xf32, #tpu.memory_space<vmem>>, vector<1x16xf32>
    %cst_207 = arith.constant dense<0.000000e+00> : vector<16xf32>
    %352 = vector.multi_reduction <add>, %348, %cst_207 [0] : vector<64x16xf32> to vector<16xf32>
    %353 = vector.shape_cast %352 : vector<16xf32> to vector<1x16xf32>
    %354 = arith.mulf %348, %348 : vector<64x16xf32>
    %cst_208 = arith.constant dense<0.000000e+00> : vector<16xf32>
    %355 = vector.multi_reduction <add>, %354, %cst_208 [0] : vector<64x16xf32> to vector<16xf32>
    %356 = vector.shape_cast %355 : vector<16xf32> to vector<1x16xf32>
    %cst_209 = arith.constant 6.400000e+01 : f32
    %357 = vector.broadcast %cst_209 : f32 to vector<1x16xf32>
    %358 = arith.mulf %357, %349 : vector<1x16xf32>
    %359 = arith.addf %353, %358 : vector<1x16xf32>
    %cst_210 = arith.constant 2.000000e+00 : f32
    %360 = vector.broadcast %cst_210 : f32 to vector<1x16xf32>
    %361 = arith.mulf %360, %349 : vector<1x16xf32>
    %362 = arith.mulf %361, %353 : vector<1x16xf32>
    %363 = arith.addf %356, %362 : vector<1x16xf32>
    %cst_211 = arith.constant 6.400000e+01 : f32
    %364 = vector.broadcast %cst_211 : f32 to vector<1x16xf32>
    %365 = arith.mulf %364, %349 : vector<1x16xf32>
    %366 = arith.mulf %365, %349 : vector<1x16xf32>
    %367 = arith.addf %363, %366 : vector<1x16xf32>
    %cst_212 = arith.constant dense<0.000000e+00> : vector<1x16xf32>
    %368 = tpu.matmul %359, %0, %cst_212 {dimension_numbers = #tpu.dot_dimension_numbers<[1], [0], [0], [1], [0, 0, 1, 1], [], []>} : vector<1x16xf32>, vector<16x16xf32>, vector<1x16xf32> -> vector<1x16xf32>
    %cst_213 = arith.constant dense<0.000000e+00> : vector<1x16xf32>
    %369 = tpu.matmul %367, %0, %cst_213 {dimension_numbers = #tpu.dot_dimension_numbers<[1], [0], [0], [1], [0, 0, 1, 1], [], []>} : vector<1x16xf32>, vector<16x16xf32>, vector<1x16xf32> -> vector<1x16xf32>
    %370 = arith.mulf %368, %368 : vector<1x16xf32>
    %371 = arith.subf %369, %370 : vector<1x16xf32>
    %cst_214 = arith.constant 9.99999974E-6 : f32
    %372 = vector.broadcast %cst_214 : f32 to vector<1x16xf32>
    %373 = arith.addf %371, %372 : vector<1x16xf32>
    %374 = math.rsqrt %373 : vector<1x16xf32>
    %375 = arith.mulf %350, %374 : vector<1x16xf32>
    %376 = arith.subf %349, %368 : vector<1x16xf32>
    %377 = arith.mulf %376, %375 : vector<1x16xf32>
    %378 = arith.addf %351, %377 : vector<1x16xf32>
    %379 = vector.broadcast %375 : vector<1x16xf32> to vector<64x16xf32>
    %380 = arith.mulf %348, %379 : vector<64x16xf32>
    %381 = vector.broadcast %378 : vector<1x16xf32> to vector<64x16xf32>
    %382 = arith.addf %380, %381 : vector<64x16xf32>
    %c1_215 = arith.constant 1 : index
    %c0_216 = arith.constant 0 : index
    %c0_217 = arith.constant 0 : index
    %383 = vector.load %arg2[%c1_215, %c0_216, %c0_217] : memref<2x64x8xbf16, #tpu.memory_space<vmem>>, vector<1x64x8xbf16>
    %384 = vector.shape_cast %383 : vector<1x64x8xbf16> to vector<64x8xbf16>
    %c0_218 = arith.constant 0 : index
    %c0_219 = arith.constant 0 : index
    %385 = vector.load %arg5[%c0_218, %c0_219] : memref<8x16xbf16, #tpu.memory_space<vmem>>, vector<8x16xbf16>
    %cst_220 = arith.constant dense<0.000000e+00> : vector<64x16xf32>
    %386 = tpu.matmul %384, %385, %cst_220 {dimension_numbers = #tpu.dot_dimension_numbers<[1], [0], [0], [1], [0, 0, 1, 1], [], []>} : vector<64x8xbf16>, vector<8x16xbf16>, vector<64x16xf32> -> vector<64x16xf32>
    %c6_221 = arith.constant 6 : index
    %c0_222 = arith.constant 0 : index
    %387 = vector.load %arg6[%c6_221, %c0_222] : memref<9x16xf32, #tpu.memory_space<vmem>>, vector<1x16xf32>
    %c7_223 = arith.constant 7 : index
    %c0_224 = arith.constant 0 : index
    %388 = vector.load %arg6[%c7_223, %c0_224] : memref<9x16xf32, #tpu.memory_space<vmem>>, vector<1x16xf32>
    %c8_225 = arith.constant 8 : index
    %c0_226 = arith.constant 0 : index
    %389 = vector.load %arg6[%c8_225, %c0_226] : memref<9x16xf32, #tpu.memory_space<vmem>>, vector<1x16xf32>
    %cst_227 = arith.constant dense<0.000000e+00> : vector<16xf32>
    %390 = vector.multi_reduction <add>, %386, %cst_227 [0] : vector<64x16xf32> to vector<16xf32>
    %391 = vector.shape_cast %390 : vector<16xf32> to vector<1x16xf32>
    %392 = arith.mulf %386, %386 : vector<64x16xf32>
    %cst_228 = arith.constant dense<0.000000e+00> : vector<16xf32>
    %393 = vector.multi_reduction <add>, %392, %cst_228 [0] : vector<64x16xf32> to vector<16xf32>
    %394 = vector.shape_cast %393 : vector<16xf32> to vector<1x16xf32>
    %cst_229 = arith.constant 6.400000e+01 : f32
    %395 = vector.broadcast %cst_229 : f32 to vector<1x16xf32>
    %396 = arith.mulf %395, %387 : vector<1x16xf32>
    %397 = arith.addf %391, %396 : vector<1x16xf32>
    %cst_230 = arith.constant 2.000000e+00 : f32
    %398 = vector.broadcast %cst_230 : f32 to vector<1x16xf32>
    %399 = arith.mulf %398, %387 : vector<1x16xf32>
    %400 = arith.mulf %399, %391 : vector<1x16xf32>
    %401 = arith.addf %394, %400 : vector<1x16xf32>
    %cst_231 = arith.constant 6.400000e+01 : f32
    %402 = vector.broadcast %cst_231 : f32 to vector<1x16xf32>
    %403 = arith.mulf %402, %387 : vector<1x16xf32>
    %404 = arith.mulf %403, %387 : vector<1x16xf32>
    %405 = arith.addf %401, %404 : vector<1x16xf32>
    %cst_232 = arith.constant dense<0.000000e+00> : vector<1x16xf32>
    %406 = tpu.matmul %397, %0, %cst_232 {dimension_numbers = #tpu.dot_dimension_numbers<[1], [0], [0], [1], [0, 0, 1, 1], [], []>} : vector<1x16xf32>, vector<16x16xf32>, vector<1x16xf32> -> vector<1x16xf32>
    %cst_233 = arith.constant dense<0.000000e+00> : vector<1x16xf32>
    %407 = tpu.matmul %405, %0, %cst_233 {dimension_numbers = #tpu.dot_dimension_numbers<[1], [0], [0], [1], [0, 0, 1, 1], [], []>} : vector<1x16xf32>, vector<16x16xf32>, vector<1x16xf32> -> vector<1x16xf32>
    %408 = arith.mulf %406, %406 : vector<1x16xf32>
    %409 = arith.subf %407, %408 : vector<1x16xf32>
    %cst_234 = arith.constant 9.99999974E-6 : f32
    %410 = vector.broadcast %cst_234 : f32 to vector<1x16xf32>
    %411 = arith.addf %409, %410 : vector<1x16xf32>
    %412 = math.rsqrt %411 : vector<1x16xf32>
    %413 = arith.mulf %388, %412 : vector<1x16xf32>
    %414 = arith.subf %387, %406 : vector<1x16xf32>
    %415 = arith.mulf %414, %413 : vector<1x16xf32>
    %416 = arith.addf %389, %415 : vector<1x16xf32>
    %417 = vector.broadcast %413 : vector<1x16xf32> to vector<64x16xf32>
    %418 = arith.mulf %386, %417 : vector<64x16xf32>
    %419 = vector.broadcast %416 : vector<1x16xf32> to vector<64x16xf32>
    %420 = arith.addf %418, %419 : vector<64x16xf32>
    %421 = arith.addf %382, %420 : vector<64x16xf32>
    %cst_235 = arith.constant 0.000000e+00 : f32
    %422 = vector.broadcast %cst_235 : f32 to vector<64x16xf32>
    %423 = arith.cmpf oge, %421, %422 : vector<64x16xf32>
    %cst_236 = arith.constant 2.000000e-01 : f32
    %424 = vector.broadcast %cst_236 : f32 to vector<64x16xf32>
    %425 = arith.mulf %424, %421 : vector<64x16xf32>
    %426 = arith.select %423, %421, %425 : vector<64x16xi1>, vector<64x16xf32>
    %c1_237 = arith.constant 1 : index
    %c0_238 = arith.constant 0 : index
    %c0_239 = arith.constant 0 : index
    %427 = vector.load %arg8[%c1_237, %c0_238, %c0_239] : memref<2x64x16xf32, #tpu.memory_space<vmem>>, vector<1x64x16xf32>
    %428 = vector.shape_cast %427 : vector<1x64x16xf32> to vector<64x16xf32>
    %429 = vector.shape_cast %426 : vector<64x16xf32> to vector<1x64x16xf32>
    tpu.vector_store %arg8[%c1_237, %c0_238, %c0_239], %429 {strides = array<i32>} : memref<2x64x16xf32, #tpu.memory_space<vmem>>, vector<1x64x16xf32>,
    return
  }
  func.func @transform_0(%arg0: i32) -> (i32, i32, i32) {
    %c0_i32 = arith.constant 0 : i32
    %c0_i32_0 = arith.constant 0 : i32
    %c0_i32_1 = arith.constant 0 : i32
    return %arg0, %c0_i32, %c0_i32_0 : i32, i32, i32
  }
  func.func @transform_1(%arg0: i32) -> (i32, i32, i32) {
    %c0_i32 = arith.constant 0 : i32
    %c0_i32_0 = arith.constant 0 : i32
    %c0_i32_1 = arith.constant 0 : i32
    return %arg0, %c0_i32, %c0_i32_0 : i32, i32, i32
  }
  func.func @transform_2(%arg0: i32) -> (i32, i32) {
    %c0_i32 = arith.constant 0 : i32
    %c0_i32_0 = arith.constant 0 : i32
    %c0_i32_1 = arith.constant 0 : i32
    return %c0_i32, %c0_i32_0 : i32, i32
  }
  func.func @transform_3(%arg0: i32) -> (i32, i32, i32) {
    %c0_i32 = arith.constant 0 : i32
    %c0_i32_0 = arith.constant 0 : i32
    %c0_i32_1 = arith.constant 0 : i32
    %c0_i32_2 = arith.constant 0 : i32
    return %c0_i32, %c0_i32_0, %c0_i32_1 : i32, i32, i32
  }
  func.func @transform_4(%arg0: i32) -> (i32, i32) {
    %c0_i32 = arith.constant 0 : i32
    %c0_i32_0 = arith.constant 0 : i32
    %c0_i32_1 = arith.constant 0 : i32
    return %c0_i32, %c0_i32_0 : i32, i32
  }
  func.func @transform_5(%arg0: i32) -> (i32, i32) {
    %c0_i32 = arith.constant 0 : i32
    %c0_i32_0 = arith.constant 0 : i32
    %c0_i32_1 = arith.constant 0 : i32
    return %c0_i32, %c0_i32_0 : i32, i32
  }
  func.func @transform_6(%arg0: i32) -> (i32, i32) {
    %c0_i32 = arith.constant 0 : i32
    %c0_i32_0 = arith.constant 0 : i32
    %c0_i32_1 = arith.constant 0 : i32
    return %c0_i32, %c0_i32_0 : i32, i32
  }
  func.func @transform_7(%arg0: i32) -> (i32, i32, i32) {
    %c0_i32 = arith.constant 0 : i32
    %c0_i32_0 = arith.constant 0 : i32
    %c0_i32_1 = arith.constant 0 : i32
    return %arg0, %c0_i32, %c0_i32_0 : i32, i32, i32
  }
}

</mosaic_0001>

<llo_original>
// kernel: res_block_forward.1
$region0: #{res_block_forward.1}
  #allocation0 [shape = 'u32[]', space=smem, size = 0x4, offset = 0x4, fixed_abs, tag = 'smem constant byte address 0x4 - core index']
  #allocation1 [shape = 'u32[72,128]{1,0:T(1,128)}', space=vmem, size = 0x9000, scoped, tag = 'internal scratch']
  #allocation2 [shape = 'f32[96,16]{1,0:T(8,128)}', space=vmem, size = 0xc000, scoped, tag = 'scratch operand']
  %s0 = inlined_call_operand.vmem [shape: bf16[2,64,72], index: 0, kind: input, shape index: {}]
  %s1 = inlined_call_operand.vmem [shape: bf16[2,64,8], index: 1, kind: input, shape index: {}]
  %s2 = inlined_call_operand.vmem [shape: bf16[72,16], index: 2, kind: input, shape index: {}]
  %s3 = inlined_call_operand.vmem [shape: bf16[9,16,16], index: 3, kind: input, shape index: {}]
  %s4 = inlined_call_operand.vmem [shape: bf16[8,16], index: 4, kind: input, shape index: {}]
  %s5 = inlined_call_operand.vmem [shape: f32[9,16], index: 5, kind: input, shape index: {}]
  %s6 = inlined_call_operand.vmem [shape: f32[16,16], index: 6, kind: input, shape index: {}]
  %s7 = inlined_call_operand.hbm [shape: f32[2,64,16], index: 7, kind: output, shape index: {}]
  %s8 = sld [smem:[#allocation0]]
  $region38: #{res_block_forward.1} parent=0
    _
  %s10 = ssub.s32 1, %s8
  %s11 = scalar_select 0, %s10, %s8
  $region1: #{res_block_forward.1} parent=0
    #allocation3 [shape = 'u8[65536]{0}', space=vmem, size = 0x10000, scoped, tag = 'output window, operand 0, single buffered']
    #allocation4 [shape = 's32[1]{0}', space=sflag, size = 0x4, scoped, tag = 'scoped memory for res_block_forward.1']
    %12 = vsyncpa [#allocation4], 0
    // Predicated region
    $region2: #{res_block_forward.1} parent=1 // pred_check
      _
    $region3: #{res_block_forward.1} parent=1 // pred_check_branch
      %14 = sbr.rel (0) target = $region5
    $region4: #{res_block_forward.1} parent=1 // pred_region
      _
    $region5: #{res_block_forward.1} parent=1 // pred_fallthru
      _
    // Predicated region
    $region6: #{res_block_forward.1} parent=1 // pred_check
      _
    $region7: #{res_block_forward.1} parent=1 // pred_check_branch
      %16 = sbr.rel (0) target = $region9
    $region8: #{res_block_forward.1} parent=1 // pred_region
      _
    $region9: #{res_block_forward.1} parent=1 // pred_fallthru
      _
    // Predicated region
    $region10: #{res_block_forward.1} parent=1 // pred_check
      _
    $region11: #{res_block_forward.1} parent=1 // pred_check_branch
      %18 = sbr.rel (0) target = $region13
    $region12: #{res_block_forward.1} parent=1 // pred_region
      _
    $region13: #{res_block_forward.1} parent=1 // pred_fallthru
      _
    // Predicated region
    $region14: #{res_block_forward.1} parent=1 // pred_check
      _
    $region15: #{res_block_forward.1} parent=1 // pred_check_branch
      %20 = sbr.rel (0) target = $region17
    $region16: #{res_block_forward.1} parent=1 // pred_region
      _
    $region17: #{res_block_forward.1} parent=1 // pred_fallthru
      _
    // Predicated region
    $region18: #{res_block_forward.1} parent=1 // pred_check
      _
    $region19: #{res_block_forward.1} parent=1 // pred_check_branch
      %22 = sbr.rel (0) target = $region21
    $region20: #{res_block_forward.1} parent=1 // pred_region
      _
    $region21: #{res_block_forward.1} parent=1 // pred_fallthru
      _
    // Predicated region
    $region22: #{res_block_forward.1} parent=1 // pred_check
      _
    $region23: #{res_block_forward.1} parent=1 // pred_check_branch
      %24 = sbr.rel (0) target = $region25
    $region24: #{res_block_forward.1} parent=1 // pred_region
      _
    $region25: #{res_block_forward.1} parent=1 // pred_fallthru
      _
    // Predicated region
    $region26: #{res_block_forward.1} parent=1 // pred_check
      _
    $region27: #{res_block_forward.1} parent=1 // pred_check_branch
      %26 = sbr.rel (0) target = $region29
    $region28: #{res_block_forward.1} parent=1 // pred_region
      _
    $region29: #{res_block_forward.1} parent=1 // pred_fallthru
      _
    %v28 = vld [vmem:[%s6] sm:$0xff]
    %v29 = vld [vmem:[%s6 + $0x8] sm:$0xff]
    %vm30 = vcmask 130048
    %31 = vst.msk [vmem:[#allocation2] sm:$0xff] %vm30, 0.0
    %32 = vst.msk [vmem:[#allocation2 + $0x8] sm:$0xff] %vm30, 0.0
    %33 = vst.msk [vmem:[#allocation2 + $0x50] sm:$0xff] %vm30, 0.0
    %34 = vst.msk [vmem:[#allocation2 + $0x58] sm:$0xff] %vm30, 0.0
    %v35 = vlaneseq
    %v36 = vshrl.u32 %v35, 7
    %v37 = vadd.s32 %v36, 8
    %v38 = vadd.s32 %v36, 16
    %v39 = vadd.s32 %v36, 24
    %v40 = vadd.s32 %v36, 32
    %v41 = vadd.s32 %v36, 40
    %v42 = vadd.s32 %v36, 48
    %v43 = vadd.s32 %v36, 56
    %vm44 = vcmp.lt.s32.totalorder %v36, 0
    %v45 = vsub.s32 0, %v36
    %v46 = vsel %vm44, %v45, %v36
    %v47 = vshrl.u32 %v46, 3
    %v48 = vand.u32 %v46, 7
    %v49 = vsub.s32 0, %v48
    %v50 = vsel %vm44, %v49, %v48
    %vm51 = vcmp.lt.s32.totalorder %v37, 0
    %v52 = vsub.s32 0, %v37
    %v53 = vsel %vm51, %v52, %v37
    %v54 = vshrl.u32 %v53, 3
    %v55 = vand.u32 %v53, 7
    %v56 = vsub.s32 0, %v55
    %v57 = vsel %vm51, %v56, %v55
    %vm58 = vcmp.lt.s32.totalorder %v38, 0
    %v59 = vsub.s32 0, %v38
    %v60 = vsel %vm58, %v59, %v38
    %v61 = vshrl.u32 %v60, 3
    %v62 = vand.u32 %v60, 7
    %v63 = vsub.s32 0, %v62
    %v64 = vsel %vm58, %v63, %v62
    %vm65 = vcmp.lt.s32.totalorder %v39, 0
    %v66 = vsub.s32 0, %v39
    %v67 = vsel %vm65, %v66, %v39
    %v68 = vshrl.u32 %v67, 3
    %v69 = vand.u32 %v67, 7
    %v70 = vsub.s32 0, %v69
    %v71 = vsel %vm65, %v70, %v69
    %vm72 = vcmp.lt.s32.totalorder %v40, 0
    %v73 = vsub.s32 0, %v40
    %v74 = vsel %vm72, %v73, %v40
    %v75 = vshrl.u32 %v74, 3
    %v76 = vand.u32 %v74, 7
    %v77 = vsub.s32 0, %v76
    %v78 = vsel %vm72, %v77, %v76
    %vm79 = vcmp.lt.s32.totalorder %v41, 0
    %v80 = vsub.s32 0, %v41
    %v81 = vsel %vm79, %v80, %v41
    %v82 = vshrl.u32 %v81, 3
    %v83 = vand.u32 %v81, 7
    %v84 = vsub.s32 0, %v83
    %v85 = vsel %vm79, %v84, %v83
    %vm86 = vcmp.lt.s32.totalorder %v42, 0
    %v87 = vsub.s32 0, %v42
    %v88 = vsel %vm86, %v87, %v42
    %v89 = vshrl.u32 %v88, 3
    %v90 = vand.u32 %v88, 7
    %v91 = vsub.s32 0, %v90
    %v92 = vsel %vm86, %v91, %v90
    %vm93 = vcmp.lt.s32.totalorder %v43, 0
    %v94 = vsub.s32 0, %v43
    %v95 = vsel %vm93, %v94, %v43
    %v96 = vshrl.u32 %v95, 3
    %v97 = vand.u32 %v95, 7
    %v98 = vsub.s32 0, %v97
    %v99 = vsel %vm93, %v98, %v97
    %vm100 = vcmp.ne.s32.totalorder %v50, 0
    %vm101 = vcmp.ne.s32.totalorder %v57, 0
    %vm102 = vcmp.ne.s32.totalorder %v64, 0
    %vm103 = vcmp.ne.s32.totalorder %v71, 0
    %vm104 = vcmp.ne.s32.totalorder %v78, 0
    %vm105 = vcmp.ne.s32.totalorder %v85, 0
    %vm106 = vcmp.ne.s32.totalorder %v92, 0
    %vm107 = vcmp.ne.s32.totalorder %v99, 0
    %vm108 = vcmp.lt.s32.totalorder %v50, 0
    %vm109 = vcmp.lt.s32.totalorder %v57, 0
    %vm110 = vcmp.lt.s32.totalorder %v64, 0
    %vm111 = vcmp.lt.s32.totalorder %v71, 0
    %vm112 = vcmp.lt.s32.totalorder %v78, 0
    %vm113 = vcmp.lt.s32.totalorder %v85, 0
    %vm114 = vcmp.lt.s32.totalorder %v92, 0
    %vm115 = vcmp.lt.s32.totalorder %v99, 0
    %vm116 = vmand %vm108, %vm100
    %vm117 = vmand %vm109, %vm101
    %vm118 = vmand %vm110, %vm102
    %vm119 = vmand %vm111, %vm103
    %vm120 = vmand %vm112, %vm104
    %vm121 = vmand %vm113, %vm105
    %vm122 = vmand %vm114, %vm106
    %vm123 = vmand %vm115, %vm107
    %v124 = vadd.s32 %v50, 8
    %v125 = vadd.s32 %v57, 8
    %v126 = vadd.s32 %v64, 8
    %v127 = vadd.s32 %v71, 8
    %v128 = vadd.s32 %v78, 8
    %v129 = vadd.s32 %v85, 8
    %v130 = vadd.s32 %v92, 8
    %v131 = vadd.s32 %v99, 8
    %v132 = vsel %vm116, %v124, %v50
    %v133 = vsel %vm117, %v125, %v57
    %v134 = vsel %vm118, %v126, %v64
    %v135 = vsel %vm119, %v127, %v71
    %v136 = vsel %vm120, %v128, %v78
    %v137 = vsel %vm121, %v129, %v85
    %v138 = vsel %vm122, %v130, %v92
    %v139 = vsel %vm123, %v131, %v99
    %vm140 = vcmp.ge.s32.totalorder %v132, 1
    %vm141 = vcmp.ge.s32.totalorder %v133, 1
    %vm142 = vcmp.ge.s32.totalorder %v134, 1
    %vm143 = vcmp.ge.s32.totalorder %v135, 1
    %vm144 = vcmp.ge.s32.totalorder %v136, 1
    %vm145 = vcmp.ge.s32.totalorder %v137, 1
    %vm146 = vcmp.ge.s32.totalorder %v138, 1
    %vm147 = vcmp.ge.s32.totalorder %v139, 1
    %vm148 = vcmp.le.s32.totalorder %v132, 6
    %vm149 = vcmp.le.s32.totalorder %v133, 6
    %vm150 = vcmp.le.s32.totalorder %v134, 6
    %vm151 = vcmp.le.s32.totalorder %v135, 6
    %vm152 = vcmp.le.s32.totalorder %v136, 6
    %vm153 = vcmp.le.s32.totalorder %v137, 6
    %vm154 = vcmp.le.s32.totalorder %v138, 6
    %vm155 = vcmp.le.s32.totalorder %v139, 6
    %v156 = vld [vmem:[%s0] sm:$0xf]
    %v157 = vld [vmem:[%s0 + $0x4] sm:$0xf]
    %v158 = vld [vmem:[%s0 + $0x8] sm:$0xf]
    %v159 = vld [vmem:[%s0 + $0xc] sm:$0xf]
    %v160 = vld [vmem:[%s0 + $0x10] sm:$0xf]
    %v161 = vld [vmem:[%s0 + $0x14] sm:$0xf]
    %v162 = vld [vmem:[%s0 + $0x18] sm:$0xf]
    %v163 = vld [vmem:[%s0 + $0x1c] sm:$0xf]
    %v164 = vld [vmem:[%s2] sm:$0xf]
    %v165 = vld [vmem:[%s2 + $0x4] sm:$0xf]
    %v166 = vld [vmem:[%s2 + $0x8] sm:$0xf]
    %v167 = vld [vmem:[%s2 + $0xc] sm:$0xf]
    %v168 = vld [vmem:[%s2 + $0x10] sm:$0xf]
    %v169 = vld [vmem:[%s2 + $0x14] sm:$0xf]
    %v170 = vld [vmem:[%s2 + $0x18] sm:$0xf]
    %v171 = vld [vmem:[%s2 + $0x1c] sm:$0xf]
    %v172 = vld [vmem:[%s2 + $0x20] sm:$0xf]
    %v181 = vunpack.c.l.b16 %v156
    %v182 = vunpack.c.l.b16 %v157
    %v183 = vunpack.c.l.b16 %v158
    %v184 = vunpack.c.l.b16 %v159
    %v185 = vunpack.c.l.b16 %v160
    %v186 = vunpack.c.l.b16 %v161
    %v187 = vunpack.c.l.b16 %v162
    %v188 = vunpack.c.l.b16 %v163
    %v189 = vpack.c.b16 %v182, %v181
    %v190 = vpack.c.b16 %v184, %v183
    %v191 = vpack.c.b16 %v186, %v185
    %v192 = vpack.c.b16 %v188, %v187
    %v202 = vunpack.c.l.b16 %v164
    %v203 = vunpack.c.l.b16 %v165
    %v204 = vunpack.c.l.b16 %v166
    %v205 = vunpack.c.l.b16 %v167
    %v206 = vunpack.c.l.b16 %v168
    %v207 = vunpack.c.l.b16 %v169
    %v208 = vunpack.c.l.b16 %v170
    %v209 = vunpack.c.l.b16 %v171
    %v210 = vunpack.c.l.b16 %v172
    %v211 = vpack.c.b16 %v203, %v202
    %v212 = vpack.c.b16 %v205, %v204
    %v213 = vpack.c.b16 %v207, %v206
    %v214 = vpack.c.b16 %v209, %v208
    %v215 = vpack.c.b16 %v210, %v210
    %vm220 = vcmask 588800
    %v222 = vsel %vm220, %v189, 0
    %v225 = vsel %vm220, %v190, 0
    %v228 = vsel %vm220, %v191, 0
    %v231 = vsel %vm220, %v192, 0
    %vm233 = vcmask 1043456
    %v235 = vsel %vm233, %v215, 0
    %237 = vmatpush.bf16.msra.mxu0 0
    %238 = vmatpush.bf16.msra.mxu0 0
    %239 = vmatpush.bf16.msra.mxu0 0
    %240 = vmatpush.bf16.msra.mxu0 %v235
    %241 = vmatpush.bf16.msra.mxu0 %v214
    %242 = vmatpush.bf16.msra.mxu0 %v213
    %243 = vmatpush.bf16.msra.mxu0 %v212
    %244 = vmatpush.bf16.msra.mxu0 %v211
    %245 = vmatmul.bf16.gmra.mxu0 %v222
    %v246 = vpop.f32.mrf.mxu0
    %v247 = vadd.f32 0.0, %v246
    %v248 = vpop.f32.mrf.mxu0
    %v249 = vadd.f32 0.0, %v248
    %250 = vmatmul.bf16.gmra.mxu0 %v225
    %v251 = vpop.f32.mrf.mxu0
    %v252 = vadd.f32 0.0, %v251
    %v253 = vpop.f32.mrf.mxu0
    %v254 = vadd.f32 0.0, %v253
    %255 = vmatmul.bf16.gmra.mxu0 %v228
    %v256 = vpop.f32.mrf.mxu0
    %v257 = vadd.f32 0.0, %v256
    %v258 = vpop.f32.mrf.mxu0
    %v259 = vadd.f32 0.0, %v258
    %260 = vmatmul.bf16.gmra.mxu0 %v231
    %v261 = vpop.f32.mrf.mxu0
    %v262 = vadd.f32 0.0, %v261
    %v263 = vpop.f32.mrf.mxu0
    %v264 = vadd.f32 0.0, %v263
    %265 = vdwg.mxu0
    %v266 = vld [vmem:[%s5] sm:$0x1]
    %v267 = vld [vmem:[%s5 + $0x1] sm:$0x1]
    %v268 = vld [vmem:[%s5 + $0x2] sm:$0x1]
    %v269 = vsel %vm30, %v247, 0.0
    %v270 = vsel %vm30, %v249, 0.0
    %v271 = vadd.f32 %v269, %v270
    %v272 = vsel %vm30, %v252, 0.0
    %v273 = vadd.f32 %v271, %v272
    %v274 = vsel %vm30, %v254, 0.0
    %v275 = vadd.f32 %v273, %v274
    %v276 = vsel %vm30, %v257, 0.0
    %v277 = vadd.f32 %v275, %v276
    %v278 = vsel %vm30, %v259, 0.0
    %v279 = vadd.f32 %v277, %v278
    %v280 = vsel %vm30, %v262, 0.0
    %v281 = vadd.f32 %v279, %v280
    %v282 = vsel %vm30, %v264, 0.0
    %v283 = vadd.f32 %v281, %v282
    %v284 = vrot.slane %v283, 4
    %v285 = vadd.f32 %v283, %v284
    %v286 = vrot.slane %v285, 2
    %v287 = vadd.f32 %v285, %v286
    %v288 = vrot.slane %v287, 1
    %v289 = vadd.f32 %v287, %v288
    %v290 = vmul.f32 %v247, %v247
    %v291 = vmul.f32 %v249, %v249
    %v292 = vmul.f32 %v252, %v252
    %v293 = vmul.f32 %v254, %v254
    %v294 = vmul.f32 %v257, %v257
    %v295 = vmul.f32 %v259, %v259
    %v296 = vmul.f32 %v262, %v262
    %v297 = vmul.f32 %v264, %v264
    %v298 = vsel %vm30, %v290, 0.0
    %v299 = vsel %vm30, %v291, 0.0
    %v300 = vadd.f32 %v298, %v299
    %v301 = vsel %vm30, %v292, 0.0
    %v302 = vadd.f32 %v300, %v301
    %v303 = vsel %vm30, %v293, 0.0
    %v304 = vadd.f32 %v302, %v303
    %v305 = vsel %vm30, %v294, 0.0
    %v306 = vadd.f32 %v304, %v305
    %v307 = vsel %vm30, %v295, 0.0
    %v308 = vadd.f32 %v306, %v307
    %v309 = vsel %vm30, %v296, 0.0
    %v310 = vadd.f32 %v308, %v309
    %v311 = vsel %vm30, %v297, 0.0
    %v312 = vadd.f32 %v310, %v311
    %v313 = vrot.slane %v312, 4
    %v314 = vadd.f32 %v312, %v313
    %v315 = vrot.slane %v314, 2
    %v316 = vadd.f32 %v314, %v315
    %v317 = vrot.slane %v316, 1
    %v318 = vadd.f32 %v316, %v317
    %v319 = vmul.f32 %v266, 64.0
    %v320 = vadd.f32 %v289, %v319
    %v321 = vmul.f32 %v266, 2.0
    %v322 = vmul.f32 %v321, %v289
    %v323 = vadd.f32 %v318, %v322
    %v324 = vmul.f32 %v319, %v266
    %v325 = vadd.f32 %v323, %v324
    %v327 = vsel %vm30, %v320, 0
    %329 = vmatpush.msra.mxu0 0.0
    %330 = vmatpush.msra.mxu0 0.0
    %331 = vmatpush.msra.mxu0 0.0
    %332 = vmatpush.msra.mxu0 0.0
    %333 = vmatpush.msra.mxu0 0.0
    %334 = vmatpush.msra.mxu0 0.0
    %335 = vmatpush.msra.mxu0 0.0
    %336 = vmatpush.msra.mxu0 0.0
    %337 = vmatpush.msra.mxu0 0.0
    %338 = vmatpush.msra.mxu0 0.0
    %339 = vmatpush.msra.mxu0 0.0
    %340 = vmatpush.msra.mxu0 0.0
    %341 = vmatpush.msra.mxu0 0.0
    %342 = vmatpush.msra.mxu0 0.0
    %343 = vmatpush.msra.mxu0 %v29
    %344 = vmatpush.msra.mxu0 %v28
    %345 = vmatmul.f32.gmra.mxu0 %v327
    %v346 = vpop.f32.mrf.mxu0
    %v347 = vadd.f32 0.0, %v346
    %348 = vdwg.mxu0
    %v350 = vsel %vm30, %v325, 0
    %352 = vmatpush.msra.mxu0 0.0
    %353 = vmatpush.msra.mxu0 0.0
    %354 = vmatpush.msra.mxu0 0.0
    %355 = vmatpush.msra.mxu0 0.0
    %356 = vmatpush.msra.mxu0 0.0
    %357 = vmatpush.msra.mxu0 0.0
    %358 = vmatpush.msra.mxu0 0.0
    %359 = vmatpush.msra.mxu0 0.0
    %360 = vmatpush.msra.mxu0 0.0
    %361 = vmatpush.msra.mxu0 0.0
    %362 = vmatpush.msra.mxu0 0.0
    %363 = vmatpush.msra.mxu0 0.0
    %364 = vmatpush.msra.mxu0 0.0
    %365 = vmatpush.msra.mxu0 0.0
    %366 = vmatpush.msra.mxu0 %v29
    %367 = vmatpush.msra.mxu0 %v28
    %368 = vmatmul.f32.gmra.mxu0 %v350
    %v369 = vpop.f32.mrf.mxu0
    %v370 = vadd.f32 0.0, %v369
    %371 = vdwg.mxu0
    %v372 = vmul.f32 %v347, %v347
    %v373 = vsub.f32 %v370, %v372
    %v374 = vadd.f32 %v373, 1e-05
    %v375 = vrsqrt.pop %v374
    %v376 = vmul.f32 %v375, %v374
    %v377 = vmul.f32 %v376, %v375
    %v378 = vmul.f32 0.5, %v377
    %v379 = vsub.f32 1.5, %v378
    %v380 = vmul.f32 %v375, %v379
    %vm381 = vweird.f32 %v374
    %vm382 = vweird.f32 %v375
    %vm383 = vmor %vm381, %vm382
    %v384 = vsel %vm383, %v375, %v380
    %v385 = vmul.f32 %v267, %v384
    %v386 = vsub.f32 %v266, %v347
    %v387 = vmul.f32 %v386, %v385
    %v388 = vadd.f32 %v268, %v387
    %v389 = vperm.slane %v385, 0
    %v390 = vmul.f32 %v247, %v389
    %v391 = vmul.f32 %v249, %v389
    %v392 = vmul.f32 %v252, %v389
    %v393 = vmul.f32 %v254, %v389
    %v394 = vmul.f32 %v257, %v389
    %v395 = vmul.f32 %v259, %v389
    %v396 = vmul.f32 %v262, %v389
    %v397 = vmul.f32 %v264, %v389
    %v398 = vperm.slane %v388, 0
    %v399 = vadd.f32 %v390, %v398
    %v400 = vadd.f32 %v391, %v398
    %v401 = vadd.f32 %v392, %v398
    %v402 = vadd.f32 %v393, %v398
    %v403 = vadd.f32 %v394, %v398
    %v404 = vadd.f32 %v395, %v398
    %v405 = vadd.f32 %v396, %v398
    %v406 = vadd.f32 %v397, %v398
    %vm407 = vcmp.ge.f32.partialorder %v399, 0.0
    %vm408 = vcmp.ge.f32.partialorder %v400, 0.0
    %vm409 = vcmp.ge.f32.partialorder %v401, 0.0
    %vm410 = vcmp.ge.f32.partialorder %v402, 0.0
    %vm411 = vcmp.ge.f32.partialorder %v403, 0.0
    %vm412 = vcmp.ge.f32.partialorder %v404, 0.0
    %vm413 = vcmp.ge.f32.partialorder %v405, 0.0
    %vm414 = vcmp.ge.f32.partialorder %v406, 0.0
    %v415 = vmul.f32 %v399, 0.2
    %v416 = vmul.f32 %v400, 0.2
    %v417 = vmul.f32 %v401, 0.2
    %v418 = vmul.f32 %v402, 0.2
    %v419 = vmul.f32 %v403, 0.2
    %v420 = vmul.f32 %v404, 0.2
    %v421 = vmul.f32 %v405, 0.2
    %v422 = vmul.f32 %v406, 0.2
    %v423 = vsel %vm407, %v399, %v415
    %v424 = vsel %vm408, %v400, %v416
    %v425 = vsel %vm409, %v401, %v417
    %v426 = vsel %vm410, %v402, %v418
    %v427 = vsel %vm411, %v403, %v419
    %v428 = vsel %vm412, %v404, %v420
    %v429 = vsel %vm413, %v405, %v421
    %v430 = vsel %vm414, %v406, %v422
    %431 = vst.msk [vmem:[#allocation2 + $0x10] sm:$0xff] %vm30, %v423
    %432 = vst.msk [vmem:[#allocation2 + $0x18] sm:$0xff] %vm30, %v424
    %433 = vst.msk [vmem:[#allocation2 + $0x20] sm:$0xff] %vm30, %v425
    %434 = vst.msk [vmem:[#allocation2 + $0x28] sm:$0xff] %vm30, %v426
    %435 = vst.msk [vmem:[#allocation2 + $0x30] sm:$0xff] %vm30, %v427
    %436 = vst.msk [vmem:[#allocation2 + $0x38] sm:$0xff] %vm30, %v428
    %437 = vst.msk [vmem:[#allocation2 + $0x40] sm:$0xff] %vm30, %v429
    %438 = vst.msk [vmem:[#allocation2 + $0x48] sm:$0xff] %vm30, %v430
    %v439 = vld [vmem:[#allocation2 + $0x7] sm:$0xff]
    %v440 = vld [vmem:[#allocation2 + $0xf] sm:$0xff]
    %v441 = vld [vmem:[#allocation2 + $0x17] sm:$0xff]
    %v442 = vld [vmem:[#allocation2 + $0x1f] sm:$0xff]
    %v443 = vld [vmem:[#allocation2 + $0x27] sm:$0xff]
    %v444 = vld [vmem:[#allocation2 + $0x2f] sm:$0xff]
    %v445 = vld [vmem:[#allocation2 + $0x37] sm:$0xff]
    %v446 = vld [vmem:[#allocation2 + $0x3f] sm:$0xff]
    %v447 = vsel %vm140, 1, 0
    %v448 = vsel %vm141, 1, 0
    %v449 = vsel %vm142, 1, 0
    %v450 = vsel %vm143, 1, 0
    %v451 = vsel %vm144, 1, 0
    %v452 = vsel %vm145, 1, 0
    %v453 = vsel %vm146, 1, 0
    %v454 = vsel %vm147, 1, 0
    %vm455 = vcmp.eq.s32.totalorder %v447, 1
    %vm456 = vcmp.eq.s32.totalorder %v448, 1
    %vm457 = vcmp.eq.s32.totalorder %v449, 1
    %vm458 = vcmp.eq.s32.totalorder %v450, 1
    %vm459 = vcmp.eq.s32.totalorder %v451, 1
    %vm460 = vcmp.eq.s32.totalorder %v452, 1
    %vm461 = vcmp.eq.s32.totalorder %v453, 1
    %vm462 = vcmp.eq.s32.totalorder %v454, 1
    %v463 = vsel %vm455, %v439, 0.0
    %v464 = vsel %vm456, %v440, 0.0
    %v465 = vsel %vm457, %v441, 0.0
    %v466 = vsel %vm458, %v442, 0.0
    %v467 = vsel %vm459, %v443, 0.0
    %v468 = vsel %vm460, %v444, 0.0
    %v469 = vsel %vm461, %v445, 0.0
    %v470 = vsel %vm462, %v446, 0.0
    %v471 = vpack.c.bf16 %v464, %v463
    %v472 = vpack.c.bf16 %v466, %v465
    %v473 = vpack.c.bf16 %v468, %v467
    %v474 = vpack.c.bf16 %v470, %v469
    %v475 = vld [vmem:[%s3] sm:$0xf]
    %v476 = vld [vmem:[%s3 + $0x4] sm:$0xf]
    %v477 = vld [vmem:[#allocation2 + $0x8] sm:$0xff]
    %v478 = vld [vmem:[#allocation2 + $0x10] sm:$0xff]
    %v479 = vld [vmem:[#allocation2 + $0x18] sm:$0xff]
    %v480 = vld [vmem:[#allocation2 + $0x20] sm:$0xff]
    %v481 = vld [vmem:[#allocation2 + $0x28] sm:$0xff]
    %v482 = vld [vmem:[#allocation2 + $0x30] sm:$0xff]
    %v483 = vld [vmem:[#allocation2 + $0x38] sm:$0xff]
    %v484 = vld [vmem:[#allocation2 + $0x40] sm:$0xff]
    %v485 = vpack.c.bf16 %v478, %v477
    %v486 = vpack.c.bf16 %v480, %v479
    %v487 = vpack.c.bf16 %v482, %v481
    %v488 = vpack.c.bf16 %v484, %v483
    %s489 = scalar_lea.vmem %s3, 8
    %v490 = vld [vmem:[%s489] sm:$0xf]
    %v491 = vld [vmem:[%s489 + $0x4] sm:$0xf]
    %v494 = vunpack.c.l.b16 %v490
    %v495 = vunpack.c.l.b16 %v491
    %v496 = vpack.c.b16 %v495, %v494
    %v499 = vsel %vm30, %v485, 0
    %v502 = vsel %vm30, %v486, 0
    %v505 = vsel %vm30, %v487, 0
    %v508 = vsel %vm30, %v488, 0
    %510 = vmatpush.bf16.msra.mxu0 0
    %511 = vmatpush.bf16.msra.mxu0 0
    %512 = vmatpush.bf16.msra.mxu0 0
    %513 = vmatpush.bf16.msra.mxu0 0
    %514 = vmatpush.bf16.msra.mxu0 0
    %515 = vmatpush.bf16.msra.mxu0 0
    %516 = vmatpush.bf16.msra.mxu0 0
    %517 = vmatpush.bf16.msra.mxu0 %v496
    %518 = vmatmul.bf16.gmra.mxu0 %v499
    %v519 = vpop.f32.mrf.mxu0
    %v520 = vadd.f32 0.0, %v519
    %v521 = vpop.f32.mrf.mxu0
    %v522 = vadd.f32 0.0, %v521
    %523 = vmatmul.bf16.gmra.mxu0 %v502
    %v524 = vpop.f32.mrf.mxu0
    %v525 = vadd.f32 0.0, %v524
    %v526 = vpop.f32.mrf.mxu0
    %v527 = vadd.f32 0.0, %v526
    %528 = vmatmul.bf16.gmra.mxu0 %v505
    %v529 = vpop.f32.mrf.mxu0
    %v530 = vadd.f32 0.0, %v529
    %v531 = vpop.f32.mrf.mxu0
    %v532 = vadd.f32 0.0, %v531
    %533 = vmatmul.bf16.gmra.mxu0 %v508
    %v534 = vpop.f32.mrf.mxu0
    %v535 = vadd.f32 0.0, %v534
    %v536 = vpop.f32.mrf.mxu0
    %v537 = vadd.f32 0.0, %v536
    %538 = vdwg.mxu0
    %v541 = vunpack.c.l.b16 %v475
    %v542 = vunpack.c.l.b16 %v476
    %v543 = vpack.c.b16 %v542, %v541
    %v546 = vsel %vm30, %v471, 0
    %v549 = vsel %vm30, %v472, 0
    %v552 = vsel %vm30, %v473, 0
    %v555 = vsel %vm30, %v474, 0
    %557 = vmatpush.bf16.msra.mxu0 0
    %558 = vmatpush.bf16.msra.mxu0 0
    %559 = vmatpush.bf16.msra.mxu0 0
    %560 = vmatpush.bf16.msra.mxu0 0
    %561 = vmatpush.bf16.msra.mxu0 0
    %562 = vmatpush.bf16.msra.mxu0 0
    %563 = vmatpush.bf16.msra.mxu0 0
    %564 = vmatpush.bf16.msra.mxu0 %v543
    %565 = vmatmul.bf16.gmra.mxu0 %v546
    %v566 = vpop.f32.mrf.mxu0
    %v567 = vadd.f32 %v520, %v566
    %v568 = vpop.f32.mrf.mxu0
    %v569 = vadd.f32 %v522, %v568
    %570 = vmatmul.bf16.gmra.mxu0 %v549
    %v571 = vpop.f32.mrf.mxu0
    %v572 = vadd.f32 %v525, %v571
    %v573 = vpop.f32.mrf.mxu0
    %v574 = vadd.f32 %v527, %v573
    %575 = vmatmul.bf16.gmra.mxu0 %v552
    %v576 = vpop.f32.mrf.mxu0
    %v577 = vadd.f32 %v530, %v576
    %v578 = vpop.f32.mrf.mxu0
    %v579 = vadd.f32 %v532, %v578
    %580 = vmatmul.bf16.gmra.mxu0 %v555
    %v581 = vpop.f32.mrf.mxu0
    %v582 = vadd.f32 %v535, %v581
    %v583 = vpop.f32.mrf.mxu0
    %v584 = vadd.f32 %v537, %v583
    %585 = vdwg.mxu0
    %v586 = vld [vmem:[#allocation2 + $0x9] sm:$0xff]
    %v587 = vld [vmem:[#allocation2 + $0x11] sm:$0xff]
    %v588 = vld [vmem:[#allocation2 + $0x19] sm:$0xff]
    %v589 = vld [vmem:[#allocation2 + $0x21] sm:$0xff]
    %v590 = vld [vmem:[#allocation2 + $0x29] sm:$0xff]
    %v591 = vld [vmem:[#allocation2 + $0x31] sm:$0xff]
    %v592 = vld [vmem:[#allocation2 + $0x39] sm:$0xff]
    %v593 = vld [vmem:[#allocation2 + $0x41] sm:$0xff]
    %v594 = vsel %vm148, 1, 0
    %v595 = vsel %vm149, 1, 0
    %v596 = vsel %vm150, 1, 0
    %v597 = vsel %vm151, 1, 0
    %v598 = vsel %vm152, 1, 0
    %v599 = vsel %vm153, 1, 0
    %v600 = vsel %vm154, 1, 0
    %v601 = vsel %vm155, 1, 0
    %vm602 = vcmp.eq.s32.totalorder %v594, 1
    %vm603 = vcmp.eq.s32.totalorder %v595, 1
    %vm604 = vcmp.eq.s32.totalorder %v596, 1
    %vm605 = vcmp.eq.s32.totalorder %v597, 1
    %vm606 = vcmp.eq.s32.totalorder %v598, 1
    %vm607 = vcmp.eq.s32.totalorder %v599, 1
    %vm608 = vcmp.eq.s32.totalorder %v600, 1
    %vm609 = vcmp.eq.s32.totalorder %v601, 1
    %v610 = vsel %vm602, %v586, 0.0
    %v611 = vsel %vm603, %v587, 0.0
    %v612 = vsel %vm604, %v588, 0.0
    %v613 = vsel %vm605, %v589, 0.0
    %v614 = vsel %vm606, %v590, 0.0
    %v615 = vsel %vm607, %v591, 0.0
    %v616 = vsel %vm608, %v592, 0.0
    %v617 = vsel %vm609, %v593, 0.0
    %v618 = vpack.c.bf16 %v611, %v610
    %v619 = vpack.c.bf16 %v613, %v612
    %v620 = vpack.c.bf16 %v615, %v614
    %v621 = vpack.c.bf16 %v617, %v616
    %s622 = scalar_lea.vmem %s3, 16
    %v623 = vld [vmem:[%s622] sm:$0xf]
    %v624 = vld [vmem:[%s622 + $0x4] sm:$0xf]
    %v627 = vunpack.c.l.b16 %v623
    %v628 = vunpack.c.l.b16 %v624
    %v629 = vpack.c.b16 %v628, %v627
    %v632 = vsel %vm30, %v618, 0
    %v635 = vsel %vm30, %v619, 0
    %v638 = vsel %vm30, %v620, 0
    %v641 = vsel %vm30, %v621, 0
    %643 = vmatpush.bf16.msra.mxu0 0
    %644 = vmatpush.bf16.msra.mxu0 0
    %645 = vmatpush.bf16.msra.mxu0 0
    %646 = vmatpush.bf16.msra.mxu0 0
    %647 = vmatpush.bf16.msra.mxu0 0
    %648 = vmatpush.bf16.msra.mxu0 0
    %649 = vmatpush.bf16.msra.mxu0 0
    %650 = vmatpush.bf16.msra.mxu0 %v629
    %651 = vmatmul.bf16.gmra.mxu0 %v632
    %v652 = vpop.f32.mrf.mxu0
    %v653 = vadd.f32 0.0, %v652
    %v654 = vpop.f32.mrf.mxu0
    %v655 = vadd.f32 0.0, %v654
    %656 = vmatmul.bf16.gmra.mxu0 %v635
    %v657 = vpop.f32.mrf.mxu0
    %v658 = vadd.f32 0.0, %v657
    %v659 = vpop.f32.mrf.mxu0
    %v660 = vadd.f32 0.0, %v659
    %661 = vmatmul.bf16.gmra.mxu0 %v638
    %v662 = vpop.f32.mrf.mxu0
    %v663 = vadd.f32 0.0, %v662
    %v664 = vpop.f32.mrf.mxu0
    %v665 = vadd.f32 0.0, %v664
    %666 = vmatmul.bf16.gmra.mxu0 %v641
    %v667 = vpop.f32.mrf.mxu0
    %v668 = vadd.f32 0.0, %v667
    %v669 = vpop.f32.mrf.mxu0
    %v670 = vadd.f32 0.0, %v669
    %671 = vdwg.mxu0
    %v672 = vadd.f32 %v567, %v653
    %v673 = vadd.f32 %v569, %v655
    %v674 = vadd.f32 %v572, %v658
    %v675 = vadd.f32 %v574, %v660
    %v676 = vadd.f32 %v577, %v663
    %v677 = vadd.f32 %v579, %v665
    %v678 = vadd.f32 %v582, %v668
    %v679 = vadd.f32 %v584, %v670
    %v680 = vld [vmem:[#allocation2 + $0xf] sm:$0xff]
    %v681 = vld [vmem:[#allocation2 + $0x17] sm:$0xff]
    %v682 = vld [vmem:[#allocation2 + $0x1f] sm:$0xff]
    %v683 = vld [vmem:[#allocation2 + $0x27] sm:$0xff]
    %v684 = vld [vmem:[#allocation2 + $0x2f] sm:$0xff]
    %v685 = vld [vmem:[#allocation2 + $0x37] sm:$0xff]
    %v686 = vld [vmem:[#allocation2 + $0x3f] sm:$0xff]
    %v687 = vld [vmem:[#allocation2 + $0x47] sm:$0xff]
    %v688 = vsel %vm455, %v680, 0.0
    %v689 = vsel %vm456, %v681, 0.0
    %v690 = vsel %vm457, %v682, 0.0
    %v691 = vsel %vm458, %v683, 0.0
    %v692 = vsel %vm459, %v684, 0.0
    %v693 = vsel %vm460, %v685, 0.0
    %v694 = vsel %vm461, %v686, 0.0
    %v695 = vsel %vm462, %v687, 0.0
    %v696 = vpack.c.bf16 %v689, %v688
    %v697 = vpack.c.bf16 %v691, %v690
    %v698 = vpack.c.bf16 %v693, %v692
    %v699 = vpack.c.bf16 %v695, %v694
    %s700 = scalar_lea.vmem %s3, 24
    %v701 = vld [vmem:[%s700] sm:$0xf]
    %v702 = vld [vmem:[%s700 + $0x4] sm:$0xf]
    %v705 = vunpack.c.l.b16 %v701
    %v706 = vunpack.c.l.b16 %v702
    %v707 = vpack.c.b16 %v706, %v705
    %v710 = vsel %vm30, %v696, 0
    %v713 = vsel %vm30, %v697, 0
    %v716 = vsel %vm30, %v698, 0
    %v719 = vsel %vm30, %v699, 0
    %721 = vmatpush.bf16.msra.mxu0 0
    %722 = vmatpush.bf16.msra.mxu0 0
    %723 = vmatpush.bf16.msra.mxu0 0
    %724 = vmatpush.bf16.msra.mxu0 0
    %725 = vmatpush.bf16.msra.mxu0 0
    %726 = vmatpush.bf16.msra.mxu0 0
    %727 = vmatpush.bf16.msra.mxu0 0
    %728 = vmatpush.bf16.msra.mxu0 %v707
    %729 = vmatmul.bf16.gmra.mxu0 %v710
    %v730 = vpop.f32.mrf.mxu0
    %v731 = vadd.f32 0.0, %v730
    %v732 = vpop.f32.mrf.mxu0
    %v733 = vadd.f32 0.0, %v732
    %734 = vmatmul.bf16.gmra.mxu0 %v713
    %v735 = vpop.f32.mrf.mxu0
    %v736 = vadd.f32 0.0, %v735
    %v737 = vpop.f32.mrf.mxu0
    %v738 = vadd.f32 0.0, %v737
    %739 = vmatmul.bf16.gmra.mxu0 %v716
    %v740 = vpop.f32.mrf.mxu0
    %v741 = vadd.f32 0.0, %v740
    %v742 = vpop.f32.mrf.mxu0
    %v743 = vadd.f32 0.0, %v742
    %744 = vmatmul.bf16.gmra.mxu0 %v719
    %v745 = vpop.f32.mrf.mxu0
    %v746 = vadd.f32 0.0, %v745
    %v747 = vpop.f32.mrf.mxu0
    %v748 = vadd.f32 0.0, %v747
    %749 = vdwg.mxu0
    %v750 = vadd.f32 %v672, %v731
    %v751 = vadd.f32 %v673, %v733
    %v752 = vadd.f32 %v674, %v736
    %v753 = vadd.f32 %v675, %v738
    %v754 = vadd.f32 %v676, %v741
    %v755 = vadd.f32 %v677, %v743
    %v756 = vadd.f32 %v678, %v746
    %v757 = vadd.f32 %v679, %v748
    %v758 = vld [vmem:[#allocation2 + $0x10] sm:$0xff]
    %v759 = vld [vmem:[#allocation2 + $0x18] sm:$0xff]
    %v760 = vld [vmem:[#allocation2 + $0x20] sm:$0xff]
    %v761 = vld [vmem:[#allocation2 + $0x28] sm:$0xff]
    %v762 = vld [vmem:[#allocation2 + $0x30] sm:$0xff]
    %v763 = vld [vmem:[#allocation2 + $0x38] sm:$0xff]
    %v764 = vld [vmem:[#allocation2 + $0x40] sm:$0xff]
    %v765 = vld [vmem:[#allocation2 + $0x48] sm:$0xff]
    %v766 = vpack.c.bf16 %v759, %v758
    %v767 = vpack.c.bf16 %v761, %v760
    %v768 = vpack.c.bf16 %v763, %v762
    %v769 = vpack.c.bf16 %v765, %v764
    %s770 = scalar_lea.vmem %s3, 32
    %v771 = vld [vmem:[%s770] sm:$0xf]
    %v772 = vld [vmem:[%s770 + $0x4] sm:$0xf]
    %v775 = vunpack.c.l.b16 %v771
    %v776 = vunpack.c.l.b16 %v772
    %v777 = vpack.c.b16 %v776, %v775
    %v780 = vsel %vm30, %v766, 0
    %v783 = vsel %vm30, %v767, 0
    %v786 = vsel %vm30, %v768, 0
    %v789 = vsel %vm30, %v769, 0
    %791 = vmatpush.bf16.msra.mxu0 0
    %792 = vmatpush.bf16.msra.mxu0 0
    %793 = vmatpush.bf16.msra.mxu0 0
    %794 = vmatpush.bf16.msra.mxu0 0
    %795 = vmatpush.bf16.msra.mxu0 0
    %796 = vmatpush.bf16.msra.mxu0 0
    %797 = vmatpush.bf16.msra.mxu0 0
    %798 = vmatpush.bf16.msra.mxu0 %v777
    %799 = vmatmul.bf16.gmra.mxu0 %v780
    %v800 = vpop.f32.mrf.mxu0
    %v801 = vadd.f32 0.0, %v800
    %v802 = vpop.f32.mrf.mxu0
    %v803 = vadd.f32 0.0, %v802
    %804 = vmatmul.bf16.gmra.mxu0 %v783
    %v805 = vpop.f32.mrf.mxu0
    %v806 = vadd.f32 0.0, %v805
    %v807 = vpop.f32.mrf.mxu0
    %v808 = vadd.f32 0.0, %v807
    %809 = vmatmul.bf16.gmra.mxu0 %v786
    %v810 = vpop.f32.mrf.mxu0
    %v811 = vadd.f32 0.0, %v810
    %v812 = vpop.f32.mrf.mxu0
    %v813 = vadd.f32 0.0, %v812
    %814 = vmatmul.bf16.gmra.mxu0 %v789
    %v815 = vpop.f32.mrf.mxu0
    %v816 = vadd.f32 0.0, %v815
    %v817 = vpop.f32.mrf.mxu0
    %v818 = vadd.f32 0.0, %v817
    %819 = vdwg.mxu0
    %v820 = vadd.f32 %v750, %v801
    %v821 = vadd.f32 %v751, %v803
    %v822 = vadd.f32 %v752, %v806
    %v823 = vadd.f32 %v753, %v808
    %v824 = vadd.f32 %v754, %v811
    %v825 = vadd.f32 %v755, %v813
    %v826 = vadd.f32 %v756, %v816
    %v827 = vadd.f32 %v757, %v818
    %v828 = vld [vmem:[#allocation2 + $0x11] sm:$0xff]
    %v829 = vld [vmem:[#allocation2 + $0x19] sm:$0xff]
    %v830 = vld [vmem:[#allocation2 + $0x21] sm:$0xff]
    %v831 = vld [vmem:[#allocation2 + $0x29] sm:$0xff]
    %v832 = vld [vmem:[#allocation2 + $0x31] sm:$0xff]
    %v833 = vld [vmem:[#allocation2 + $0x39] sm:$0xff]
    %v834 = vld [vmem:[#allocation2 + $0x41] sm:$0xff]
    %v835 = vld [vmem:[#allocation2 + $0x49] sm:$0xff]
    %v836 = vsel %vm602, %v828, 0.0
    %v837 = vsel %vm603, %v829, 0.0
    %v838 = vsel %vm604, %v830, 0.0
    %v839 = vsel %vm605, %v831, 0.0
    %v840 = vsel %vm606, %v832, 0.0
    %v841 = vsel %vm607, %v833, 0.0
    %v842 = vsel %vm608, %v834, 0.0
    %v843 = vsel %vm609, %v835, 0.0
    %v844 = vpack.c.bf16 %v837, %v836
    %v845 = vpack.c.bf16 %v839, %v838
    %v846 = vpack.c.bf16 %v841, %v840
    %v847 = vpack.c.bf16 %v843, %v842
    %s848 = scalar_lea.vmem %s3, 40
    %v849 = vld [vmem:[%s848] sm:$0xf]
    %v850 = vld [vmem:[%s848 + $0x4] sm:$0xf]
    %v853 = vunpack.c.l.b16 %v849
    %v854 = vunpack.c.l.b16 %v850
    %v855 = vpack.c.b16 %v854, %v853
    %v858 = vsel %vm30, %v844, 0
    %v861 = vsel %vm30, %v845, 0
    %v864 = vsel %vm30, %v846, 0
    %v867 = vsel %vm30, %v847, 0
    %869 = vmatpush.bf16.msra.mxu0 0
    %870 = vmatpush.bf16.msra.mxu0 0
    %871 = vmatpush.bf16.msra.mxu0 0
    %872 = vmatpush.bf16.msra.mxu0 0
    %873 = vmatpush.bf16.msra.mxu0 0
    %874 = vmatpush.bf16.msra.mxu0 0
    %875 = vmatpush.bf16.msra.mxu0 0
    %876 = vmatpush.bf16.msra.mxu0 %v855
    %877 = vmatmul.bf16.gmra.mxu0 %v858
    %v878 = vpop.f32.mrf.mxu0
    %v879 = vadd.f32 0.0, %v878
    %v880 = vpop.f32.mrf.mxu0
    %v881 = vadd.f32 0.0, %v880
    %882 = vmatmul.bf16.gmra.mxu0 %v861
    %v883 = vpop.f32.mrf.mxu0
    %v884 = vadd.f32 0.0, %v883
    %v885 = vpop.f32.mrf.mxu0
    %v886 = vadd.f32 0.0, %v885
    %887 = vmatmul.bf16.gmra.mxu0 %v864
    %v888 = vpop.f32.mrf.mxu0
    %v889 = vadd.f32 0.0, %v888
    %v890 = vpop.f32.mrf.mxu0
    %v891 = vadd.f32 0.0, %v890
    %892 = vmatmul.bf16.gmra.mxu0 %v867
    %v893 = vpop.f32.mrf.mxu0
    %v894 = vadd.f32 0.0, %v893
    %v895 = vpop.f32.mrf.mxu0
    %v896 = vadd.f32 0.0, %v895
    %897 = vdwg.mxu0
    %v898 = vadd.f32 %v820, %v879
    %v899 = vadd.f32 %v821, %v881
    %v900 = vadd.f32 %v822, %v884
    %v901 = vadd.f32 %v823, %v886
    %v902 = vadd.f32 %v824, %v889
    %v903 = vadd.f32 %v825, %v891
    %v904 = vadd.f32 %v826, %v894
    %v905 = vadd.f32 %v827, %v896
    %v906 = vld [vmem:[#allocation2 + $0x17] sm:$0xff]
    %v907 = vld [vmem:[#allocation2 + $0x1f] sm:$0xff]
    %v908 = vld [vmem:[#allocation2 + $0x27] sm:$0xff]
    %v909 = vld [vmem:[#allocation2 + $0x2f] sm:$0xff]
    %v910 = vld [vmem:[#allocation2 + $0x37] sm:$0xff]
    %v911 = vld [vmem:[#allocation2 + $0x3f] sm:$0xff]
    %v912 = vld [vmem:[#allocation2 + $0x47] sm:$0xff]
    %v913 = vld [vmem:[#allocation2 + $0x4f] sm:$0xff]
    %v914 = vsel %vm455, %v906, 0.0
    %v915 = vsel %vm456, %v907, 0.0
    %v916 = vsel %vm457, %v908, 0.0
    %v917 = vsel %vm458, %v909, 0.0
    %v918 = vsel %vm459, %v910, 0.0
    %v919 = vsel %vm460, %v911, 0.0
    %v920 = vsel %vm461, %v912, 0.0
    %v921 = vsel %vm462, %v913, 0.0
    %v922 = vpack.c.bf16 %v915, %v914
    %v923 = vpack.c.bf16 %v917, %v916
    %v924 = vpack.c.bf16 %v919, %v918
    %v925 = vpack.c.bf16 %v921, %v920
    %s926 = scalar_lea.vmem %s3, 48
    %v927 = vld [vmem:[%s926] sm:$0xf]
    %v928 = vld [vmem:[%s926 + $0x4] sm:$0xf]
    %v931 = vunpack.c.l.b16 %v927
    %v932 = vunpack.c.l.b16 %v928
    %v933 = vpack.c.b16 %v932, %v931
    %v936 = vsel %vm30, %v922, 0
    %v939 = vsel %vm30, %v923, 0
    %v942 = vsel %vm30, %v924, 0
    %v945 = vsel %vm30, %v925, 0
    %947 = vmatpush.bf16.msra.mxu0 0
    %948 = vmatpush.bf16.msra.mxu0 0
    %949 = vmatpush.bf16.msra.mxu0 0
    %950 = vmatpush.bf16.msra.mxu0 0
    %951 = vmatpush.bf16.msra.mxu0 0
    %952 = vmatpush.bf16.msra.mxu0 0
    %953 = vmatpush.bf16.msra.mxu0 0
    %954 = vmatpush.bf16.msra.mxu0 %v933
    %955 = vmatmul.bf16.gmra.mxu0 %v936
    %v956 = vpop.f32.mrf.mxu0
    %v957 = vadd.f32 0.0, %v956
    %v958 = vpop.f32.mrf.mxu0
    %v959 = vadd.f32 0.0, %v958
    %960 = vmatmul.bf16.gmra.mxu0 %v939
    %v961 = vpop.f32.mrf.mxu0
    %v962 = vadd.f32 0.0, %v961
    %v963 = vpop.f32.mrf.mxu0
    %v964 = vadd.f32 0.0, %v963
    %965 = vmatmul.bf16.gmra.mxu0 %v942
    %v966 = vpop.f32.mrf.mxu0
    %v967 = vadd.f32 0.0, %v966
    %v968 = vpop.f32.mrf.mxu0
    %v969 = vadd.f32 0.0, %v968
    %970 = vmatmul.bf16.gmra.mxu0 %v945
    %v971 = vpop.f32.mrf.mxu0
    %v972 = vadd.f32 0.0, %v971
    %v973 = vpop.f32.mrf.mxu0
    %v974 = vadd.f32 0.0, %v973
    %975 = vdwg.mxu0
    %v976 = vadd.f32 %v898, %v957
    %v977 = vadd.f32 %v899, %v959
    %v978 = vadd.f32 %v900, %v962
    %v979 = vadd.f32 %v901, %v964
    %v980 = vadd.f32 %v902, %v967
    %v981 = vadd.f32 %v903, %v969
    %v982 = vadd.f32 %v904, %v972
    %v983 = vadd.f32 %v905, %v974
    %v984 = vld [vmem:[#allocation2 + $0x18] sm:$0xff]
    %v985 = vld [vmem:[#allocation2 + $0x20] sm:$0xff]
    %v986 = vld [vmem:[#allocation2 + $0x28] sm:$0xff]
    %v987 = vld [vmem:[#allocation2 + $0x30] sm:$0xff]
    %v988 = vld [vmem:[#allocation2 + $0x38] sm:$0xff]
    %v989 = vld [vmem:[#allocation2 + $0x40] sm:$0xff]
    %v990 = vld [vmem:[#allocation2 + $0x48] sm:$0xff]
    %v991 = vld [vmem:[#allocation2 + $0x50] sm:$0xff]
    %v992 = vpack.c.bf16 %v985, %v984
    %v993 = vpack.c.bf16 %v987, %v986
    %v994 = vpack.c.bf16 %v989, %v988
    %v995 = vpack.c.bf16 %v991, %v990
    %s996 = scalar_lea.vmem %s3, 56
    %v997 = vld [vmem:[%s996] sm:$0xf]
    %v998 = vld [vmem:[%s996 + $0x4] sm:$0xf]
    %v1001 = vunpack.c.l.b16 %v997
    %v1002 = vunpack.c.l.b16 %v998
    %v1003 = vpack.c.b16 %v1002, %v1001
    %v1006 = vsel %vm30, %v992, 0
    %v1009 = vsel %vm30, %v993, 0
    %v1012 = vsel %vm30, %v994, 0
    %v1015 = vsel %vm30, %v995, 0
    %1017 = vmatpush.bf16.msra.mxu0 0
    %1018 = vmatpush.bf16.msra.mxu0 0
    %1019 = vmatpush.bf16.msra.mxu0 0
    %1020 = vmatpush.bf16.msra.mxu0 0
    %1021 = vmatpush.bf16.msra.mxu0 0
    %1022 = vmatpush.bf16.msra.mxu0 0
    %1023 = vmatpush.bf16.msra.mxu0 0
    %1024 = vmatpush.bf16.msra.mxu0 %v1003
    %1025 = vmatmul.bf16.gmra.mxu0 %v1006
    %v1026 = vpop.f32.mrf.mxu0
    %v1027 = vadd.f32 0.0, %v1026
    %v1028 = vpop.f32.mrf.mxu0
    %v1029 = vadd.f32 0.0, %v1028
    %1030 = vmatmul.bf16.gmra.mxu0 %v1009
    %v1031 = vpop.f32.mrf.mxu0
    %v1032 = vadd.f32 0.0, %v1031
    %v1033 = vpop.f32.mrf.mxu0
    %v1034 = vadd.f32 0.0, %v1033
    %1035 = vmatmul.bf16.gmra.mxu0 %v1012
    %v1036 = vpop.f32.mrf.mxu0
    %v1037 = vadd.f32 0.0, %v1036
    %v1038 = vpop.f32.mrf.mxu0
    %v1039 = vadd.f32 0.0, %v1038
    %1040 = vmatmul.bf16.gmra.mxu0 %v1015
    %v1041 = vpop.f32.mrf.mxu0
    %v1042 = vadd.f32 0.0, %v1041
    %v1043 = vpop.f32.mrf.mxu0
    %v1044 = vadd.f32 0.0, %v1043
    %1045 = vdwg.mxu0
    %v1046 = vadd.f32 %v976, %v1027
    %v1047 = vadd.f32 %v977, %v1029
    %v1048 = vadd.f32 %v978, %v1032
    %v1049 = vadd.f32 %v979, %v1034
    %v1050 = vadd.f32 %v980, %v1037
    %v1051 = vadd.f32 %v981, %v1039
    %v1052 = vadd.f32 %v982, %v1042
    %v1053 = vadd.f32 %v983, %v1044
    %v1054 = vld [vmem:[#allocation2 + $0x19] sm:$0xff]
    %v1055 = vld [vmem:[#allocation2 + $0x21] sm:$0xff]
    %v1056 = vld [vmem:[#allocation2 + $0x29] sm:$0xff]
    %v1057 = vld [vmem:[#allocation2 + $0x31] sm:$0xff]
    %v1058 = vld [vmem:[#allocation2 + $0x39] sm:$0xff]
    %v1059 = vld [vmem:[#allocation2 + $0x41] sm:$0xff]
    %v1060 = vld [vmem:[#allocation2 + $0x49] sm:$0xff]
    %v1061 = vld [vmem:[#allocation2 + $0x51] sm:$0xff]
    %v1062 = vsel %vm602, %v1054, 0.0
    %v1063 = vsel %vm603, %v1055, 0.0
    %v1064 = vsel %vm604, %v1056, 0.0
    %v1065 = vsel %vm605, %v1057, 0.0
    %v1066 = vsel %vm606, %v1058, 0.0
    %v1067 = vsel %vm607, %v1059, 0.0
    %v1068 = vsel %vm608, %v1060, 0.0
    %v1069 = vsel %vm609, %v1061, 0.0
    %v1070 = vpack.c.bf16 %v1063, %v1062
    %v1071 = vpack.c.bf16 %v1065, %v1064
    %v1072 = vpack.c.bf16 %v1067, %v1066
    %v1073 = vpack.c.bf16 %v1069, %v1068
    %s1074 = scalar_lea.vmem %s3, 64
    %v1075 = vld [vmem:[%s1074] sm:$0xf]
    %v1076 = vld [vmem:[%s1074 + $0x4] sm:$0xf]
    %v1079 = vunpack.c.l.b16 %v1075
    %v1080 = vunpack.c.l.b16 %v1076
    %v1081 = vpack.c.b16 %v1080, %v1079
    %v1084 = vsel %vm30, %v1070, 0
    %v1087 = vsel %vm30, %v1071, 0
    %v1090 = vsel %vm30, %v1072, 0
    %v1093 = vsel %vm30, %v1073, 0
    %1095 = vmatpush.bf16.msra.mxu0 0
    %1096 = vmatpush.bf16.msra.mxu0 0
    %1097 = vmatpush.bf16.msra.mxu0 0
    %1098 = vmatpush.bf16.msra.mxu0 0
    %1099 = vmatpush.bf16.msra.mxu0 0
    %1100 = vmatpush.bf16.msra.mxu0 0
    %1101 = vmatpush.bf16.msra.mxu0 0
    %1102 = vmatpush.bf16.msra.mxu0 %v1081
    %1103 = vmatmul.bf16.gmra.mxu0 %v1084
    %v1104 = vpop.f32.mrf.mxu0
    %v1105 = vadd.f32 0.0, %v1104
    %v1106 = vpop.f32.mrf.mxu0
    %v1107 = vadd.f32 0.0, %v1106
    %1108 = vmatmul.bf16.gmra.mxu0 %v1087
    %v1109 = vpop.f32.mrf.mxu0
    %v1110 = vadd.f32 0.0, %v1109
    %v1111 = vpop.f32.mrf.mxu0
    %v1112 = vadd.f32 0.0, %v1111
    %1113 = vmatmul.bf16.gmra.mxu0 %v1090
    %v1114 = vpop.f32.mrf.mxu0
    %v1115 = vadd.f32 0.0, %v1114
    %v1116 = vpop.f32.mrf.mxu0
    %v1117 = vadd.f32 0.0, %v1116
    %1118 = vmatmul.bf16.gmra.mxu0 %v1093
    %v1119 = vpop.f32.mrf.mxu0
    %v1120 = vadd.f32 0.0, %v1119
    %v1121 = vpop.f32.mrf.mxu0
    %v1122 = vadd.f32 0.0, %v1121
    %1123 = vdwg.mxu0
    %v1124 = vadd.f32 %v1046, %v1105
    %v1125 = vadd.f32 %v1047, %v1107
    %v1126 = vadd.f32 %v1048, %v1110
    %v1127 = vadd.f32 %v1049, %v1112
    %v1128 = vadd.f32 %v1050, %v1115
    %v1129 = vadd.f32 %v1051, %v1117
    %v1130 = vadd.f32 %v1052, %v1120
    %v1131 = vadd.f32 %v1053, %v1122
    %v1132 = vld [vmem:[%s5 + $0x3] sm:$0x1]
    %v1133 = vld [vmem:[%s5 + $0x4] sm:$0x1]
    %v1134 = vld [vmem:[%s5 + $0x5] sm:$0x1]
    %v1135 = vsel %vm30, %v1124, 0.0
    %v1136 = vsel %vm30, %v1125, 0.0
    %v1137 = vadd.f32 %v1135, %v1136
    %v1138 = vsel %vm30, %v1126, 0.0
    %v1139 = vadd.f32 %v1137, %v1138
    %v1140 = vsel %vm30, %v1127, 0.0
    %v1141 = vadd.f32 %v1139, %v1140
    %v1142 = vsel %vm30, %v1128, 0.0
    %v1143 = vadd.f32 %v1141, %v1142
    %v1144 = vsel %vm30, %v1129, 0.0
    %v1145 = vadd.f32 %v1143, %v1144
    %v1146 = vsel %vm30, %v1130, 0.0
    %v1147 = vadd.f32 %v1145, %v1146
    %v1148 = vsel %vm30, %v1131, 0.0
    %v1149 = vadd.f32 %v1147, %v1148
    %v1150 = vrot.slane %v1149, 4
    %v1151 = vadd.f32 %v1149, %v1150
    %v1152 = vrot.slane %v1151, 2
    %v1153 = vadd.f32 %v1151, %v1152
    %v1154 = vrot.slane %v1153, 1
    %v1155 = vadd.f32 %v1153, %v1154
    %v1156 = vmul.f32 %v1124, %v1124
    %v1157 = vmul.f32 %v1125, %v1125
    %v1158 = vmul.f32 %v1126, %v1126
    %v1159 = vmul.f32 %v1127, %v1127
    %v1160 = vmul.f32 %v1128, %v1128
    %v1161 = vmul.f32 %v1129, %v1129
    %v1162 = vmul.f32 %v1130, %v1130
    %v1163 = vmul.f32 %v1131, %v1131
    %v1164 = vsel %vm30, %v1156, 0.0
    %v1165 = vsel %vm30, %v1157, 0.0
    %v1166 = vadd.f32 %v1164, %v1165
    %v1167 = vsel %vm30, %v1158, 0.0
    %v1168 = vadd.f32 %v1166, %v1167
    %v1169 = vsel %vm30, %v1159, 0.0
    %v1170 = vadd.f32 %v1168, %v1169
    %v1171 = vsel %vm30, %v1160, 0.0
    %v1172 = vadd.f32 %v1170, %v1171
    %v1173 = vsel %vm30, %v1161, 0.0
    %v1174 = vadd.f32 %v1172, %v1173
    %v1175 = vsel %vm30, %v1162, 0.0
    %v1176 = vadd.f32 %v1174, %v1175
    %v1177 = vsel %vm30, %v1163, 0.0
    %v1178 = vadd.f32 %v1176, %v1177
    %v1179 = vrot.slane %v1178, 4
    %v1180 = vadd.f32 %v1178, %v1179
    %v1181 = vrot.slane %v1180, 2
    %v1182 = vadd.f32 %v1180, %v1181
    %v1183 = vrot.slane %v1182, 1
    %v1184 = vadd.f32 %v1182, %v1183
    %v1185 = vmul.f32 %v1132, 64.0
    %v1186 = vadd.f32 %v1155, %v1185
    %v1187 = vmul.f32 %v1132, 2.0
    %v1188 = vmul.f32 %v1187, %v1155
    %v1189 = vadd.f32 %v1184, %v1188
    %v1190 = vmul.f32 %v1185, %v1132
    %v1191 = vadd.f32 %v1189, %v1190
    %v1193 = vsel %vm30, %v1186, 0
    %1195 = vmatpush.msra.mxu0 0.0
    %1196 = vmatpush.msra.mxu0 0.0
    %1197 = vmatpush.msra.mxu0 0.0
    %1198 = vmatpush.msra.mxu0 0.0
    %1199 = vmatpush.msra.mxu0 0.0
    %1200 = vmatpush.msra.mxu0 0.0
    %1201 = vmatpush.msra.mxu0 0.0
    %1202 = vmatpush.msra.mxu0 0.0
    %1203 = vmatpush.msra.mxu0 0.0
    %1204 = vmatpush.msra.mxu0 0.0
    %1205 = vmatpush.msra.mxu0 0.0
    %1206 = vmatpush.msra.mxu0 0.0
    %1207 = vmatpush.msra.mxu0 0.0
    %1208 = vmatpush.msra.mxu0 0.0
    %1209 = vmatpush.msra.mxu0 %v29
    %1210 = vmatpush.msra.mxu0 %v28
    %1211 = vmatmul.f32.gmra.mxu0 %v1193
    %v1212 = vpop.f32.mrf.mxu0
    %v1213 = vadd.f32 0.0, %v1212
    %1214 = vdwg.mxu0
    %v1216 = vsel %vm30, %v1191, 0
    %1218 = vmatpush.msra.mxu0 0.0
    %1219 = vmatpush.msra.mxu0 0.0
    %1220 = vmatpush.msra.mxu0 0.0
    %1221 = vmatpush.msra.mxu0 0.0
    %1222 = vmatpush.msra.mxu0 0.0
    %1223 = vmatpush.msra.mxu0 0.0
    %1224 = vmatpush.msra.mxu0 0.0
    %1225 = vmatpush.msra.mxu0 0.0
    %1226 = vmatpush.msra.mxu0 0.0
    %1227 = vmatpush.msra.mxu0 0.0
    %1228 = vmatpush.msra.mxu0 0.0
    %1229 = vmatpush.msra.mxu0 0.0
    %1230 = vmatpush.msra.mxu0 0.0
    %1231 = vmatpush.msra.mxu0 0.0
    %1232 = vmatpush.msra.mxu0 %v29
    %1233 = vmatpush.msra.mxu0 %v28
    %1234 = vmatmul.f32.gmra.mxu0 %v1216
    %v1235 = vpop.f32.mrf.mxu0
    %v1236 = vadd.f32 0.0, %v1235
    %1237 = vdwg.mxu0
    %v1238 = vmul.f32 %v1213, %v1213
    %v1239 = vsub.f32 %v1236, %v1238
    %v1240 = vadd.f32 %v1239, 1e-05
    %v1241 = vrsqrt.pop %v1240
    %v1242 = vmul.f32 %v1241, %v1240
    %v1243 = vmul.f32 %v1242, %v1241
    %v1244 = vmul.f32 0.5, %v1243
    %v1245 = vsub.f32 1.5, %v1244
    %v1246 = vmul.f32 %v1241, %v1245
    %vm1247 = vweird.f32 %v1240
    %vm1248 = vweird.f32 %v1241
    %vm1249 = vmor %vm1247, %vm1248
    %v1250 = vsel %vm1249, %v1241, %v1246
    %v1251 = vmul.f32 %v1133, %v1250
    %v1252 = vsub.f32 %v1132, %v1213
    %v1253 = vmul.f32 %v1252, %v1251
    %v1254 = vadd.f32 %v1134, %v1253
    %v1255 = vperm.slane %v1251, 0
    %v1256 = vmul.f32 %v1124, %v1255
    %v1257 = vmul.f32 %v1125, %v1255
    %v1258 = vmul.f32 %v1126, %v1255
    %v1259 = vmul.f32 %v1127, %v1255
    %v1260 = vmul.f32 %v1128, %v1255
    %v1261 = vmul.f32 %v1129, %v1255
    %v1262 = vmul.f32 %v1130, %v1255
    %v1263 = vmul.f32 %v1131, %v1255
    %v1264 = vperm.slane %v1254, 0
    %v1265 = vadd.f32 %v1256, %v1264
    %v1266 = vadd.f32 %v1257, %v1264
    %v1267 = vadd.f32 %v1258, %v1264
    %v1268 = vadd.f32 %v1259, %v1264
    %v1269 = vadd.f32 %v1260, %v1264
    %v1270 = vadd.f32 %v1261, %v1264
    %v1271 = vadd.f32 %v1262, %v1264
    %v1272 = vadd.f32 %v1263, %v1264
    %v1273 = vld [vmem:[%s1] sm:$0xf]
    %v1274 = vld [vmem:[%s1 + $0x4] sm:$0xf]
    %v1275 = vld [vmem:[%s1 + $0x8] sm:$0xf]
    %v1276 = vld [vmem:[%s1 + $0xc] sm:$0xf]
    %v1277 = vld [vmem:[%s1 + $0x10] sm:$0xf]
    %v1278 = vld [vmem:[%s1 + $0x14] sm:$0xf]
    %v1279 = vld [vmem:[%s1 + $0x18] sm:$0xf]
    %v1280 = vld [vmem:[%s1 + $0x1c] sm:$0xf]
    %v1281 = vld [vmem:[%s4] sm:$0xf]
    %v1290 = vunpack.c.l.b16 %v1273
    %v1291 = vunpack.c.l.b16 %v1274
    %v1292 = vunpack.c.l.b16 %v1275
    %v1293 = vunpack.c.l.b16 %v1276
    %v1294 = vunpack.c.l.b16 %v1277
    %v1295 = vunpack.c.l.b16 %v1278
    %v1296 = vunpack.c.l.b16 %v1279
    %v1297 = vunpack.c.l.b16 %v1280
    %v1298 = vpack.c.b16 %v1291, %v1290
    %v1299 = vpack.c.b16 %v1293, %v1292
    %v1300 = vpack.c.b16 %v1295, %v1294
    %v1301 = vpack.c.b16 %v1297, %v1296
    %vm1302 = vcmask 64512
    %v1304 = vsel %vm1302, %v1298, 0
    %v1307 = vsel %vm1302, %v1299, 0
    %v1310 = vsel %vm1302, %v1300, 0
    %v1313 = vsel %vm1302, %v1301, 0
    %v1316 = vsel %vm233, %v1281, 0
    %1318 = vmatpush.bf16.msra.mxu0 0
    %1319 = vmatpush.bf16.msra.mxu0 0
    %1320 = vmatpush.bf16.msra.mxu0 0
    %1321 = vmatpush.bf16.msra.mxu0 0
    %1322 = vmatpush.bf16.msra.mxu0 0
    %1323 = vmatpush.bf16.msra.mxu0 0
    %1324 = vmatpush.bf16.msra.mxu0 0
    %1325 = vmatpush.bf16.msra.mxu0 %v1316
    %1326 = vmatmul.bf16.gmra.mxu0 %v1304
    %v1327 = vpop.f32.mrf.mxu0
    %v1328 = vadd.f32 0.0, %v1327
    %v1329 = vpop.f32.mrf.mxu0
    %v1330 = vadd.f32 0.0, %v1329
    %1331 = vmatmul.bf16.gmra.mxu0 %v1307
    %v1332 = vpop.f32.mrf.mxu0
    %v1333 = vadd.f32 0.0, %v1332
    %v1334 = vpop.f32.mrf.mxu0
    %v1335 = vadd.f32 0.0, %v1334
    %1336 = vmatmul.bf16.gmra.mxu0 %v1310
    %v1337 = vpop.f32.mrf.mxu0
    %v1338 = vadd.f32 0.0, %v1337
    %v1339 = vpop.f32.mrf.mxu0
    %v1340 = vadd.f32 0.0, %v1339
    %1341 = vmatmul.bf16.gmra.mxu0 %v1313
    %v1342 = vpop.f32.mrf.mxu0
    %v1343 = vadd.f32 0.0, %v1342
    %v1344 = vpop.f32.mrf.mxu0
    %v1345 = vadd.f32 0.0, %v1344
    %1346 = vdwg.mxu0
    %v1347 = vld [vmem:[%s5 + $0x6] sm:$0x1]
    %v1348 = vld [vmem:[%s5 + $0x7] sm:$0x1]
    %v1349 = vld [vmem:[%s5 + $0x8] sm:$0x1]
    %v1350 = vsel %vm30, %v1328, 0.0
    %v1351 = vsel %vm30, %v1330, 0.0
    %v1352 = vadd.f32 %v1350, %v1351
    %v1353 = vsel %vm30, %v1333, 0.0
    %v1354 = vadd.f32 %v1352, %v1353
    %v1355 = vsel %vm30, %v1335, 0.0
    %v1356 = vadd.f32 %v1354, %v1355
    %v1357 = vsel %vm30, %v1338, 0.0
    %v1358 = vadd.f32 %v1356, %v1357
    %v1359 = vsel %vm30, %v1340, 0.0
    %v1360 = vadd.f32 %v1358, %v1359
    %v1361 = vsel %vm30, %v1343, 0.0
    %v1362 = vadd.f32 %v1360, %v1361
    %v1363 = vsel %vm30, %v1345, 0.0
    %v1364 = vadd.f32 %v1362, %v1363
    %v1365 = vrot.slane %v1364, 4
    %v1366 = vadd.f32 %v1364, %v1365
    %v1367 = vrot.slane %v1366, 2
    %v1368 = vadd.f32 %v1366, %v1367
    %v1369 = vrot.slane %v1368, 1
    %v1370 = vadd.f32 %v1368, %v1369
    %v1371 = vmul.f32 %v1328, %v1328
    %v1372 = vmul.f32 %v1330, %v1330
    %v1373 = vmul.f32 %v1333, %v1333
    %v1374 = vmul.f32 %v1335, %v1335
    %v1375 = vmul.f32 %v1338, %v1338
    %v1376 = vmul.f32 %v1340, %v1340
    %v1377 = vmul.f32 %v1343, %v1343
    %v1378 = vmul.f32 %v1345, %v1345
    %v1379 = vsel %vm30, %v1371, 0.0
    %v1380 = vsel %vm30, %v1372, 0.0
    %v1381 = vadd.f32 %v1379, %v1380
    %v1382 = vsel %vm30, %v1373, 0.0
    %v1383 = vadd.f32 %v1381, %v1382
    %v1384 = vsel %vm30, %v1374, 0.0
    %v1385 = vadd.f32 %v1383, %v1384
    %v1386 = vsel %vm30, %v1375, 0.0
    %v1387 = vadd.f32 %v1385, %v1386
    %v1388 = vsel %vm30, %v1376, 0.0
    %v1389 = vadd.f32 %v1387, %v1388
    %v1390 = vsel %vm30, %v1377, 0.0
    %v1391 = vadd.f32 %v1389, %v1390
    %v1392 = vsel %vm30, %v1378, 0.0
    %v1393 = vadd.f32 %v1391, %v1392
    %v1394 = vrot.slane %v1393, 4
    %v1395 = vadd.f32 %v1393, %v1394
    %v1396 = vrot.slane %v1395, 2
    %v1397 = vadd.f32 %v1395, %v1396
    %v1398 = vrot.slane %v1397, 1
    %v1399 = vadd.f32 %v1397, %v1398
    %v1400 = vmul.f32 %v1347, 64.0
    %v1401 = vadd.f32 %v1370, %v1400
    %v1402 = vmul.f32 %v1347, 2.0
    %v1403 = vmul.f32 %v1402, %v1370
    %v1404 = vadd.f32 %v1399, %v1403
    %v1405 = vmul.f32 %v1400, %v1347
    %v1406 = vadd.f32 %v1404, %v1405
    %v1408 = vsel %vm30, %v1401, 0
    %1410 = vmatpush.msra.mxu0 0.0
    %1411 = vmatpush.msra.mxu0 0.0
    %1412 = vmatpush.msra.mxu0 0.0
    %1413 = vmatpush.msra.mxu0 0.0
    %1414 = vmatpush.msra.mxu0 0.0
    %1415 = vmatpush.msra.mxu0 0.0
    %1416 = vmatpush.msra.mxu0 0.0
    %1417 = vmatpush.msra.mxu0 0.0
    %1418 = vmatpush.msra.mxu0 0.0
    %1419 = vmatpush.msra.mxu0 0.0
    %1420 = vmatpush.msra.mxu0 0.0
    %1421 = vmatpush.msra.mxu0 0.0
    %1422 = vmatpush.msra.mxu0 0.0
    %1423 = vmatpush.msra.mxu0 0.0
    %1424 = vmatpush.msra.mxu0 %v29
    %1425 = vmatpush.msra.mxu0 %v28
    %1426 = vmatmul.f32.gmra.mxu0 %v1408
    %v1427 = vpop.f32.mrf.mxu0
    %v1428 = vadd.f32 0.0, %v1427
    %1429 = vdwg.mxu0
    %v1431 = vsel %vm30, %v1406, 0
    %1433 = vmatpush.msra.mxu0 0.0
    %1434 = vmatpush.msra.mxu0 0.0
    %1435 = vmatpush.msra.mxu0 0.0
    %1436 = vmatpush.msra.mxu0 0.0
    %1437 = vmatpush.msra.mxu0 0.0
    %1438 = vmatpush.msra.mxu0 0.0
    %1439 = vmatpush.msra.mxu0 0.0
    %1440 = vmatpush.msra.mxu0 0.0
    %1441 = vmatpush.msra.mxu0 0.0
    %1442 = vmatpush.msra.mxu0 0.0
    %1443 = vmatpush.msra.mxu0 0.0
    %1444 = vmatpush.msra.mxu0 0.0
    %1445 = vmatpush.msra.mxu0 0.0
    %1446 = vmatpush.msra.mxu0 0.0
    %1447 = vmatpush.msra.mxu0 %v29
    %1448 = vmatpush.msra.mxu0 %v28
    %1449 = vmatmul.f32.gmra.mxu0 %v1431
    %v1450 = vpop.f32.mrf.mxu0
    %v1451 = vadd.f32 0.0, %v1450
    %1452 = vdwg.mxu0
    %v1453 = vmul.f32 %v1428, %v1428
    %v1454 = vsub.f32 %v1451, %v1453
    %v1455 = vadd.f32 %v1454, 1e-05
    %v1456 = vrsqrt.pop %v1455
    %v1457 = vmul.f32 %v1456, %v1455
    %v1458 = vmul.f32 %v1457, %v1456
    %v1459 = vmul.f32 0.5, %v1458
    %v1460 = vsub.f32 1.5, %v1459
    %v1461 = vmul.f32 %v1456, %v1460
    %vm1462 = vweird.f32 %v1455
    %vm1463 = vweird.f32 %v1456
    %vm1464 = vmor %vm1462, %vm1463
    %v1465 = vsel %vm1464, %v1456, %v1461
    %v1466 = vmul.f32 %v1348, %v1465
    %v1467 = vsub.f32 %v1347, %v1428
    %v1468 = vmul.f32 %v1467, %v1466
    %v1469 = vadd.f32 %v1349, %v1468
    %v1470 = vperm.slane %v1466, 0
    %v1471 = vmul.f32 %v1328, %v1470
    %v1472 = vmul.f32 %v1330, %v1470
    %v1473 = vmul.f32 %v1333, %v1470
    %v1474 = vmul.f32 %v1335, %v1470
    %v1475 = vmul.f32 %v1338, %v1470
    %v1476 = vmul.f32 %v1340, %v1470
    %v1477 = vmul.f32 %v1343, %v1470
    %v1478 = vmul.f32 %v1345, %v1470
    %v1479 = vperm.slane %v1469, 0
    %v1480 = vadd.f32 %v1471, %v1479
    %v1481 = vadd.f32 %v1472, %v1479
    %v1482 = vadd.f32 %v1473, %v1479
    %v1483 = vadd.f32 %v1474, %v1479
    %v1484 = vadd.f32 %v1475, %v1479
    %v1485 = vadd.f32 %v1476, %v1479
    %v1486 = vadd.f32 %v1477, %v1479
    %v1487 = vadd.f32 %v1478, %v1479
    %v1488 = vadd.f32 %v1265, %v1480
    %v1489 = vadd.f32 %v1266, %v1481
    %v1490 = vadd.f32 %v1267, %v1482
    %v1491 = vadd.f32 %v1268, %v1483
    %v1492 = vadd.f32 %v1269, %v1484
    %v1493 = vadd.f32 %v1270, %v1485
    %v1494 = vadd.f32 %v1271, %v1486
    %v1495 = vadd.f32 %v1272, %v1487
    %vm1496 = vcmp.ge.f32.partialorder %v1488, 0.0
    %vm1497 = vcmp.ge.f32.partialorder %v1489, 0.0
    %vm1498 = vcmp.ge.f32.partialorder %v1490, 0.0
    %vm1499 = vcmp.ge.f32.partialorder %v1491, 0.0
    %vm1500 = vcmp.ge.f32.partialorder %v1492, 0.0
    %vm1501 = vcmp.ge.f32.partialorder %v1493, 0.0
    %vm1502 = vcmp.ge.f32.partialorder %v1494, 0.0
    %vm1503 = vcmp.ge.f32.partialorder %v1495, 0.0
    %v1504 = vmul.f32 %v1488, 0.2
    %v1505 = vmul.f32 %v1489, 0.2
    %v1506 = vmul.f32 %v1490, 0.2
    %v1507 = vmul.f32 %v1491, 0.2
    %v1508 = vmul.f32 %v1492, 0.2
    %v1509 = vmul.f32 %v1493, 0.2
    %v1510 = vmul.f32 %v1494, 0.2
    %v1511 = vmul.f32 %v1495, 0.2
    %v1512 = vsel %vm1496, %v1488, %v1504
    %v1513 = vsel %vm1497, %v1489, %v1505
    %v1514 = vsel %vm1498, %v1490, %v1506
    %v1515 = vsel %vm1499, %v1491, %v1507
    %v1516 = vsel %vm1500, %v1492, %v1508
    %v1517 = vsel %vm1501, %v1493, %v1509
    %v1518 = vsel %vm1502, %v1494, %v1510
    %v1519 = vsel %vm1503, %v1495, %v1511
    %1520 = vst.msk [vmem:[#allocation3] sm:$0xff] %vm30, %v1512
    %1521 = vst.msk [vmem:[#allocation3 + $0x8] sm:$0xff] %vm30, %v1513
    %1522 = vst.msk [vmem:[#allocation3 + $0x10] sm:$0xff] %vm30, %v1514
    %1523 = vst.msk [vmem:[#allocation3 + $0x18] sm:$0xff] %vm30, %v1515
    %1524 = vst.msk [vmem:[#allocation3 + $0x20] sm:$0xff] %vm30, %v1516
    %1525 = vst.msk [vmem:[#allocation3 + $0x28] sm:$0xff] %vm30, %v1517
    %1526 = vst.msk [vmem:[#allocation3 + $0x30] sm:$0xff] %vm30, %v1518
    %1527 = vst.msk [vmem:[#allocation3 + $0x38] sm:$0xff] %vm30, %v1519
    %s1528 = scalar_lea.vmem %s0, 32
    %v1529 = vld [vmem:[%s1528] sm:$0xf]
    %v1530 = vld [vmem:[%s1528 + $0x4] sm:$0xf]
    %v1531 = vld [vmem:[%s1528 + $0x8] sm:$0xf]
    %v1532 = vld [vmem:[%s1528 + $0xc] sm:$0xf]
    %v1533 = vld [vmem:[%s1528 + $0x10] sm:$0xf]
    %v1534 = vld [vmem:[%s1528 + $0x14] sm:$0xf]
    %v1535 = vld [vmem:[%s1528 + $0x18] sm:$0xf]
    %v1536 = vld [vmem:[%s1528 + $0x1c] sm:$0xf]
    %v1537 = vld [vmem:[%s2] sm:$0xf]
    %v1538 = vld [vmem:[%s2 + $0x4] sm:$0xf]
    %v1539 = vld [vmem:[%s2 + $0x8] sm:$0xf]
    %v1540 = vld [vmem:[%s2 + $0xc] sm:$0xf]
    %v1541 = vld [vmem:[%s2 + $0x10] sm:$0xf]
    %v1542 = vld [vmem:[%s2 + $0x14] sm:$0xf]
    %v1543 = vld [vmem:[%s2 + $0x18] sm:$0xf]
    %v1544 = vld [vmem:[%s2 + $0x1c] sm:$0xf]
    %v1545 = vld [vmem:[%s2 + $0x20] sm:$0xf]
    %v1554 = vunpack.c.l.b16 %v1529
    %v1555 = vunpack.c.l.b16 %v1530
    %v1556 = vunpack.c.l.b16 %v1531
    %v1557 = vunpack.c.l.b16 %v1532
    %v1558 = vunpack.c.l.b16 %v1533
    %v1559 = vunpack.c.l.b16 %v1534
    %v1560 = vunpack.c.l.b16 %v1535
    %v1561 = vunpack.c.l.b16 %v1536
    %v1562 = vpack.c.b16 %v1555, %v1554
    %v1563 = vpack.c.b16 %v1557, %v1556
    %v1564 = vpack.c.b16 %v1559, %v1558
    %v1565 = vpack.c.b16 %v1561, %v1560
    %v1575 = vunpack.c.l.b16 %v1537
    %v1576 = vunpack.c.l.b16 %v1538
    %v1577 = vunpack.c.l.b16 %v1539
    %v1578 = vunpack.c.l.b16 %v1540
    %v1579 = vunpack.c.l.b16 %v1541
    %v1580 = vunpack.c.l.b16 %v1542
    %v1581 = vunpack.c.l.b16 %v1543
    %v1582 = vunpack.c.l.b16 %v1544
    %v1583 = vunpack.c.l.b16 %v1545
    %v1584 = vpack.c.b16 %v1576, %v1575
    %v1585 = vpack.c.b16 %v1578, %v1577
    %v1586 = vpack.c.b16 %v1580, %v1579
    %v1587 = vpack.c.b16 %v1582, %v1581
    %v1588 = vpack.c.b16 %v1583, %v1583
    %v1594 = vsel %vm220, %v1562, 0
    %v1597 = vsel %vm220, %v1563, 0
    %v1600 = vsel %vm220, %v1564, 0
    %v1603 = vsel %vm220, %v1565, 0
    %v1606 = vsel %vm233, %v1588, 0
    %1608 = vmatpush.bf16.msra.mxu0 0
    %1609 = vmatpush.bf16.msra.mxu0 0
    %1610 = vmatpush.bf16.msra.mxu0 0
    %1611 = vmatpush.bf16.msra.mxu0 %v1606
    %1612 = vmatpush.bf16.msra.mxu0 %v1587
    %1613 = vmatpush.bf16.msra.mxu0 %v1586
    %1614 = vmatpush.bf16.msra.mxu0 %v1585
    %1615 = vmatpush.bf16.msra.mxu0 %v1584
    %1616 = vmatmul.bf16.gmra.mxu0 %v1594
    %v1617 = vpop.f32.mrf.mxu0
    %v1618 = vadd.f32 0.0, %v1617
    %v1619 = vpop.f32.mrf.mxu0
    %v1620 = vadd.f32 0.0, %v1619
    %1621 = vmatmul.bf16.gmra.mxu0 %v1597
    %v1622 = vpop.f32.mrf.mxu0
    %v1623 = vadd.f32 0.0, %v1622
    %v1624 = vpop.f32.mrf.mxu0
    %v1625 = vadd.f32 0.0, %v1624
    %1626 = vmatmul.bf16.gmra.mxu0 %v1600
    %v1627 = vpop.f32.mrf.mxu0
    %v1628 = vadd.f32 0.0, %v1627
    %v1629 = vpop.f32.mrf.mxu0
    %v1630 = vadd.f32 0.0, %v1629
    %1631 = vmatmul.bf16.gmra.mxu0 %v1603
    %v1632 = vpop.f32.mrf.mxu0
    %v1633 = vadd.f32 0.0, %v1632
    %v1634 = vpop.f32.mrf.mxu0
    %v1635 = vadd.f32 0.0, %v1634
    %1636 = vdwg.mxu0
    %v1637 = vld [vmem:[%s5] sm:$0x1]
    %v1638 = vld [vmem:[%s5 + $0x1] sm:$0x1]
    %v1639 = vld [vmem:[%s5 + $0x2] sm:$0x1]
    %v1640 = vsel %vm30, %v1618, 0.0
    %v1641 = vsel %vm30, %v1620, 0.0
    %v1642 = vadd.f32 %v1640, %v1641
    %v1643 = vsel %vm30, %v1623, 0.0
    %v1644 = vadd.f32 %v1642, %v1643
    %v1645 = vsel %vm30, %v1625, 0.0
    %v1646 = vadd.f32 %v1644, %v1645
    %v1647 = vsel %vm30, %v1628, 0.0
    %v1648 = vadd.f32 %v1646, %v1647
    %v1649 = vsel %vm30, %v1630, 0.0
    %v1650 = vadd.f32 %v1648, %v1649
    %v1651 = vsel %vm30, %v1633, 0.0
    %v1652 = vadd.f32 %v1650, %v1651
    %v1653 = vsel %vm30, %v1635, 0.0
    %v1654 = vadd.f32 %v1652, %v1653
    %v1655 = vrot.slane %v1654, 4
    %v1656 = vadd.f32 %v1654, %v1655
    %v1657 = vrot.slane %v1656, 2
    %v1658 = vadd.f32 %v1656, %v1657
    %v1659 = vrot.slane %v1658, 1
    %v1660 = vadd.f32 %v1658, %v1659
    %v1661 = vmul.f32 %v1618, %v1618
    %v1662 = vmul.f32 %v1620, %v1620
    %v1663 = vmul.f32 %v1623, %v1623
    %v1664 = vmul.f32 %v1625, %v1625
    %v1665 = vmul.f32 %v1628, %v1628
    %v1666 = vmul.f32 %v1630, %v1630
    %v1667 = vmul.f32 %v1633, %v1633
    %v1668 = vmul.f32 %v1635, %v1635
    %v1669 = vsel %vm30, %v1661, 0.0
    %v1670 = vsel %vm30, %v1662, 0.0
    %v1671 = vadd.f32 %v1669, %v1670
    %v1672 = vsel %vm30, %v1663, 0.0
    %v1673 = vadd.f32 %v1671, %v1672
    %v1674 = vsel %vm30, %v1664, 0.0
    %v1675 = vadd.f32 %v1673, %v1674
    %v1676 = vsel %vm30, %v1665, 0.0
    %v1677 = vadd.f32 %v1675, %v1676
    %v1678 = vsel %vm30, %v1666, 0.0
    %v1679 = vadd.f32 %v1677, %v1678
    %v1680 = vsel %vm30, %v1667, 0.0
    %v1681 = vadd.f32 %v1679, %v1680
    %v1682 = vsel %vm30, %v1668, 0.0
    %v1683 = vadd.f32 %v1681, %v1682
    %v1684 = vrot.slane %v1683, 4
    %v1685 = vadd.f32 %v1683, %v1684
    %v1686 = vrot.slane %v1685, 2
    %v1687 = vadd.f32 %v1685, %v1686
    %v1688 = vrot.slane %v1687, 1
    %v1689 = vadd.f32 %v1687, %v1688
    %v1690 = vmul.f32 %v1637, 64.0
    %v1691 = vadd.f32 %v1660, %v1690
    %v1692 = vmul.f32 %v1637, 2.0
    %v1693 = vmul.f32 %v1692, %v1660
    %v1694 = vadd.f32 %v1689, %v1693
    %v1695 = vmul.f32 %v1690, %v1637
    %v1696 = vadd.f32 %v1694, %v1695
    %v1698 = vsel %vm30, %v1691, 0
    %1700 = vmatpush.msra.mxu0 0.0
    %1701 = vmatpush.msra.mxu0 0.0
    %1702 = vmatpush.msra.mxu0 0.0
    %1703 = vmatpush.msra.mxu0 0.0
    %1704 = vmatpush.msra.mxu0 0.0
    %1705 = vmatpush.msra.mxu0 0.0
    %1706 = vmatpush.msra.mxu0 0.0
    %1707 = vmatpush.msra.mxu0 0.0
    %1708 = vmatpush.msra.mxu0 0.0
    %1709 = vmatpush.msra.mxu0 0.0
    %1710 = vmatpush.msra.mxu0 0.0
    %1711 = vmatpush.msra.mxu0 0.0
    %1712 = vmatpush.msra.mxu0 0.0
    %1713 = vmatpush.msra.mxu0 0.0
    %1714 = vmatpush.msra.mxu0 %v29
    %1715 = vmatpush.msra.mxu0 %v28
    %1716 = vmatmul.f32.gmra.mxu0 %v1698
    %v1717 = vpop.f32.mrf.mxu0
    %v1718 = vadd.f32 0.0, %v1717
    %1719 = vdwg.mxu0
    %v1721 = vsel %vm30, %v1696, 0
    %1723 = vmatpush.msra.mxu0 0.0
    %1724 = vmatpush.msra.mxu0 0.0
    %1725 = vmatpush.msra.mxu0 0.0
    %1726 = vmatpush.msra.mxu0 0.0
    %1727 = vmatpush.msra.mxu0 0.0
    %1728 = vmatpush.msra.mxu0 0.0
    %1729 = vmatpush.msra.mxu0 0.0
    %1730 = vmatpush.msra.mxu0 0.0
    %1731 = vmatpush.msra.mxu0 0.0
    %1732 = vmatpush.msra.mxu0 0.0
    %1733 = vmatpush.msra.mxu0 0.0
    %1734 = vmatpush.msra.mxu0 0.0
    %1735 = vmatpush.msra.mxu0 0.0
    %1736 = vmatpush.msra.mxu0 0.0
    %1737 = vmatpush.msra.mxu0 %v29
    %1738 = vmatpush.msra.mxu0 %v28
    %1739 = vmatmul.f32.gmra.mxu0 %v1721
    %v1740 = vpop.f32.mrf.mxu0
    %v1741 = vadd.f32 0.0, %v1740
    %1742 = vdwg.mxu0
    %v1743 = vmul.f32 %v1718, %v1718
    %v1744 = vsub.f32 %v1741, %v1743
    %v1745 = vadd.f32 %v1744, 1e-05
    %v1746 = vrsqrt.pop %v1745
    %v1747 = vmul.f32 %v1746, %v1745
    %v1748 = vmul.f32 %v1747, %v1746
    %v1749 = vmul.f32 0.5, %v1748
    %v1750 = vsub.f32 1.5, %v1749
    %v1751 = vmul.f32 %v1746, %v1750
    %vm1752 = vweird.f32 %v1745
    %vm1753 = vweird.f32 %v1746
    %vm1754 = vmor %vm1752, %vm1753
    %v1755 = vsel %vm1754, %v1746, %v1751
    %v1756 = vmul.f32 %v1638, %v1755
    %v1757 = vsub.f32 %v1637, %v1718
    %v1758 = vmul.f32 %v1757, %v1756
    %v1759 = vadd.f32 %v1639, %v1758
    %v1760 = vperm.slane %v1756, 0
    %v1761 = vmul.f32 %v1618, %v1760
    %v1762 = vmul.f32 %v1620, %v1760
    %v1763 = vmul.f32 %v1623, %v1760
    %v1764 = vmul.f32 %v1625, %v1760
    %v1765 = vmul.f32 %v1628, %v1760
    %v1766 = vmul.f32 %v1630, %v1760
    %v1767 = vmul.f32 %v1633, %v1760
    %v1768 = vmul.f32 %v1635, %v1760
    %v1769 = vperm.slane %v1759, 0
    %v1770 = vadd.f32 %v1761, %v1769
    %v1771 = vadd.f32 %v1762, %v1769
    %v1772 = vadd.f32 %v1763, %v1769
    %v1773 = vadd.f32 %v1764, %v1769
    %v1774 = vadd.f32 %v1765, %v1769
    %v1775 = vadd.f32 %v1766, %v1769
    %v1776 = vadd.f32 %v1767, %v1769
    %v1777 = vadd.f32 %v1768, %v1769
    %vm1778 = vcmp.ge.f32.partialorder %v1770, 0.0
    %vm1779 = vcmp.ge.f32.partialorder %v1771, 0.0
    %vm1780 = vcmp.ge.f32.partialorder %v1772, 0.0
    %vm1781 = vcmp.ge.f32.partialorder %v1773, 0.0
    %vm1782 = vcmp.ge.f32.partialorder %v1774, 0.0
    %vm1783 = vcmp.ge.f32.partialorder %v1775, 0.0
    %vm1784 = vcmp.ge.f32.partialorder %v1776, 0.0
    %vm1785 = vcmp.ge.f32.partialorder %v1777, 0.0
    %v1786 = vmul.f32 %v1770, 0.2
    %v1787 = vmul.f32 %v1771, 0.2
    %v1788 = vmul.f32 %v1772, 0.2
    %v1789 = vmul.f32 %v1773, 0.2
    %v1790 = vmul.f32 %v1774, 0.2
    %v1791 = vmul.f32 %v1775, 0.2
    %v1792 = vmul.f32 %v1776, 0.2
    %v1793 = vmul.f32 %v1777, 0.2
    %v1794 = vsel %vm1778, %v1770, %v1786
    %v1795 = vsel %vm1779, %v1771, %v1787
    %v1796 = vsel %vm1780, %v1772, %v1788
    %v1797 = vsel %vm1781, %v1773, %v1789
    %v1798 = vsel %vm1782, %v1774, %v1790
    %v1799 = vsel %vm1783, %v1775, %v1791
    %v1800 = vsel %vm1784, %v1776, %v1792
    %v1801 = vsel %vm1785, %v1777, %v1793
    %1802 = vst.msk [vmem:[#allocation2 + $0x10] sm:$0xff] %vm30, %v1794
    %1803 = vst.msk [vmem:[#allocation2 + $0x18] sm:$0xff] %vm30, %v1795
    %1804 = vst.msk [vmem:[#allocation2 + $0x20] sm:$0xff] %vm30, %v1796
    %1805 = vst.msk [vmem:[#allocation2 + $0x28] sm:$0xff] %vm30, %v1797
    %1806 = vst.msk [vmem:[#allocation2 + $0x30] sm:$0xff] %vm30, %v1798
    %1807 = vst.msk [vmem:[#allocation2 + $0x38] sm:$0xff] %vm30, %v1799
    %1808 = vst.msk [vmem:[#allocation2 + $0x40] sm:$0xff] %vm30, %v1800
    %1809 = vst.msk [vmem:[#allocation2 + $0x48] sm:$0xff] %vm30, %v1801
    %v1810 = vld [vmem:[#allocation2 + $0x7] sm:$0xff]
    %v1811 = vld [vmem:[#allocation2 + $0xf] sm:$0xff]
    %v1812 = vld [vmem:[#allocation2 + $0x17] sm:$0xff]
    %v1813 = vld [vmem:[#allocation2 + $0x1f] sm:$0xff]
    %v1814 = vld [vmem:[#allocation2 + $0x27] sm:$0xff]
    %v1815 = vld [vmem:[#allocation2 + $0x2f] sm:$0xff]
    %v1816 = vld [vmem:[#allocation2 + $0x37] sm:$0xff]
    %v1817 = vld [vmem:[#allocation2 + $0x3f] sm:$0xff]
    %v1818 = vsel %vm455, %v1810, 0.0
    %v1819 = vsel %vm456, %v1811, 0.0
    %v1820 = vsel %vm457, %v1812, 0.0
    %v1821 = vsel %vm458, %v1813, 0.0
    %v1822 = vsel %vm459, %v1814, 0.0
    %v1823 = vsel %vm460, %v1815, 0.0
    %v1824 = vsel %vm461, %v1816, 0.0
    %v1825 = vsel %vm462, %v1817, 0.0
    %v1826 = vpack.c.bf16 %v1819, %v1818
    %v1827 = vpack.c.bf16 %v1821, %v1820
    %v1828 = vpack.c.bf16 %v1823, %v1822
    %v1829 = vpack.c.bf16 %v1825, %v1824
    %v1830 = vld [vmem:[%s3] sm:$0xf]
    %v1831 = vld [vmem:[%s3 + $0x4] sm:$0xf]
    %v1832 = vld [vmem:[#allocation2 + $0x8] sm:$0xff]
    %v1833 = vld [vmem:[#allocation2 + $0x10] sm:$0xff]
    %v1834 = vld [vmem:[#allocation2 + $0x18] sm:$0xff]
    %v1835 = vld [vmem:[#allocation2 + $0x20] sm:$0xff]
    %v1836 = vld [vmem:[#allocation2 + $0x28] sm:$0xff]
    %v1837 = vld [vmem:[#allocation2 + $0x30] sm:$0xff]
    %v1838 = vld [vmem:[#allocation2 + $0x38] sm:$0xff]
    %v1839 = vld [vmem:[#allocation2 + $0x40] sm:$0xff]
    %v1840 = vpack.c.bf16 %v1833, %v1832
    %v1841 = vpack.c.bf16 %v1835, %v1834
    %v1842 = vpack.c.bf16 %v1837, %v1836
    %v1843 = vpack.c.bf16 %v1839, %v1838
    %v1844 = vld [vmem:[%s489] sm:$0xf]
    %v1845 = vld [vmem:[%s489 + $0x4] sm:$0xf]
    %v1848 = vunpack.c.l.b16 %v1844
    %v1849 = vunpack.c.l.b16 %v1845
    %v1850 = vpack.c.b16 %v1849, %v1848
    %v1853 = vsel %vm30, %v1840, 0
    %v1856 = vsel %vm30, %v1841, 0
    %v1859 = vsel %vm30, %v1842, 0
    %v1862 = vsel %vm30, %v1843, 0
    %1864 = vmatpush.bf16.msra.mxu0 0
    %1865 = vmatpush.bf16.msra.mxu0 0
    %1866 = vmatpush.bf16.msra.mxu0 0
    %1867 = vmatpush.bf16.msra.mxu0 0
    %1868 = vmatpush.bf16.msra.mxu0 0
    %1869 = vmatpush.bf16.msra.mxu0 0
    %1870 = vmatpush.bf16.msra.mxu0 0
    %1871 = vmatpush.bf16.msra.mxu0 %v1850
    %1872 = vmatmul.bf16.gmra.mxu0 %v1853
    %v1873 = vpop.f32.mrf.mxu0
    %v1874 = vadd.f32 0.0, %v1873
    %v1875 = vpop.f32.mrf.mxu0
    %v1876 = vadd.f32 0.0, %v1875
    %1877 = vmatmul.bf16.gmra.mxu0 %v1856
    %v1878 = vpop.f32.mrf.mxu0
    %v1879 = vadd.f32 0.0, %v1878
    %v1880 = vpop.f32.mrf.mxu0
    %v1881 = vadd.f32 0.0, %v1880
    %1882 = vmatmul.bf16.gmra.mxu0 %v1859
    %v1883 = vpop.f32.mrf.mxu0
    %v1884 = vadd.f32 0.0, %v1883
    %v1885 = vpop.f32.mrf.mxu0
    %v1886 = vadd.f32 0.0, %v1885
    %1887 = vmatmul.bf16.gmra.mxu0 %v1862
    %v1888 = vpop.f32.mrf.mxu0
    %v1889 = vadd.f32 0.0, %v1888
    %v1890 = vpop.f32.mrf.mxu0
    %v1891 = vadd.f32 0.0, %v1890
    %1892 = vdwg.mxu0
    %v1895 = vunpack.c.l.b16 %v1830
    %v1896 = vunpack.c.l.b16 %v1831
    %v1897 = vpack.c.b16 %v1896, %v1895
    %v1900 = vsel %vm30, %v1826, 0
    %v1903 = vsel %vm30, %v1827, 0
    %v1906 = vsel %vm30, %v1828, 0
    %v1909 = vsel %vm30, %v1829, 0
    %1911 = vmatpush.bf16.msra.mxu0 0
    %1912 = vmatpush.bf16.msra.mxu0 0
    %1913 = vmatpush.bf16.msra.mxu0 0
    %1914 = vmatpush.bf16.msra.mxu0 0
    %1915 = vmatpush.bf16.msra.mxu0 0
    %1916 = vmatpush.bf16.msra.mxu0 0
    %1917 = vmatpush.bf16.msra.mxu0 0
    %1918 = vmatpush.bf16.msra.mxu0 %v1897
    %1919 = vmatmul.bf16.gmra.mxu0 %v1900
    %v1920 = vpop.f32.mrf.mxu0
    %v1921 = vadd.f32 %v1874, %v1920
    %v1922 = vpop.f32.mrf.mxu0
    %v1923 = vadd.f32 %v1876, %v1922
    %1924 = vmatmul.bf16.gmra.mxu0 %v1903
    %v1925 = vpop.f32.mrf.mxu0
    %v1926 = vadd.f32 %v1879, %v1925
    %v1927 = vpop.f32.mrf.mxu0
    %v1928 = vadd.f32 %v1881, %v1927
    %1929 = vmatmul.bf16.gmra.mxu0 %v1906
    %v1930 = vpop.f32.mrf.mxu0
    %v1931 = vadd.f32 %v1884, %v1930
    %v1932 = vpop.f32.mrf.mxu0
    %v1933 = vadd.f32 %v1886, %v1932
    %1934 = vmatmul.bf16.gmra.mxu0 %v1909
    %v1935 = vpop.f32.mrf.mxu0
    %v1936 = vadd.f32 %v1889, %v1935
    %v1937 = vpop.f32.mrf.mxu0
    %v1938 = vadd.f32 %v1891, %v1937
    %1939 = vdwg.mxu0
    %v1940 = vld [vmem:[#allocation2 + $0x9] sm:$0xff]
    %v1941 = vld [vmem:[#allocation2 + $0x11] sm:$0xff]
    %v1942 = vld [vmem:[#allocation2 + $0x19] sm:$0xff]
    %v1943 = vld [vmem:[#allocation2 + $0x21] sm:$0xff]
    %v1944 = vld [vmem:[#allocation2 + $0x29] sm:$0xff]
    %v1945 = vld [vmem:[#allocation2 + $0x31] sm:$0xff]
    %v1946 = vld [vmem:[#allocation2 + $0x39] sm:$0xff]
    %v1947 = vld [vmem:[#allocation2 + $0x41] sm:$0xff]
    %v1948 = vsel %vm602, %v1940, 0.0
    %v1949 = vsel %vm603, %v1941, 0.0
    %v1950 = vsel %vm604, %v1942, 0.0
    %v1951 = vsel %vm605, %v1943, 0.0
    %v1952 = vsel %vm606, %v1944, 0.0
    %v1953 = vsel %vm607, %v1945, 0.0
    %v1954 = vsel %vm608, %v1946, 0.0
    %v1955 = vsel %vm609, %v1947, 0.0
    %v1956 = vpack.c.bf16 %v1949, %v1948
    %v1957 = vpack.c.bf16 %v1951, %v1950
    %v1958 = vpack.c.bf16 %v1953, %v1952
    %v1959 = vpack.c.bf16 %v1955, %v1954
    %v1960 = vld [vmem:[%s622] sm:$0xf]
    %v1961 = vld [vmem:[%s622 + $0x4] sm:$0xf]
    %v1964 = vunpack.c.l.b16 %v1960
    %v1965 = vunpack.c.l.b16 %v1961
    %v1966 = vpack.c.b16 %v1965, %v1964
    %v1969 = vsel %vm30, %v1956, 0
    %v1972 = vsel %vm30, %v1957, 0
    %v1975 = vsel %vm30, %v1958, 0
    %v1978 = vsel %vm30, %v1959, 0
    %1980 = vmatpush.bf16.msra.mxu0 0
    %1981 = vmatpush.bf16.msra.mxu0 0
    %1982 = vmatpush.bf16.msra.mxu0 0
    %1983 = vmatpush.bf16.msra.mxu0 0
    %1984 = vmatpush.bf16.msra.mxu0 0
    %1985 = vmatpush.bf16.msra.mxu0 0
    %1986 = vmatpush.bf16.msra.mxu0 0
    %1987 = vmatpush.bf16.msra.mxu0 %v1966
    %1988 = vmatmul.bf16.gmra.mxu0 %v1969
    %v1989 = vpop.f32.mrf.mxu0
    %v1990 = vadd.f32 0.0, %v1989
    %v1991 = vpop.f32.mrf.mxu0
    %v1992 = vadd.f32 0.0, %v1991
    %1993 = vmatmul.bf16.gmra.mxu0 %v1972
    %v1994 = vpop.f32.mrf.mxu0
    %v1995 = vadd.f32 0.0, %v1994
    %v1996 = vpop.f32.mrf.mxu0
    %v1997 = vadd.f32 0.0, %v1996
    %1998 = vmatmul.bf16.gmra.mxu0 %v1975
    %v1999 = vpop.f32.mrf.mxu0
    %v2000 = vadd.f32 0.0, %v1999
    %v2001 = vpop.f32.mrf.mxu0
    %v2002 = vadd.f32 0.0, %v2001
    %2003 = vmatmul.bf16.gmra.mxu0 %v1978
    %v2004 = vpop.f32.mrf.mxu0
    %v2005 = vadd.f32 0.0, %v2004
    %v2006 = vpop.f32.mrf.mxu0
    %v2007 = vadd.f32 0.0, %v2006
    %2008 = vdwg.mxu0
    %v2009 = vadd.f32 %v1921, %v1990
    %v2010 = vadd.f32 %v1923, %v1992
    %v2011 = vadd.f32 %v1926, %v1995
    %v2012 = vadd.f32 %v1928, %v1997
    %v2013 = vadd.f32 %v1931, %v2000
    %v2014 = vadd.f32 %v1933, %v2002
    %v2015 = vadd.f32 %v1936, %v2005
    %v2016 = vadd.f32 %v1938, %v2007
    %v2017 = vld [vmem:[#allocation2 + $0xf] sm:$0xff]
    %v2018 = vld [vmem:[#allocation2 + $0x17] sm:$0xff]
    %v2019 = vld [vmem:[#allocation2 + $0x1f] sm:$0xff]
    %v2020 = vld [vmem:[#allocation2 + $0x27] sm:$0xff]
    %v2021 = vld [vmem:[#allocation2 + $0x2f] sm:$0xff]
    %v2022 = vld [vmem:[#allocation2 + $0x37] sm:$0xff]
    %v2023 = vld [vmem:[#allocation2 + $0x3f] sm:$0xff]
    %v2024 = vld [vmem:[#allocation2 + $0x47] sm:$0xff]
    %v2025 = vsel %vm455, %v2017, 0.0
    %v2026 = vsel %vm456, %v2018, 0.0
    %v2027 = vsel %vm457, %v2019, 0.0
    %v2028 = vsel %vm458, %v2020, 0.0
    %v2029 = vsel %vm459, %v2021, 0.0
    %v2030 = vsel %vm460, %v2022, 0.0
    %v2031 = vsel %vm461, %v2023, 0.0
    %v2032 = vsel %vm462, %v2024, 0.0
    %v2033 = vpack.c.bf16 %v2026, %v2025
    %v2034 = vpack.c.bf16 %v2028, %v2027
    %v2035 = vpack.c.bf16 %v2030, %v2029
    %v2036 = vpack.c.bf16 %v2032, %v2031
    %v2037 = vld [vmem:[%s700] sm:$0xf]
    %v2038 = vld [vmem:[%s700 + $0x4] sm:$0xf]
    %v2041 = vunpack.c.l.b16 %v2037
    %v2042 = vunpack.c.l.b16 %v2038
    %v2043 = vpack.c.b16 %v2042, %v2041
    %v2046 = vsel %vm30, %v2033, 0
    %v2049 = vsel %vm30, %v2034, 0
    %v2052 = vsel %vm30, %v2035, 0
    %v2055 = vsel %vm30, %v2036, 0
    %2057 = vmatpush.bf16.msra.mxu0 0
    %2058 = vmatpush.bf16.msra.mxu0 0
    %2059 = vmatpush.bf16.msra.mxu0 0
    %2060 = vmatpush.bf16.msra.mxu0 0
    %2061 = vmatpush.bf16.msra.mxu0 0
    %2062 = vmatpush.bf16.msra.mxu0 0
    %2063 = vmatpush.bf16.msra.mxu0 0
    %2064 = vmatpush.bf16.msra.mxu0 %v2043
    %2065 = vmatmul.bf16.gmra.mxu0 %v2046
    %v2066 = vpop.f32.mrf.mxu0
    %v2067 = vadd.f32 0.0, %v2066
    %v2068 = vpop.f32.mrf.mxu0
    %v2069 = vadd.f32 0.0, %v2068
    %2070 = vmatmul.bf16.gmra.mxu0 %v2049
    %v2071 = vpop.f32.mrf.mxu0
    %v2072 = vadd.f32 0.0, %v2071
    %v2073 = vpop.f32.mrf.mxu0
    %v2074 = vadd.f32 0.0, %v2073
    %2075 = vmatmul.bf16.gmra.mxu0 %v2052
    %v2076 = vpop.f32.mrf.mxu0
    %v2077 = vadd.f32 0.0, %v2076
    %v2078 = vpop.f32.mrf.mxu0
    %v2079 = vadd.f32 0.0, %v2078
    %2080 = vmatmul.bf16.gmra.mxu0 %v2055
    %v2081 = vpop.f32.mrf.mxu0
    %v2082 = vadd.f32 0.0, %v2081
    %v2083 = vpop.f32.mrf.mxu0
    %v2084 = vadd.f32 0.0, %v2083
    %2085 = vdwg.mxu0
    %v2086 = vadd.f32 %v2009, %v2067
    %v2087 = vadd.f32 %v2010, %v2069
    %v2088 = vadd.f32 %v2011, %v2072
    %v2089 = vadd.f32 %v2012, %v2074
    %v2090 = vadd.f32 %v2013, %v2077
    %v2091 = vadd.f32 %v2014, %v2079
    %v2092 = vadd.f32 %v2015, %v2082
    %v2093 = vadd.f32 %v2016, %v2084
    %v2094 = vld [vmem:[#allocation2 + $0x10] sm:$0xff]
    %v2095 = vld [vmem:[#allocation2 + $0x18] sm:$0xff]
    %v2096 = vld [vmem:[#allocation2 + $0x20] sm:$0xff]
    %v2097 = vld [vmem:[#allocation2 + $0x28] sm:$0xff]
    %v2098 = vld [vmem:[#allocation2 + $0x30] sm:$0xff]
    %v2099 = vld [vmem:[#allocation2 + $0x38] sm:$0xff]
    %v2100 = vld [vmem:[#allocation2 + $0x40] sm:$0xff]
    %v2101 = vld [vmem:[#allocation2 + $0x48] sm:$0xff]
    %v2102 = vpack.c.bf16 %v2095, %v2094
    %v2103 = vpack.c.bf16 %v2097, %v2096
    %v2104 = vpack.c.bf16 %v2099, %v2098
    %v2105 = vpack.c.bf16 %v2101, %v2100
    %v2106 = vld [vmem:[%s770] sm:$0xf]
    %v2107 = vld [vmem:[%s770 + $0x4] sm:$0xf]
    %v2110 = vunpack.c.l.b16 %v2106
    %v2111 = vunpack.c.l.b16 %v2107
    %v2112 = vpack.c.b16 %v2111, %v2110
    %v2115 = vsel %vm30, %v2102, 0
    %v2118 = vsel %vm30, %v2103, 0
    %v2121 = vsel %vm30, %v2104, 0
    %v2124 = vsel %vm30, %v2105, 0
    %2126 = vmatpush.bf16.msra.mxu0 0
    %2127 = vmatpush.bf16.msra.mxu0 0
    %2128 = vmatpush.bf16.msra.mxu0 0
    %2129 = vmatpush.bf16.msra.mxu0 0
    %2130 = vmatpush.bf16.msra.mxu0 0
    %2131 = vmatpush.bf16.msra.mxu0 0
    %2132 = vmatpush.bf16.msra.mxu0 0
    %2133 = vmatpush.bf16.msra.mxu0 %v2112
    %2134 = vmatmul.bf16.gmra.mxu0 %v2115
    %v2135 = vpop.f32.mrf.mxu0
    %v2136 = vadd.f32 0.0, %v2135
    %v2137 = vpop.f32.mrf.mxu0
    %v2138 = vadd.f32 0.0, %v2137
    %2139 = vmatmul.bf16.gmra.mxu0 %v2118
    %v2140 = vpop.f32.mrf.mxu0
    %v2141 = vadd.f32 0.0, %v2140
    %v2142 = vpop.f32.mrf.mxu0
    %v2143 = vadd.f32 0.0, %v2142
    %2144 = vmatmul.bf16.gmra.mxu0 %v2121
    %v2145 = vpop.f32.mrf.mxu0
    %v2146 = vadd.f32 0.0, %v2145
    %v2147 = vpop.f32.mrf.mxu0
    %v2148 = vadd.f32 0.0, %v2147
    %2149 = vmatmul.bf16.gmra.mxu0 %v2124
    %v2150 = vpop.f32.mrf.mxu0
    %v2151 = vadd.f32 0.0, %v2150
    %v2152 = vpop.f32.mrf.mxu0
    %v2153 = vadd.f32 0.0, %v2152
    %2154 = vdwg.mxu0
    %v2155 = vadd.f32 %v2086, %v2136
    %v2156 = vadd.f32 %v2087, %v2138
    %v2157 = vadd.f32 %v2088, %v2141
    %v2158 = vadd.f32 %v2089, %v2143
    %v2159 = vadd.f32 %v2090, %v2146
    %v2160 = vadd.f32 %v2091, %v2148
    %v2161 = vadd.f32 %v2092, %v2151
    %v2162 = vadd.f32 %v2093, %v2153
    %v2163 = vld [vmem:[#allocation2 + $0x11] sm:$0xff]
    %v2164 = vld [vmem:[#allocation2 + $0x19] sm:$0xff]
    %v2165 = vld [vmem:[#allocation2 + $0x21] sm:$0xff]
    %v2166 = vld [vmem:[#allocation2 + $0x29] sm:$0xff]
    %v2167 = vld [vmem:[#allocation2 + $0x31] sm:$0xff]
    %v2168 = vld [vmem:[#allocation2 + $0x39] sm:$0xff]
    %v2169 = vld [vmem:[#allocation2 + $0x41] sm:$0xff]
    %v2170 = vld [vmem:[#allocation2 + $0x49] sm:$0xff]
    %v2171 = vsel %vm602, %v2163, 0.0
    %v2172 = vsel %vm603, %v2164, 0.0
    %v2173 = vsel %vm604, %v2165, 0.0
    %v2174 = vsel %vm605, %v2166, 0.0
    %v2175 = vsel %vm606, %v2167, 0.0
    %v2176 = vsel %vm607, %v2168, 0.0
    %v2177 = vsel %vm608, %v2169, 0.0
    %v2178 = vsel %vm609, %v2170, 0.0
    %v2179 = vpack.c.bf16 %v2172, %v2171
    %v2180 = vpack.c.bf16 %v2174, %v2173
    %v2181 = vpack.c.bf16 %v2176, %v2175
    %v2182 = vpack.c.bf16 %v2178, %v2177
    %v2183 = vld [vmem:[%s848] sm:$0xf]
    %v2184 = vld [vmem:[%s848 + $0x4] sm:$0xf]
    %v2187 = vunpack.c.l.b16 %v2183
    %v2188 = vunpack.c.l.b16 %v2184
    %v2189 = vpack.c.b16 %v2188, %v2187
    %v2192 = vsel %vm30, %v2179, 0
    %v2195 = vsel %vm30, %v2180, 0
    %v2198 = vsel %vm30, %v2181, 0
    %v2201 = vsel %vm30, %v2182, 0
    %2203 = vmatpush.bf16.msra.mxu0 0
    %2204 = vmatpush.bf16.msra.mxu0 0
    %2205 = vmatpush.bf16.msra.mxu0 0
    %2206 = vmatpush.bf16.msra.mxu0 0
    %2207 = vmatpush.bf16.msra.mxu0 0
    %2208 = vmatpush.bf16.msra.mxu0 0
    %2209 = vmatpush.bf16.msra.mxu0 0
    %2210 = vmatpush.bf16.msra.mxu0 %v2189
    %2211 = vmatmul.bf16.gmra.mxu0 %v2192
    %v2212 = vpop.f32.mrf.mxu0
    %v2213 = vadd.f32 0.0, %v2212
    %v2214 = vpop.f32.mrf.mxu0
    %v2215 = vadd.f32 0.0, %v2214
    %2216 = vmatmul.bf16.gmra.mxu0 %v2195
    %v2217 = vpop.f32.mrf.mxu0
    %v2218 = vadd.f32 0.0, %v2217
    %v2219 = vpop.f32.mrf.mxu0
    %v2220 = vadd.f32 0.0, %v2219
    %2221 = vmatmul.bf16.gmra.mxu0 %v2198
    %v2222 = vpop.f32.mrf.mxu0
    %v2223 = vadd.f32 0.0, %v2222
    %v2224 = vpop.f32.mrf.mxu0
    %v2225 = vadd.f32 0.0, %v2224
    %2226 = vmatmul.bf16.gmra.mxu0 %v2201
    %v2227 = vpop.f32.mrf.mxu0
    %v2228 = vadd.f32 0.0, %v2227
    %v2229 = vpop.f32.mrf.mxu0
    %v2230 = vadd.f32 0.0, %v2229
    %2231 = vdwg.mxu0
    %v2232 = vadd.f32 %v2155, %v2213
    %v2233 = vadd.f32 %v2156, %v2215
    %v2234 = vadd.f32 %v2157, %v2218
    %v2235 = vadd.f32 %v2158, %v2220
    %v2236 = vadd.f32 %v2159, %v2223
    %v2237 = vadd.f32 %v2160, %v2225
    %v2238 = vadd.f32 %v2161, %v2228
    %v2239 = vadd.f32 %v2162, %v2230
    %v2240 = vld [vmem:[#allocation2 + $0x17] sm:$0xff]
    %v2241 = vld [vmem:[#allocation2 + $0x1f] sm:$0xff]
    %v2242 = vld [vmem:[#allocation2 + $0x27] sm:$0xff]
    %v2243 = vld [vmem:[#allocation2 + $0x2f] sm:$0xff]
    %v2244 = vld [vmem:[#allocation2 + $0x37] sm:$0xff]
    %v2245 = vld [vmem:[#allocation2 + $0x3f] sm:$0xff]
    %v2246 = vld [vmem:[#allocation2 + $0x47] sm:$0xff]
    %v2247 = vld [vmem:[#allocation2 + $0x4f] sm:$0xff]
    %v2248 = vsel %vm455, %v2240, 0.0
    %v2249 = vsel %vm456, %v2241, 0.0
    %v2250 = vsel %vm457, %v2242, 0.0
    %v2251 = vsel %vm458, %v2243, 0.0
    %v2252 = vsel %vm459, %v2244, 0.0
    %v2253 = vsel %vm460, %v2245, 0.0
    %v2254 = vsel %vm461, %v2246, 0.0
    %v2255 = vsel %vm462, %v2247, 0.0
    %v2256 = vpack.c.bf16 %v2249, %v2248
    %v2257 = vpack.c.bf16 %v2251, %v2250
    %v2258 = vpack.c.bf16 %v2253, %v2252
    %v2259 = vpack.c.bf16 %v2255, %v2254
    %v2260 = vld [vmem:[%s926] sm:$0xf]
    %v2261 = vld [vmem:[%s926 + $0x4] sm:$0xf]
    %v2264 = vunpack.c.l.b16 %v2260
    %v2265 = vunpack.c.l.b16 %v2261
    %v2266 = vpack.c.b16 %v2265, %v2264
    %v2269 = vsel %vm30, %v2256, 0
    %v2272 = vsel %vm30, %v2257, 0
    %v2275 = vsel %vm30, %v2258, 0
    %v2278 = vsel %vm30, %v2259, 0
    %2280 = vmatpush.bf16.msra.mxu0 0
    %2281 = vmatpush.bf16.msra.mxu0 0
    %2282 = vmatpush.bf16.msra.mxu0 0
    %2283 = vmatpush.bf16.msra.mxu0 0
    %2284 = vmatpush.bf16.msra.mxu0 0
    %2285 = vmatpush.bf16.msra.mxu0 0
    %2286 = vmatpush.bf16.msra.mxu0 0
    %2287 = vmatpush.bf16.msra.mxu0 %v2266
    %2288 = vmatmul.bf16.gmra.mxu0 %v2269
    %v2289 = vpop.f32.mrf.mxu0
    %v2290 = vadd.f32 0.0, %v2289
    %v2291 = vpop.f32.mrf.mxu0
    %v2292 = vadd.f32 0.0, %v2291
    %2293 = vmatmul.bf16.gmra.mxu0 %v2272
    %v2294 = vpop.f32.mrf.mxu0
    %v2295 = vadd.f32 0.0, %v2294
    %v2296 = vpop.f32.mrf.mxu0
    %v2297 = vadd.f32 0.0, %v2296
    %2298 = vmatmul.bf16.gmra.mxu0 %v2275
    %v2299 = vpop.f32.mrf.mxu0
    %v2300 = vadd.f32 0.0, %v2299
    %v2301 = vpop.f32.mrf.mxu0
    %v2302 = vadd.f32 0.0, %v2301
    %2303 = vmatmul.bf16.gmra.mxu0 %v2278
    %v2304 = vpop.f32.mrf.mxu0
    %v2305 = vadd.f32 0.0, %v2304
    %v2306 = vpop.f32.mrf.mxu0
    %v2307 = vadd.f32 0.0, %v2306
    %2308 = vdwg.mxu0
    %v2309 = vadd.f32 %v2232, %v2290
    %v2310 = vadd.f32 %v2233, %v2292
    %v2311 = vadd.f32 %v2234, %v2295
    %v2312 = vadd.f32 %v2235, %v2297
    %v2313 = vadd.f32 %v2236, %v2300
    %v2314 = vadd.f32 %v2237, %v2302
    %v2315 = vadd.f32 %v2238, %v2305
    %v2316 = vadd.f32 %v2239, %v2307
    %v2317 = vld [vmem:[#allocation2 + $0x18] sm:$0xff]
    %v2318 = vld [vmem:[#allocation2 + $0x20] sm:$0xff]
    %v2319 = vld [vmem:[#allocation2 + $0x28] sm:$0xff]
    %v2320 = vld [vmem:[#allocation2 + $0x30] sm:$0xff]
    %v2321 = vld [vmem:[#allocation2 + $0x38] sm:$0xff]
    %v2322 = vld [vmem:[#allocation2 + $0x40] sm:$0xff]
    %v2323 = vld [vmem:[#allocation2 + $0x48] sm:$0xff]
    %v2324 = vld [vmem:[#allocation2 + $0x50] sm:$0xff]
    %v2325 = vpack.c.bf16 %v2318, %v2317
    %v2326 = vpack.c.bf16 %v2320, %v2319
    %v2327 = vpack.c.bf16 %v2322, %v2321
    %v2328 = vpack.c.bf16 %v2324, %v2323
    %v2329 = vld [vmem:[%s996] sm:$0xf]
    %v2330 = vld [vmem:[%s996 + $0x4] sm:$0xf]
    %v2333 = vunpack.c.l.b16 %v2329
    %v2334 = vunpack.c.l.b16 %v2330
    %v2335 = vpack.c.b16 %v2334, %v2333
    %v2338 = vsel %vm30, %v2325, 0
    %v2341 = vsel %vm30, %v2326, 0
    %v2344 = vsel %vm30, %v2327, 0
    %v2347 = vsel %vm30, %v2328, 0
    %2349 = vmatpush.bf16.msra.mxu0 0
    %2350 = vmatpush.bf16.msra.mxu0 0
    %2351 = vmatpush.bf16.msra.mxu0 0
    %2352 = vmatpush.bf16.msra.mxu0 0
    %2353 = vmatpush.bf16.msra.mxu0 0
    %2354 = vmatpush.bf16.msra.mxu0 0
    %2355 = vmatpush.bf16.msra.mxu0 0
    %2356 = vmatpush.bf16.msra.mxu0 %v2335
    %2357 = vmatmul.bf16.gmra.mxu0 %v2338
    %v2358 = vpop.f32.mrf.mxu0
    %v2359 = vadd.f32 0.0, %v2358
    %v2360 = vpop.f32.mrf.mxu0
    %v2361 = vadd.f32 0.0, %v2360
    %2362 = vmatmul.bf16.gmra.mxu0 %v2341
    %v2363 = vpop.f32.mrf.mxu0
    %v2364 = vadd.f32 0.0, %v2363
    %v2365 = vpop.f32.mrf.mxu0
    %v2366 = vadd.f32 0.0, %v2365
    %2367 = vmatmul.bf16.gmra.mxu0 %v2344
    %v2368 = vpop.f32.mrf.mxu0
    %v2369 = vadd.f32 0.0, %v2368
    %v2370 = vpop.f32.mrf.mxu0
    %v2371 = vadd.f32 0.0, %v2370
    %2372 = vmatmul.bf16.gmra.mxu0 %v2347
    %v2373 = vpop.f32.mrf.mxu0
    %v2374 = vadd.f32 0.0, %v2373
    %v2375 = vpop.f32.mrf.mxu0
    %v2376 = vadd.f32 0.0, %v2375
    %2377 = vdwg.mxu0
    %v2378 = vadd.f32 %v2309, %v2359
    %v2379 = vadd.f32 %v2310, %v2361
    %v2380 = vadd.f32 %v2311, %v2364
    %v2381 = vadd.f32 %v2312, %v2366
    %v2382 = vadd.f32 %v2313, %v2369
    %v2383 = vadd.f32 %v2314, %v2371
    %v2384 = vadd.f32 %v2315, %v2374
    %v2385 = vadd.f32 %v2316, %v2376
    %v2386 = vld [vmem:[#allocation2 + $0x19] sm:$0xff]
    %v2387 = vld [vmem:[#allocation2 + $0x21] sm:$0xff]
    %v2388 = vld [vmem:[#allocation2 + $0x29] sm:$0xff]
    %v2389 = vld [vmem:[#allocation2 + $0x31] sm:$0xff]
    %v2390 = vld [vmem:[#allocation2 + $0x39] sm:$0xff]
    %v2391 = vld [vmem:[#allocation2 + $0x41] sm:$0xff]
    %v2392 = vld [vmem:[#allocation2 + $0x49] sm:$0xff]
    %v2393 = vld [vmem:[#allocation2 + $0x51] sm:$0xff]
    %v2394 = vsel %vm602, %v2386, 0.0
    %v2395 = vsel %vm603, %v2387, 0.0
    %v2396 = vsel %vm604, %v2388, 0.0
    %v2397 = vsel %vm605, %v2389, 0.0
    %v2398 = vsel %vm606, %v2390, 0.0
    %v2399 = vsel %vm607, %v2391, 0.0
    %v2400 = vsel %vm608, %v2392, 0.0
    %v2401 = vsel %vm609, %v2393, 0.0
    %v2402 = vpack.c.bf16 %v2395, %v2394
    %v2403 = vpack.c.bf16 %v2397, %v2396
    %v2404 = vpack.c.bf16 %v2399, %v2398
    %v2405 = vpack.c.bf16 %v2401, %v2400
    %v2406 = vld [vmem:[%s1074] sm:$0xf]
    %v2407 = vld [vmem:[%s1074 + $0x4] sm:$0xf]
    %v2410 = vunpack.c.l.b16 %v2406
    %v2411 = vunpack.c.l.b16 %v2407
    %v2412 = vpack.c.b16 %v2411, %v2410
    %v2415 = vsel %vm30, %v2402, 0
    %v2418 = vsel %vm30, %v2403, 0
    %v2421 = vsel %vm30, %v2404, 0
    %v2424 = vsel %vm30, %v2405, 0
    %2426 = vmatpush.bf16.msra.mxu0 0
    %2427 = vmatpush.bf16.msra.mxu0 0
    %2428 = vmatpush.bf16.msra.mxu0 0
    %2429 = vmatpush.bf16.msra.mxu0 0
    %2430 = vmatpush.bf16.msra.mxu0 0
    %2431 = vmatpush.bf16.msra.mxu0 0
    %2432 = vmatpush.bf16.msra.mxu0 0
    %2433 = vmatpush.bf16.msra.mxu0 %v2412
    %2434 = vmatmul.bf16.gmra.mxu0 %v2415
    %v2435 = vpop.f32.mrf.mxu0
    %v2436 = vadd.f32 0.0, %v2435
    %v2437 = vpop.f32.mrf.mxu0
    %v2438 = vadd.f32 0.0, %v2437
    %2439 = vmatmul.bf16.gmra.mxu0 %v2418
    %v2440 = vpop.f32.mrf.mxu0
    %v2441 = vadd.f32 0.0, %v2440
    %v2442 = vpop.f32.mrf.mxu0
    %v2443 = vadd.f32 0.0, %v2442
    %2444 = vmatmul.bf16.gmra.mxu0 %v2421
    %v2445 = vpop.f32.mrf.mxu0
    %v2446 = vadd.f32 0.0, %v2445
    %v2447 = vpop.f32.mrf.mxu0
    %v2448 = vadd.f32 0.0, %v2447
    %2449 = vmatmul.bf16.gmra.mxu0 %v2424
    %v2450 = vpop.f32.mrf.mxu0
    %v2451 = vadd.f32 0.0, %v2450
    %v2452 = vpop.f32.mrf.mxu0
    %v2453 = vadd.f32 0.0, %v2452
    %2454 = vdwg.mxu0
    %v2455 = vadd.f32 %v2378, %v2436
    %v2456 = vadd.f32 %v2379, %v2438
    %v2457 = vadd.f32 %v2380, %v2441
    %v2458 = vadd.f32 %v2381, %v2443
    %v2459 = vadd.f32 %v2382, %v2446
    %v2460 = vadd.f32 %v2383, %v2448
    %v2461 = vadd.f32 %v2384, %v2451
    %v2462 = vadd.f32 %v2385, %v2453
    %v2463 = vld [vmem:[%s5 + $0x3] sm:$0x1]
    %v2464 = vld [vmem:[%s5 + $0x4] sm:$0x1]
    %v2465 = vld [vmem:[%s5 + $0x5] sm:$0x1]
    %v2466 = vsel %vm30, %v2455, 0.0
    %v2467 = vsel %vm30, %v2456, 0.0
    %v2468 = vadd.f32 %v2466, %v2467
    %v2469 = vsel %vm30, %v2457, 0.0
    %v2470 = vadd.f32 %v2468, %v2469
    %v2471 = vsel %vm30, %v2458, 0.0
    %v2472 = vadd.f32 %v2470, %v2471
    %v2473 = vsel %vm30, %v2459, 0.0
    %v2474 = vadd.f32 %v2472, %v2473
    %v2475 = vsel %vm30, %v2460, 0.0
    %v2476 = vadd.f32 %v2474, %v2475
    %v2477 = vsel %vm30, %v2461, 0.0
    %v2478 = vadd.f32 %v2476, %v2477
    %v2479 = vsel %vm30, %v2462, 0.0
    %v2480 = vadd.f32 %v2478, %v2479
    %v2481 = vrot.slane %v2480, 4
    %v2482 = vadd.f32 %v2480, %v2481
    %v2483 = vrot.slane %v2482, 2
    %v2484 = vadd.f32 %v2482, %v2483
    %v2485 = vrot.slane %v2484, 1
    %v2486 = vadd.f32 %v2484, %v2485
    %v2487 = vmul.f32 %v2455, %v2455
    %v2488 = vmul.f32 %v2456, %v2456
    %v2489 = vmul.f32 %v2457, %v2457
    %v2490 = vmul.f32 %v2458, %v2458
    %v2491 = vmul.f32 %v2459, %v2459
    %v2492 = vmul.f32 %v2460, %v2460
    %v2493 = vmul.f32 %v2461, %v2461
    %v2494 = vmul.f32 %v2462, %v2462
    %v2495 = vsel %vm30, %v2487, 0.0
    %v2496 = vsel %vm30, %v2488, 0.0
    %v2497 = vadd.f32 %v2495, %v2496
    %v2498 = vsel %vm30, %v2489, 0.0
    %v2499 = vadd.f32 %v2497, %v2498
    %v2500 = vsel %vm30, %v2490, 0.0
    %v2501 = vadd.f32 %v2499, %v2500
    %v2502 = vsel %vm30, %v2491, 0.0
    %v2503 = vadd.f32 %v2501, %v2502
    %v2504 = vsel %vm30, %v2492, 0.0
    %v2505 = vadd.f32 %v2503, %v2504
    %v2506 = vsel %vm30, %v2493, 0.0
    %v2507 = vadd.f32 %v2505, %v2506
    %v2508 = vsel %vm30, %v2494, 0.0
    %v2509 = vadd.f32 %v2507, %v2508
    %v2510 = vrot.slane %v2509, 4
    %v2511 = vadd.f32 %v2509, %v2510
    %v2512 = vrot.slane %v2511, 2
    %v2513 = vadd.f32 %v2511, %v2512
    %v2514 = vrot.slane %v2513, 1
    %v2515 = vadd.f32 %v2513, %v2514
    %v2516 = vmul.f32 %v2463, 64.0
    %v2517 = vadd.f32 %v2486, %v2516
    %v2518 = vmul.f32 %v2463, 2.0
    %v2519 = vmul.f32 %v2518, %v2486
    %v2520 = vadd.f32 %v2515, %v2519
    %v2521 = vmul.f32 %v2516, %v2463
    %v2522 = vadd.f32 %v2520, %v2521
    %v2524 = vsel %vm30, %v2517, 0
    %2526 = vmatpush.msra.mxu0 0.0
    %2527 = vmatpush.msra.mxu0 0.0
    %2528 = vmatpush.msra.mxu0 0.0
    %2529 = vmatpush.msra.mxu0 0.0
    %2530 = vmatpush.msra.mxu0 0.0
    %2531 = vmatpush.msra.mxu0 0.0
    %2532 = vmatpush.msra.mxu0 0.0
    %2533 = vmatpush.msra.mxu0 0.0
    %2534 = vmatpush.msra.mxu0 0.0
    %2535 = vmatpush.msra.mxu0 0.0
    %2536 = vmatpush.msra.mxu0 0.0
    %2537 = vmatpush.msra.mxu0 0.0
    %2538 = vmatpush.msra.mxu0 0.0
    %2539 = vmatpush.msra.mxu0 0.0
    %2540 = vmatpush.msra.mxu0 %v29
    %2541 = vmatpush.msra.mxu0 %v28
    %2542 = vmatmul.f32.gmra.mxu0 %v2524
    %v2543 = vpop.f32.mrf.mxu0
    %v2544 = vadd.f32 0.0, %v2543
    %2545 = vdwg.mxu0
    %v2547 = vsel %vm30, %v2522, 0
    %2549 = vmatpush.msra.mxu0 0.0
    %2550 = vmatpush.msra.mxu0 0.0
    %2551 = vmatpush.msra.mxu0 0.0
    %2552 = vmatpush.msra.mxu0 0.0
    %2553 = vmatpush.msra.mxu0 0.0
    %2554 = vmatpush.msra.mxu0 0.0
    %2555 = vmatpush.msra.mxu0 0.0
    %2556 = vmatpush.msra.mxu0 0.0
    %2557 = vmatpush.msra.mxu0 0.0
    %2558 = vmatpush.msra.mxu0 0.0
    %2559 = vmatpush.msra.mxu0 0.0
    %2560 = vmatpush.msra.mxu0 0.0
    %2561 = vmatpush.msra.mxu0 0.0
    %2562 = vmatpush.msra.mxu0 0.0
    %2563 = vmatpush.msra.mxu0 %v29
    %2564 = vmatpush.msra.mxu0 %v28
    %2565 = vmatmul.f32.gmra.mxu0 %v2547
    %v2566 = vpop.f32.mrf.mxu0
    %v2567 = vadd.f32 0.0, %v2566
    %2568 = vdwg.mxu0
    %v2569 = vmul.f32 %v2544, %v2544
    %v2570 = vsub.f32 %v2567, %v2569
    %v2571 = vadd.f32 %v2570, 1e-05
    %v2572 = vrsqrt.pop %v2571
    %v2573 = vmul.f32 %v2572, %v2571
    %v2574 = vmul.f32 %v2573, %v2572
    %v2575 = vmul.f32 0.5, %v2574
    %v2576 = vsub.f32 1.5, %v2575
    %v2577 = vmul.f32 %v2572, %v2576
    %vm2578 = vweird.f32 %v2571
    %vm2579 = vweird.f32 %v2572
    %vm2580 = vmor %vm2578, %vm2579
    %v2581 = vsel %vm2580, %v2572, %v2577
    %v2582 = vmul.f32 %v2464, %v2581
    %v2583 = vsub.f32 %v2463, %v2544
    %v2584 = vmul.f32 %v2583, %v2582
    %v2585 = vadd.f32 %v2465, %v2584
    %v2586 = vperm.slane %v2582, 0
    %v2587 = vmul.f32 %v2455, %v2586
    %v2588 = vmul.f32 %v2456, %v2586
    %v2589 = vmul.f32 %v2457, %v2586
    %v2590 = vmul.f32 %v2458, %v2586
    %v2591 = vmul.f32 %v2459, %v2586
    %v2592 = vmul.f32 %v2460, %v2586
    %v2593 = vmul.f32 %v2461, %v2586
    %v2594 = vmul.f32 %v2462, %v2586
    %v2595 = vperm.slane %v2585, 0
    %v2596 = vadd.f32 %v2587, %v2595
    %v2597 = vadd.f32 %v2588, %v2595
    %v2598 = vadd.f32 %v2589, %v2595
    %v2599 = vadd.f32 %v2590, %v2595
    %v2600 = vadd.f32 %v2591, %v2595
    %v2601 = vadd.f32 %v2592, %v2595
    %v2602 = vadd.f32 %v2593, %v2595
    %v2603 = vadd.f32 %v2594, %v2595
    %s2604 = scalar_lea.vmem %s1, 32
    %v2605 = vld [vmem:[%s2604] sm:$0xf]
    %v2606 = vld [vmem:[%s2604 + $0x4] sm:$0xf]
    %v2607 = vld [vmem:[%s2604 + $0x8] sm:$0xf]
    %v2608 = vld [vmem:[%s2604 + $0xc] sm:$0xf]
    %v2609 = vld [vmem:[%s2604 + $0x10] sm:$0xf]
    %v2610 = vld [vmem:[%s2604 + $0x14] sm:$0xf]
    %v2611 = vld [vmem:[%s2604 + $0x18] sm:$0xf]
    %v2612 = vld [vmem:[%s2604 + $0x1c] sm:$0xf]
    %v2613 = vld [vmem:[%s4] sm:$0xf]
    %v2622 = vunpack.c.l.b16 %v2605
    %v2623 = vunpack.c.l.b16 %v2606
    %v2624 = vunpack.c.l.b16 %v2607
    %v2625 = vunpack.c.l.b16 %v2608
    %v2626 = vunpack.c.l.b16 %v2609
    %v2627 = vunpack.c.l.b16 %v2610
    %v2628 = vunpack.c.l.b16 %v2611
    %v2629 = vunpack.c.l.b16 %v2612
    %v2630 = vpack.c.b16 %v2623, %v2622
    %v2631 = vpack.c.b16 %v2625, %v2624
    %v2632 = vpack.c.b16 %v2627, %v2626
    %v2633 = vpack.c.b16 %v2629, %v2628
    %v2635 = vsel %vm1302, %v2630, 0
    %v2638 = vsel %vm1302, %v2631, 0
    %v2641 = vsel %vm1302, %v2632, 0
    %v2644 = vsel %vm1302, %v2633, 0
    %v2647 = vsel %vm233, %v2613, 0
    %2649 = vmatpush.bf16.msra.mxu0 0
    %2650 = vmatpush.bf16.msra.mxu0 0
    %2651 = vmatpush.bf16.msra.mxu0 0
    %2652 = vmatpush.bf16.msra.mxu0 0
    %2653 = vmatpush.bf16.msra.mxu0 0
    %2654 = vmatpush.bf16.msra.mxu0 0
    %2655 = vmatpush.bf16.msra.mxu0 0
    %2656 = vmatpush.bf16.msra.mxu0 %v2647
    %2657 = vmatmul.bf16.gmra.mxu0 %v2635
    %v2658 = vpop.f32.mrf.mxu0
    %v2659 = vadd.f32 0.0, %v2658
    %v2660 = vpop.f32.mrf.mxu0
    %v2661 = vadd.f32 0.0, %v2660
    %2662 = vmatmul.bf16.gmra.mxu0 %v2638
    %v2663 = vpop.f32.mrf.mxu0
    %v2664 = vadd.f32 0.0, %v2663
    %v2665 = vpop.f32.mrf.mxu0
    %v2666 = vadd.f32 0.0, %v2665
    %2667 = vmatmul.bf16.gmra.mxu0 %v2641
    %v2668 = vpop.f32.mrf.mxu0
    %v2669 = vadd.f32 0.0, %v2668
    %v2670 = vpop.f32.mrf.mxu0
    %v2671 = vadd.f32 0.0, %v2670
    %2672 = vmatmul.bf16.gmra.mxu0 %v2644
    %v2673 = vpop.f32.mrf.mxu0
    %v2674 = vadd.f32 0.0, %v2673
    %v2675 = vpop.f32.mrf.mxu0
    %v2676 = vadd.f32 0.0, %v2675
    %2677 = vdwg.mxu0
    %v2678 = vld [vmem:[%s5 + $0x6] sm:$0x1]
    %v2679 = vld [vmem:[%s5 + $0x7] sm:$0x1]
    %v2680 = vld [vmem:[%s5 + $0x8] sm:$0x1]
    %v2681 = vsel %vm30, %v2659, 0.0
    %v2682 = vsel %vm30, %v2661, 0.0
    %v2683 = vadd.f32 %v2681, %v2682
    %v2684 = vsel %vm30, %v2664, 0.0
    %v2685 = vadd.f32 %v2683, %v2684
    %v2686 = vsel %vm30, %v2666, 0.0
    %v2687 = vadd.f32 %v2685, %v2686
    %v2688 = vsel %vm30, %v2669, 0.0
    %v2689 = vadd.f32 %v2687, %v2688
    %v2690 = vsel %vm30, %v2671, 0.0
    %v2691 = vadd.f32 %v2689, %v2690
    %v2692 = vsel %vm30, %v2674, 0.0
    %v2693 = vadd.f32 %v2691, %v2692
    %v2694 = vsel %vm30, %v2676, 0.0
    %v2695 = vadd.f32 %v2693, %v2694
    %v2696 = vrot.slane %v2695, 4
    %v2697 = vadd.f32 %v2695, %v2696
    %v2698 = vrot.slane %v2697, 2
    %v2699 = vadd.f32 %v2697, %v2698
    %v2700 = vrot.slane %v2699, 1
    %v2701 = vadd.f32 %v2699, %v2700
    %v2702 = vmul.f32 %v2659, %v2659
    %v2703 = vmul.f32 %v2661, %v2661
    %v2704 = vmul.f32 %v2664, %v2664
    %v2705 = vmul.f32 %v2666, %v2666
    %v2706 = vmul.f32 %v2669, %v2669
    %v2707 = vmul.f32 %v2671, %v2671
    %v2708 = vmul.f32 %v2674, %v2674
    %v2709 = vmul.f32 %v2676, %v2676
    %v2710 = vsel %vm30, %v2702, 0.0
    %v2711 = vsel %vm30, %v2703, 0.0
    %v2712 = vadd.f32 %v2710, %v2711
    %v2713 = vsel %vm30, %v2704, 0.0
    %v2714 = vadd.f32 %v2712, %v2713
    %v2715 = vsel %vm30, %v2705, 0.0
    %v2716 = vadd.f32 %v2714, %v2715
    %v2717 = vsel %vm30, %v2706, 0.0
    %v2718 = vadd.f32 %v2716, %v2717
    %v2719 = vsel %vm30, %v2707, 0.0
    %v2720 = vadd.f32 %v2718, %v2719
    %v2721 = vsel %vm30, %v2708, 0.0
    %v2722 = vadd.f32 %v2720, %v2721
    %v2723 = vsel %vm30, %v2709, 0.0
    %v2724 = vadd.f32 %v2722, %v2723
    %v2725 = vrot.slane %v2724, 4
    %v2726 = vadd.f32 %v2724, %v2725
    %v2727 = vrot.slane %v2726, 2
    %v2728 = vadd.f32 %v2726, %v2727
    %v2729 = vrot.slane %v2728, 1
    %v2730 = vadd.f32 %v2728, %v2729
    %v2731 = vmul.f32 %v2678, 64.0
    %v2732 = vadd.f32 %v2701, %v2731
    %v2733 = vmul.f32 %v2678, 2.0
    %v2734 = vmul.f32 %v2733, %v2701
    %v2735 = vadd.f32 %v2730, %v2734
    %v2736 = vmul.f32 %v2731, %v2678
    %v2737 = vadd.f32 %v2735, %v2736
    %v2739 = vsel %vm30, %v2732, 0
    %2741 = vmatpush.msra.mxu0 0.0
    %2742 = vmatpush.msra.mxu0 0.0
    %2743 = vmatpush.msra.mxu0 0.0
    %2744 = vmatpush.msra.mxu0 0.0
    %2745 = vmatpush.msra.mxu0 0.0
    %2746 = vmatpush.msra.mxu0 0.0
    %2747 = vmatpush.msra.mxu0 0.0
    %2748 = vmatpush.msra.mxu0 0.0
    %2749 = vmatpush.msra.mxu0 0.0
    %2750 = vmatpush.msra.mxu0 0.0
    %2751 = vmatpush.msra.mxu0 0.0
    %2752 = vmatpush.msra.mxu0 0.0
    %2753 = vmatpush.msra.mxu0 0.0
    %2754 = vmatpush.msra.mxu0 0.0
    %2755 = vmatpush.msra.mxu0 %v29
    %2756 = vmatpush.msra.mxu0 %v28
    %2757 = vmatmul.f32.gmra.mxu0 %v2739
    %v2758 = vpop.f32.mrf.mxu0
    %v2759 = vadd.f32 0.0, %v2758
    %2760 = vdwg.mxu0
    %v2762 = vsel %vm30, %v2737, 0
    %2764 = vmatpush.msra.mxu0 0.0
    %2765 = vmatpush.msra.mxu0 0.0
    %2766 = vmatpush.msra.mxu0 0.0
    %2767 = vmatpush.msra.mxu0 0.0
    %2768 = vmatpush.msra.mxu0 0.0
    %2769 = vmatpush.msra.mxu0 0.0
    %2770 = vmatpush.msra.mxu0 0.0
    %2771 = vmatpush.msra.mxu0 0.0
    %2772 = vmatpush.msra.mxu0 0.0
    %2773 = vmatpush.msra.mxu0 0.0
    %2774 = vmatpush.msra.mxu0 0.0
    %2775 = vmatpush.msra.mxu0 0.0
    %2776 = vmatpush.msra.mxu0 0.0
    %2777 = vmatpush.msra.mxu0 0.0
    %2778 = vmatpush.msra.mxu0 %v29
    %2779 = vmatpush.msra.mxu0 %v28
    %2780 = vmatmul.f32.gmra.mxu0 %v2762
    %v2781 = vpop.f32.mrf.mxu0
    %v2782 = vadd.f32 0.0, %v2781
    %2783 = vdwg.mxu0
    %v2784 = vmul.f32 %v2759, %v2759
    %v2785 = vsub.f32 %v2782, %v2784
    %v2786 = vadd.f32 %v2785, 1e-05
    %v2787 = vrsqrt.pop %v2786
    %v2788 = vmul.f32 %v2787, %v2786
    %v2789 = vmul.f32 %v2788, %v2787
    %v2790 = vmul.f32 0.5, %v2789
    %v2791 = vsub.f32 1.5, %v2790
    %v2792 = vmul.f32 %v2787, %v2791
    %vm2793 = vweird.f32 %v2786
    %vm2794 = vweird.f32 %v2787
    %vm2795 = vmor %vm2793, %vm2794
    %v2796 = vsel %vm2795, %v2787, %v2792
    %v2797 = vmul.f32 %v2679, %v2796
    %v2798 = vsub.f32 %v2678, %v2759
    %v2799 = vmul.f32 %v2798, %v2797
    %v2800 = vadd.f32 %v2680, %v2799
    %v2801 = vperm.slane %v2797, 0
    %v2802 = vmul.f32 %v2659, %v2801
    %v2803 = vmul.f32 %v2661, %v2801
    %v2804 = vmul.f32 %v2664, %v2801
    %v2805 = vmul.f32 %v2666, %v2801
    %v2806 = vmul.f32 %v2669, %v2801
    %v2807 = vmul.f32 %v2671, %v2801
    %v2808 = vmul.f32 %v2674, %v2801
    %v2809 = vmul.f32 %v2676, %v2801
    %v2810 = vperm.slane %v2800, 0
    %v2811 = vadd.f32 %v2802, %v2810
    %v2812 = vadd.f32 %v2803, %v2810
    %v2813 = vadd.f32 %v2804, %v2810
    %v2814 = vadd.f32 %v2805, %v2810
    %v2815 = vadd.f32 %v2806, %v2810
    %v2816 = vadd.f32 %v2807, %v2810
    %v2817 = vadd.f32 %v2808, %v2810
    %v2818 = vadd.f32 %v2809, %v2810
    %v2819 = vadd.f32 %v2596, %v2811
    %v2820 = vadd.f32 %v2597, %v2812
    %v2821 = vadd.f32 %v2598, %v2813
    %v2822 = vadd.f32 %v2599, %v2814
    %v2823 = vadd.f32 %v2600, %v2815
    %v2824 = vadd.f32 %v2601, %v2816
    %v2825 = vadd.f32 %v2602, %v2817
    %v2826 = vadd.f32 %v2603, %v2818
    %vm2827 = vcmp.ge.f32.partialorder %v2819, 0.0
    %vm2828 = vcmp.ge.f32.partialorder %v2820, 0.0
    %vm2829 = vcmp.ge.f32.partialorder %v2821, 0.0
    %vm2830 = vcmp.ge.f32.partialorder %v2822, 0.0
    %vm2831 = vcmp.ge.f32.partialorder %v2823, 0.0
    %vm2832 = vcmp.ge.f32.partialorder %v2824, 0.0
    %vm2833 = vcmp.ge.f32.partialorder %v2825, 0.0
    %vm2834 = vcmp.ge.f32.partialorder %v2826, 0.0
    %v2835 = vmul.f32 %v2819, 0.2
    %v2836 = vmul.f32 %v2820, 0.2
    %v2837 = vmul.f32 %v2821, 0.2
    %v2838 = vmul.f32 %v2822, 0.2
    %v2839 = vmul.f32 %v2823, 0.2
    %v2840 = vmul.f32 %v2824, 0.2
    %v2841 = vmul.f32 %v2825, 0.2
    %v2842 = vmul.f32 %v2826, 0.2
    %v2843 = vsel %vm2827, %v2819, %v2835
    %v2844 = vsel %vm2828, %v2820, %v2836
    %v2845 = vsel %vm2829, %v2821, %v2837
    %v2846 = vsel %vm2830, %v2822, %v2838
    %v2847 = vsel %vm2831, %v2823, %v2839
    %v2848 = vsel %vm2832, %v2824, %v2840
    %v2849 = vsel %vm2833, %v2825, %v2841
    %v2850 = vsel %vm2834, %v2826, %v2842
    %s2851 = scalar_lea.vmem [#allocation3], 64
    %2852 = vst.msk [vmem:[%s2851] sm:$0xff] %vm30, %v2843
    %2853 = vst.msk [vmem:[%s2851 + $0x8] sm:$0xff] %vm30, %v2844
    %2854 = vst.msk [vmem:[%s2851 + $0x10] sm:$0xff] %vm30, %v2845
    %2855 = vst.msk [vmem:[%s2851 + $0x18] sm:$0xff] %vm30, %v2846
    %2856 = vst.msk [vmem:[%s2851 + $0x20] sm:$0xff] %vm30, %v2847
    %2857 = vst.msk [vmem:[%s2851 + $0x28] sm:$0xff] %vm30, %v2848
    %2858 = vst.msk [vmem:[%s2851 + $0x30] sm:$0xff] %vm30, %v2849
    %2859 = vst.msk [vmem:[%s2851 + $0x38] sm:$0xff] %vm30, %v2850
    // Predicated region
    $region30: #{res_block_forward.1} parent=1 // pred_check
      _
    $region31: #{res_block_forward.1} parent=1 // pred_check_branch
      %2861 = sbr.rel (0) target = $region33
    $region32: #{res_block_forward.1} parent=1 // pred_region
      %2863 = vsyncadd [#allocation4], 0
      %s2864 = sshll.u32 [#allocation3], 4
      %s2865 = int_to_ptr.vmem [resolvable:$true] %s2864
      %s2866 = sshll.u32 %s7, 4
      %s2867 = int_to_ptr.hbm [resolvable:$true] %s2866
      %2872 = dma.vmem_to_hbm [thread:$0]  %s2865, 2048, %s2867, [#allocation4], 128, 128, 8
    $region33: #{res_block_forward.1} parent=1 // pred_fallthru
      _
    // Predicated region
    $region34: #{res_block_forward.1} parent=1 // pred_check
      _
    $region35: #{res_block_forward.1} parent=1 // pred_check_branch
      %2874 = sbr.rel (0) target = $region37
    $region36: #{res_block_forward.1} parent=1 // pred_region
      %2876 = dma.done [#allocation4], 2048
    $region37: #{res_block_forward.1} parent=1 // pred_fallthru
      _
    %2877 = vsyncpa [#allocation4], 1

</llo_original>
